<compile_context>
chip_gen: v6e
topology: v6e:2x2x1
jax: 0.10.0
libtpu: 0.0.40
codegen_flags: <defaults>
</compile_context>

<pallas_src>
import functools

import jax
import jax.numpy as jnp
from jax import lax
from jax.experimental import pallas as pl
from jax.experimental.pallas import tpu as pltpu


# -----------------------------------------------------------------------------
# Model dimensions (small, CNNSeq2Seq-consistent sizes)
# -----------------------------------------------------------------------------
IN_CH = 4          # input channels of x
IMG = 16           # spatial size of x
CONV_CH = 8        # conv output channels
CONV_OUT = 8       # conv output spatial (stride 2, pad 1)
HID_FEAT = 144     # CNN hidden feature dim (matches nn.Linear(144, 96) in __init__)
INPUT_SIZE = 2     # params['input_size']
HIDDEN = 32        # seq2seq GRU hidden size
OUTPUT_SIZE = 8    # seq2seq output / target feature size
TRG_LEN = 8        # target sequence length
BATCH_X = 4        # CNN batch (seq2seq batch becomes BATCH_X // INPUT_SIZE = 2)
SEQ_BATCH = BATCH_X // INPUT_SIZE
ENC_UNROLL = 4     # manual unroll factor of the encoder recurrence


# -----------------------------------------------------------------------------
# Helpers
# -----------------------------------------------------------------------------
def _full_spec(shape):
    # Whole-array block (no grid): index_map takes no grid args.
    return pl.BlockSpec(shape, lambda: (0,) * len(shape))


# -----------------------------------------------------------------------------
# Pallas kernels
# -----------------------------------------------------------------------------
def _linear_kernel(a_ref, w_ref, b_ref, o_ref, *, activation):
    acc = jnp.dot(a_ref[...], w_ref[...], preferred_element_type=jnp.float32)
    acc = acc + b_ref[...]
    if activation == "relu":
        acc = jnp.maximum(acc, 0.0)
    o_ref[...] = acc.astype(o_ref.dtype)


def pallas_linear(a, w, b, activation=None):
    """a: (M, K), w: (K, N), b: (1, N) -> (M, N). MXU matmul + bias (+ReLU)."""
    M, _ = a.shape
    _, N = w.shape
    return pl.pallas_call(
        functools.partial(_linear_kernel, activation=activation),
        out_shape=jax.ShapeDtypeStruct((M, N), jnp.float32),
        in_specs=[_full_spec(a.shape), _full_spec(w.shape), _full_spec(b.shape)],
        out_specs=_full_spec((M, N)),
    )(a, w, b)


def _seq2seq_kernel(src_ref, y_ref,
                    e_wih_ref, e_whh_ref, e_bi_ref, e_bhn_ref,
                    d_wih_ref, d_whh_ref, d_bi_ref, d_bhn_ref,
                    out_w_ref, out_b_ref,
                    out_ref, henc_ref,
                    gir_scr, giz_scr, gin_scr,
                    *, t_enc, t_dec, batch, hidden, unroll):
    """Fused GRU encoder + teacher-forced GRU decoder + output projection."""
    B, H = batch, hidden
    f32 = jnp.float32

    # ----------------------------- encoder -----------------------------------
    # Hoisted input projection: one well-shaped (T*B, I) x (I, H) matmul per
    # gate, with b_ih (+ b_hh for r/z) folded in.  Results live in VMEM scratch;
    # the serial recurrence below only does (B, H) x (H, H) matmuls.
    src = src_ref[...]                                              # (T_enc*B, I)
    gir_scr[...] = jnp.dot(src, e_wih_ref[0], preferred_element_type=f32) + e_bi_ref[0]
    giz_scr[...] = jnp.dot(src, e_wih_ref[1], preferred_element_type=f32) + e_bi_ref[1]
    gin_scr[...] = jnp.dot(src, e_wih_ref[2], preferred_element_type=f32) + e_bi_ref[2]

    e_whh_r = e_whh_ref[0]                                          # (H, H) per gate
    e_whh_z = e_whh_ref[1]
    e_whh_n = e_whh_ref[2]
    e_bhn = jnp.broadcast_to(e_bhn_ref[...], (B, H))                # hoisted broadcast

    blk = unroll * B                                                # rows per block

    def enc_block(j, h):
        base = pl.multiple_of(j * blk, blk)
        blk_r = gir_scr[pl.ds(base, blk), :]                        # (unroll*B, H)
        blk_z = giz_scr[pl.ds(base, blk), :]
        blk_n = gin_scr[pl.ds(base, blk), :]
        # Manual partial unroll: gives the scheduler several recurrence steps
        # of visibility to overlap MXU push/pop with the VPU/EUP gate math.
        for u in range(unroll):
            g_r = blk_r[u * B:(u + 1) * B, :]
            g_z = blk_z[u * B:(u + 1) * B, :]
            g_n = blk_n[u * B:(u + 1) * B, :]
            r = jax.nn.sigmoid(g_r + jnp.dot(h, e_whh_r, preferred_element_type=f32))
            z = jax.nn.sigmoid(g_z + jnp.dot(h, e_whh_z, preferred_element_type=f32))
            n = jnp.tanh(g_n + r * (jnp.dot(h, e_whh_n, preferred_element_type=f32)
                                    + e_bhn))
            h = (1.0 - z) * n + z * h
        return h

    h_enc = lax.fori_loop(0, t_enc // unroll, enc_block, jnp.zeros((B, H), f32))
    henc_ref[...] = h_enc

    # -------------------------- decoder (teacher forced) ---------------------
    # Hoisted input projection (tiny matmuls, once) ...
    y = y_ref[...]                                                  # (T_dec*B, O)
    d_gr = jnp.dot(y, d_wih_ref[0], preferred_element_type=f32) + d_bi_ref[0]
    d_gz = jnp.dot(y, d_wih_ref[1], preferred_element_type=f32) + d_bi_ref[1]
    d_gn = jnp.dot(y, d_wih_ref[2], preferred_element_type=f32) + d_bi_ref[2]
    d_whh_r = d_whh_ref[0]
    d_whh_z = d_whh_ref[1]
    d_whh_n = d_whh_ref[2]
    d_bhn = jnp.broadcast_to(d_bhn_ref[...], (B, H))

    # ... fully unrolled recurrence (T_dec = 8), hidden states kept in vregs.
    h = h_enc
    hs = []
    for t in range(t_dec):
        g_r = d_gr[t * B:(t + 1) * B, :]
        g_z = d_gz[t * B:(t + 1) * B, :]
        g_n = d_gn[t * B:(t + 1) * B, :]
        r = jax.nn.sigmoid(g_r + jnp.dot(h, d_whh_r, preferred_element_type=f32))
        z = jax.nn.sigmoid(g_z + jnp.dot(h, d_whh_z, preferred_element_type=f32))
        n = jnp.tanh(g_n + r * (jnp.dot(h, d_whh_n, preferred_element_type=f32)
                                + d_bhn))
        h = (1.0 - z) * n + z * h
        hs.append(h)

    # Output projection hoisted out of the loop: single (T*B, H) x (H, O) matmul
    # and one lane-dense store instead of T tiny matmuls + narrow stores.
    h_all = jnp.concatenate(hs, axis=0)                             # (T_dec*B, H)
    out_ref[...] = (jnp.dot(h_all, out_w_ref[...], preferred_element_type=f32)
                    + out_b_ref[...]).astype(out_ref.dtype)


def pallas_seq2seq(src2d, y2d, params, batch):
    """src2d: (T_enc*B, I), y2d: (T_dec*B, O), rows ordered t*B + b."""
    t_enc = src2d.shape[0] // batch
    t_dec = y2d.shape[0] // batch
    out_feat = y2d.shape[-1]
    unroll = ENC_UNROLL if t_enc % ENC_UNROLL == 0 else 1

    inputs = (src2d, y2d,
              params["enc_wih"], params["enc_whh"], params["enc_bi"], params["enc_bhn"],
              params["dec_wih"], params["dec_whh"], params["dec_bi"], params["dec_bhn"],
              params["out_w"], params["out_b"])
    kernel = functools.partial(_seq2seq_kernel, t_enc=t_enc, t_dec=t_dec,
                               batch=batch, hidden=HIDDEN, unroll=unroll)
    out2d, h_enc = pl.pallas_call(
        kernel,
        out_shape=(jax.ShapeDtypeStruct((t_dec * batch, out_feat), jnp.float32),
                   jax.ShapeDtypeStruct((batch, HIDDEN), jnp.float32)),
        in_specs=[_full_spec(a.shape) for a in inputs],
        out_specs=(_full_spec((t_dec * batch, out_feat)),
                   _full_spec((batch, HIDDEN))),
        scratch_shapes=[pltpu.VMEM((t_enc * batch, HIDDEN), jnp.float32)
                        for _ in range(3)],
    )(*inputs)
    return out2d, h_enc


# -----------------------------------------------------------------------------
# Model: parameters + forward
# -----------------------------------------------------------------------------
def init_params(key):
    ks = jax.random.split(key, 16)
    s = 0.1

    def rnd(i, shape):
        return s * jax.random.normal(ks[i], shape, jnp.float32)

    # cnn_model: Conv2d(4->8, k3, s2, p1), weights in im2col (kh, kw, ci) order.
    conv_w = rnd(0, (3, 3, IN_CH, CONV_CH))
    conv_b = rnd(1, (1, CONV_CH))

    # fc_hid weight generated in PyTorch NCHW-flatten row order, then permuted
    # ONCE at init to NHWC-flatten row order so the kernel's lane-friendly NHWC
    # conv activation feeds it without a transpose on the hot path.
    fc_hid_w = rnd(2, (CONV_CH * CONV_OUT * CONV_OUT, HID_FEAT))
    fc_hid_b = rnd(3, (1, HID_FEAT))
    k = jnp.arange(CONV_OUT * CONV_OUT * CONV_CH)
    oh = k // (CONV_OUT * CONV_CH)
    ow = (k // CONV_CH) % CONV_OUT
    co = k % CONV_CH
    nchw_row = co * (CONV_OUT * CONV_OUT) + oh * CONV_OUT + ow
    fc_hid_w_nhwc = fc_hid_w[nchw_row]

    # CNNSeq2Seq.fc = nn.Linear(144, 96): defined in __init__ but NOT used in forward.
    fc_w = rnd(4, (HID_FEAT, 96))
    fc_b = rnd(5, (1, 96))

    def gru(i0, in_size):
        wih = rnd(i0 + 0, (3, in_size, HIDDEN))       # per-gate [r, z, n]
        whh = rnd(i0 + 1, (3, HIDDEN, HIDDEN))
        bih = rnd(i0 + 2, (3, 1, HIDDEN))
        bhh = rnd(i0 + 3, (3, 1, HIDDEN))
        # Fold b_hh into the hoisted input projection for the r/z gates; the n
        # gate keeps b_hh separate (it sits inside the r * (...) term).
        bi = bih + bhh * jnp.array([1.0, 1.0, 0.0], jnp.float32).reshape(3, 1, 1)
        bhn = bhh[2]
        return wih, whh, bi, bhn

    enc_wih, enc_whh, enc_bi, enc_bhn = gru(6, INPUT_SIZE)
    dec_wih, dec_whh, dec_bi, dec_bhn = gru(10, OUTPUT_SIZE)

    return {
        "conv_w_mat": conv_w.reshape(3 * 3 * IN_CH, CONV_CH),
        "conv_b": conv_b,
        "fc_hid_w_nhwc": fc_hid_w_nhwc, "fc_hid_b": fc_hid_b,
        "fc_w": fc_w, "fc_b": fc_b,                   # unused (matches PyTorch)
        "enc_wih": enc_wih, "enc_whh": enc_whh, "enc_bi": enc_bi, "enc_bhn": enc_bhn,
        "dec_wih": dec_wih, "dec_whh": dec_whh, "dec_bi": dec_bi, "dec_bhn": dec_bhn,
        "out_w": rnd(14, (HIDDEN, OUTPUT_SIZE)),
        "out_b": rnd(15, (1, OUTPUT_SIZE)),
    }


def cnn_model_forward(params, x_nchw):
    """Conv2d(4->8, k3, s2, p1) + ReLU, then flatten + Linear(512->144)."""
    n = x_nchw.shape[0]
    x_nhwc = jnp.transpose(x_nchw, (0, 2, 3, 1))                   # NCHW -> NHWC
    xp = jnp.pad(x_nhwc, ((0, 0), (1, 1), (1, 1), (0, 0)))
    # TODO(synk): im2col stays as thin XLA glue (pad + 9 strided slices, ~20 KiB);
    # in-kernel strided-window gathering was judged not worth the lowering risk.
    cols = [xp[:, kh:kh + IMG:2, kw:kw + IMG:2, :]
            for kh in range(3) for kw in range(3)]
    patches = jnp.concatenate(cols, axis=-1)                        # (N, 8, 8, 36)
    patches = patches.reshape(n * CONV_OUT * CONV_OUT, 3 * 3 * IN_CH)
    conv = pallas_linear(patches, params["conv_w_mat"], params["conv_b"],
                         activation="relu")                         # (N*64, Cout) NHWC rows

    conv_nhwc = conv.reshape(n, CONV_OUT, CONV_OUT, CONV_CH)
    cnn_out = jnp.transpose(conv_nhwc, (0, 3, 1, 2))                # NCHW (returned only)

    # Hot path: NHWC flatten feeds the row-permuted fc_hid weight (no transpose).
    flat = conv.reshape(n, CONV_OUT * CONV_OUT * CONV_CH)           # (N, 512)
    hidden = pallas_linear(flat, params["fc_hid_w_nhwc"], params["fc_hid_b"])
    return cnn_out, hidden


def seq2seq_forward(params, src_bti, y_bto):
    """GRU encoder over src, teacher-forced GRU decoder over y, linear output."""
    b, t_enc, i = src_bti.shape
    _, t_dec, o = y_bto.shape
    # time-major, flattened to (T*B, F) so the kernel's hoisted projections are
    # single well-shaped matmuls (row index = t*B + b).
    src2d = jnp.transpose(src_bti, (1, 0, 2)).reshape(t_enc * b, i)
    y2d = jnp.transpose(y_bto, (1, 0, 2)).reshape(t_dec * b, o)
    out2d, h_enc = pallas_seq2seq(src2d, y2d, params, b)
    out = out2d.reshape(t_dec, b, o).transpose(1, 0, 2)             # (B, T, O)
    hidden_enc = h_enc[None]                                        # (1, B, H)
    return out, hidden_enc


@jax.jit
def cnnseq2seq_forward(params, x, y):
    # matches CNNSeq2Seq.forward(x, y)
    cnn_out, hidden = cnn_model_forward(params, x)
    # hidden.reshape(-1, hidden.shape[-1], input_size)
    hidden = hidden.reshape(-1, hidden.shape[-1], INPUT_SIZE)       # (2, 144, 2)
    out, hidden_enc = seq2seq_forward(params, hidden, y)
    # PyTorch returns (out, self.cnn_model, cnn_out, hidden_enc); the module
    # object itself is not a tensor, so only the tensor outputs are returned.
    return out, cnn_out, hidden_enc


# -----------------------------------------------------------------------------
# Main
# -----------------------------------------------------------------------------
if __name__ == "__main__":
    key = jax.random.PRNGKey(0)
    kp, kx, ky = jax.random.split(key, 3)
    params = init_params(kp)

    x = jax.random.normal(kx, (BATCH_X, IN_CH, IMG, IMG), jnp.float32)   # NCHW
    y = jax.random.normal(ky, (SEQ_BATCH, TRG_LEN, OUTPUT_SIZE), jnp.float32)

    out, cnn_out, hidden_enc = cnnseq2seq_forward(params, x, y)
    jax.block_until_ready((out, cnn_out, hidden_enc))

    assert out.shape == (SEQ_BATCH, TRG_LEN, OUTPUT_SIZE)
    assert cnn_out.shape == (BATCH_X, CONV_CH, CONV_OUT, CONV_OUT)
    assert hidden_enc.shape == (1, SEQ_BATCH, HIDDEN)
    print("KERNEL_OK")
</pallas_src>

<mosaic_0001>
module attributes {stable_mosaic.version = 11 : i64} {
  func.func @_linear_kernel(%arg0: memref<256x36xf32, #tpu.memory_space<vmem>>, %arg1: memref<36x8xf32, #tpu.memory_space<vmem>>, %arg2: memref<1x8xf32, #tpu.memory_space<vmem>>, %arg3: memref<256x8xf32, #tpu.memory_space<vmem>>) attributes {dimension_semantics = [], scalar_prefetch = 0 : i64, scratch_operands = 0 : i64, tpu.core_type = #tpu.core_type<tc>} {
    %c0 = arith.constant 0 : index
    %c0_0 = arith.constant 0 : index
    %0 = vector.load %arg0[%c0, %c0_0] : memref<256x36xf32, #tpu.memory_space<vmem>>, vector<256x36xf32>
    %c0_1 = arith.constant 0 : index
    %c0_2 = arith.constant 0 : index
    %1 = vector.load %arg1[%c0_1, %c0_2] : memref<36x8xf32, #tpu.memory_space<vmem>>, vector<36x8xf32>
    %cst = arith.constant dense<0.000000e+00> : vector<256x8xf32>
    %2 = tpu.matmul %0, %1, %cst {dimension_numbers = #tpu.dot_dimension_numbers<[1], [0], [0], [1], [0, 0, 1, 1], [], []>} : vector<256x36xf32>, vector<36x8xf32>, vector<256x8xf32> -> vector<256x8xf32>
    %c0_3 = arith.constant 0 : index
    %c0_4 = arith.constant 0 : index
    %3 = vector.load %arg2[%c0_3, %c0_4] : memref<1x8xf32, #tpu.memory_space<vmem>>, vector<1x8xf32>
    %4 = vector.broadcast %3 : vector<1x8xf32> to vector<256x8xf32>
    %5 = arith.addf %2, %4 : vector<256x8xf32>
    %cst_5 = arith.constant 0.000000e+00 : f32
    %6 = vector.broadcast %cst_5 : f32 to vector<256x8xf32>
    %7 = arith.maximumf %5, %6 : vector<256x8xf32>
    %c0_6 = arith.constant 0 : index
    %c0_7 = arith.constant 0 : index
    %8 = vector.load %arg3[%c0_6, %c0_7] : memref<256x8xf32, #tpu.memory_space<vmem>>, vector<256x8xf32>
    tpu.vector_store %arg3[%c0_6, %c0_7], %7 {strides = array<i32>} : memref<256x8xf32, #tpu.memory_space<vmem>>, vector<256x8xf32>,
    return
  }
}

module attributes {stable_mosaic.version = 11 : i64} {
  func.func @_linear_kernel(%arg0: memref<4x512xf32, #tpu.memory_space<vmem>>, %arg1: memref<512x144xf32, #tpu.memory_space<vmem>>, %arg2: memref<1x144xf32, #tpu.memory_space<vmem>>, %arg3: memref<4x144xf32, #tpu.memory_space<vmem>>) attributes {dimension_semantics = [], scalar_prefetch = 0 : i64, scratch_operands = 0 : i64, tpu.core_type = #tpu.core_type<tc>} {
    %c0 = arith.constant 0 : index
    %c0_0 = arith.constant 0 : index
    %0 = vector.load %arg0[%c0, %c0_0] : memref<4x512xf32, #tpu.memory_space<vmem>>, vector<4x512xf32>
    %c0_1 = arith.constant 0 : index
    %c0_2 = arith.constant 0 : index
    %1 = vector.load %arg1[%c0_1, %c0_2] : memref<512x144xf32, #tpu.memory_space<vmem>>, vector<512x144xf32>
    %cst = arith.constant dense<0.000000e+00> : vector<4x144xf32>
    %2 = tpu.matmul %0, %1, %cst {dimension_numbers = #tpu.dot_dimension_numbers<[1], [0], [0], [1], [0, 0, 1, 1], [], []>} : vector<4x512xf32>, vector<512x144xf32>, vector<4x144xf32> -> vector<4x144xf32>
    %c0_3 = arith.constant 0 : index
    %c0_4 = arith.constant 0 : index
    %3 = vector.load %arg2[%c0_3, %c0_4] : memref<1x144xf32, #tpu.memory_space<vmem>>, vector<1x144xf32>
    %4 = vector.broadcast %3 : vector<1x144xf32> to vector<4x144xf32>
    %5 = arith.addf %2, %4 : vector<4x144xf32>
    %c0_5 = arith.constant 0 : index
    %c0_6 = arith.constant 0 : index
    %6 = vector.load %arg3[%c0_5, %c0_6] : memref<4x144xf32, #tpu.memory_space<vmem>>, vector<4x144xf32>
    tpu.vector_store %arg3[%c0_5, %c0_6], %5 {strides = array<i32>} : memref<4x144xf32, #tpu.memory_space<vmem>>, vector<4x144xf32>,
    return
  }
}

module attributes {stable_mosaic.version = 11 : i64} {
  func.func @_seq2seq_kernel(%arg0: memref<288x2xf32, #tpu.memory_space<vmem>>, %arg1: memref<16x8xf32, #tpu.memory_space<vmem>>, %arg2: memref<3x2x32xf32, #tpu.memory_space<vmem>>, %arg3: memref<3x32x32xf32, #tpu.memory_space<vmem>>, %arg4: memref<3x1x32xf32, #tpu.memory_space<vmem>>, %arg5: memref<1x32xf32, #tpu.memory_space<vmem>>, %arg6: memref<3x8x32xf32, #tpu.memory_space<vmem>>, %arg7: memref<3x32x32xf32, #tpu.memory_space<vmem>>, %arg8: memref<3x1x32xf32, #tpu.memory_space<vmem>>, %arg9: memref<1x32xf32, #tpu.memory_space<vmem>>, %arg10: memref<32x8xf32, #tpu.memory_space<vmem>>, %arg11: memref<1x8xf32, #tpu.memory_space<vmem>>, %arg12: memref<16x8xf32, #tpu.memory_space<vmem>>, %arg13: memref<2x32xf32, #tpu.memory_space<vmem>>, %arg14: memref<288x32xf32, #tpu.memory_space<vmem>>, %arg15: memref<288x32xf32, #tpu.memory_space<vmem>>, %arg16: memref<288x32xf32, #tpu.memory_space<vmem>>) attributes {dimension_semantics = [], scalar_prefetch = 0 : i64, scratch_operands = 3 : i64, tpu.core_type = #tpu.core_type<tc>} {
    %c0 = arith.constant 0 : index
    %c0_0 = arith.constant 0 : index
    %0 = vector.load %arg0[%c0, %c0_0] : memref<288x2xf32, #tpu.memory_space<vmem>>, vector<288x2xf32>
    %c0_1 = arith.constant 0 : index
    %c0_2 = arith.constant 0 : index
    %c0_3 = arith.constant 0 : index
    %1 = vector.load %arg2[%c0_1, %c0_2, %c0_3] : memref<3x2x32xf32, #tpu.memory_space<vmem>>, vector<1x2x32xf32>
    %2 = vector.shape_cast %1 : vector<1x2x32xf32> to vector<2x32xf32>
    %cst = arith.constant dense<0.000000e+00> : vector<288x32xf32>
    %3 = tpu.matmul %0, %2, %cst {dimension_numbers = #tpu.dot_dimension_numbers<[1], [0], [0], [1], [0, 0, 1, 1], [], []>} : vector<288x2xf32>, vector<2x32xf32>, vector<288x32xf32> -> vector<288x32xf32>
    %c0_4 = arith.constant 0 : index
    %c0_5 = arith.constant 0 : index
    %c0_6 = arith.constant 0 : index
    %4 = vector.load %arg4[%c0_4, %c0_5, %c0_6] : memref<3x1x32xf32, #tpu.memory_space<vmem>>, vector<1x1x32xf32>
    %5 = vector.shape_cast %4 : vector<1x1x32xf32> to vector<1x32xf32>
    %6 = vector.broadcast %5 : vector<1x32xf32> to vector<288x32xf32>
    %7 = arith.addf %3, %6 : vector<288x32xf32>
    %c0_7 = arith.constant 0 : index
    %c0_8 = arith.constant 0 : index
    %8 = vector.load %arg14[%c0_7, %c0_8] : memref<288x32xf32, #tpu.memory_space<vmem>>, vector<288x32xf32>
    tpu.vector_store %arg14[%c0_7, %c0_8], %7 {strides = array<i32>} : memref<288x32xf32, #tpu.memory_space<vmem>>, vector<288x32xf32>,
    %c1 = arith.constant 1 : index
    %c0_9 = arith.constant 0 : index
    %c0_10 = arith.constant 0 : index
    %9 = vector.load %arg2[%c1, %c0_9, %c0_10] : memref<3x2x32xf32, #tpu.memory_space<vmem>>, vector<1x2x32xf32>
    %10 = vector.shape_cast %9 : vector<1x2x32xf32> to vector<2x32xf32>
    %cst_11 = arith.constant dense<0.000000e+00> : vector<288x32xf32>
    %11 = tpu.matmul %0, %10, %cst_11 {dimension_numbers = #tpu.dot_dimension_numbers<[1], [0], [0], [1], [0, 0, 1, 1], [], []>} : vector<288x2xf32>, vector<2x32xf32>, vector<288x32xf32> -> vector<288x32xf32>
    %c1_12 = arith.constant 1 : index
    %c0_13 = arith.constant 0 : index
    %c0_14 = arith.constant 0 : index
    %12 = vector.load %arg4[%c1_12, %c0_13, %c0_14] : memref<3x1x32xf32, #tpu.memory_space<vmem>>, vector<1x1x32xf32>
    %13 = vector.shape_cast %12 : vector<1x1x32xf32> to vector<1x32xf32>
    %14 = vector.broadcast %13 : vector<1x32xf32> to vector<288x32xf32>
    %15 = arith.addf %11, %14 : vector<288x32xf32>
    %c0_15 = arith.constant 0 : index
    %c0_16 = arith.constant 0 : index
    %16 = vector.load %arg15[%c0_15, %c0_16] : memref<288x32xf32, #tpu.memory_space<vmem>>, vector<288x32xf32>
    tpu.vector_store %arg15[%c0_15, %c0_16], %15 {strides = array<i32>} : memref<288x32xf32, #tpu.memory_space<vmem>>, vector<288x32xf32>,
    %c2 = arith.constant 2 : index
    %c0_17 = arith.constant 0 : index
    %c0_18 = arith.constant 0 : index
    %17 = vector.load %arg2[%c2, %c0_17, %c0_18] : memref<3x2x32xf32, #tpu.memory_space<vmem>>, vector<1x2x32xf32>
    %18 = vector.shape_cast %17 : vector<1x2x32xf32> to vector<2x32xf32>
    %cst_19 = arith.constant dense<0.000000e+00> : vector<288x32xf32>
    %19 = tpu.matmul %0, %18, %cst_19 {dimension_numbers = #tpu.dot_dimension_numbers<[1], [0], [0], [1], [0, 0, 1, 1], [], []>} : vector<288x2xf32>, vector<2x32xf32>, vector<288x32xf32> -> vector<288x32xf32>
    %c2_20 = arith.constant 2 : index
    %c0_21 = arith.constant 0 : index
    %c0_22 = arith.constant 0 : index
    %20 = vector.load %arg4[%c2_20, %c0_21, %c0_22] : memref<3x1x32xf32, #tpu.memory_space<vmem>>, vector<1x1x32xf32>
    %21 = vector.shape_cast %20 : vector<1x1x32xf32> to vector<1x32xf32>
    %22 = vector.broadcast %21 : vector<1x32xf32> to vector<288x32xf32>
    %23 = arith.addf %19, %22 : vector<288x32xf32>
    %c0_23 = arith.constant 0 : index
    %c0_24 = arith.constant 0 : index
    %24 = vector.load %arg16[%c0_23, %c0_24] : memref<288x32xf32, #tpu.memory_space<vmem>>, vector<288x32xf32>
    tpu.vector_store %arg16[%c0_23, %c0_24], %23 {strides = array<i32>} : memref<288x32xf32, #tpu.memory_space<vmem>>, vector<288x32xf32>,
    %c0_25 = arith.constant 0 : index
    %c0_26 = arith.constant 0 : index
    %c0_27 = arith.constant 0 : index
    %25 = vector.load %arg3[%c0_25, %c0_26, %c0_27] : memref<3x32x32xf32, #tpu.memory_space<vmem>>, vector<1x32x32xf32>
    %26 = vector.shape_cast %25 : vector<1x32x32xf32> to vector<32x32xf32>
    %c1_28 = arith.constant 1 : index
    %c0_29 = arith.constant 0 : index
    %c0_30 = arith.constant 0 : index
    %27 = vector.load %arg3[%c1_28, %c0_29, %c0_30] : memref<3x32x32xf32, #tpu.memory_space<vmem>>, vector<1x32x32xf32>
    %28 = vector.shape_cast %27 : vector<1x32x32xf32> to vector<32x32xf32>
    %c2_31 = arith.constant 2 : index
    %c0_32 = arith.constant 0 : index
    %c0_33 = arith.constant 0 : index
    %29 = vector.load %arg3[%c2_31, %c0_32, %c0_33] : memref<3x32x32xf32, #tpu.memory_space<vmem>>, vector<1x32x32xf32>
    %30 = vector.shape_cast %29 : vector<1x32x32xf32> to vector<32x32xf32>
    %c0_34 = arith.constant 0 : index
    %c0_35 = arith.constant 0 : index
    %31 = vector.load %arg5[%c0_34, %c0_35] : memref<1x32xf32, #tpu.memory_space<vmem>>, vector<1x32xf32>
    %32 = vector.shape_cast %31 : vector<1x32xf32> to vector<1x32xf32>
    %33 = vector.broadcast %32 : vector<1x32xf32> to vector<2x32xf32>
    %cst_36 = arith.constant 0.000000e+00 : f32
    %34 = vector.broadcast %cst_36 : f32 to vector<2x32xf32>
    %c0_i32 = arith.constant 0 : i32
    %c36_i32 = arith.constant 36 : i32
    %35 = arith.addi %c0_i32, %c36_i32 : i32
    %c1_i32 = arith.constant 1 : i32
    %36 = scf.for %arg17 = %c0_i32 to %35 step %c1_i32 iter_args(%arg18 = %34) -> (vector<2x32xf32>)  : i32 {
      %c8_i32 = arith.constant 8 : i32
      %292 = arith.muli %arg17, %c8_i32 : i32
      %293 = tpu.assume_multiple %292, 8 : i32
      %294 = arith.index_cast %293 : i32 to index
      %c0_129 = arith.constant 0 : index
      %295 = vector.load %arg14[%294, %c0_129] : memref<288x32xf32, #tpu.memory_space<vmem>>, vector<8x32xf32>
      %296 = arith.index_cast %293 : i32 to index
      %c0_130 = arith.constant 0 : index
      %297 = vector.load %arg15[%296, %c0_130] : memref<288x32xf32, #tpu.memory_space<vmem>>, vector<8x32xf32>
      %298 = arith.index_cast %293 : i32 to index
      %c0_131 = arith.constant 0 : index
      %299 = vector.load %arg16[%298, %c0_131] : memref<288x32xf32, #tpu.memory_space<vmem>>, vector<8x32xf32>
      %300 = vector.extract_strided_slice %295 {offsets = [0, 0], sizes = [2, 32], strides = [1, 1]} : vector<8x32xf32> to vector<2x32xf32>
      %301 = vector.extract_strided_slice %297 {offsets = [0, 0], sizes = [2, 32], strides = [1, 1]} : vector<8x32xf32> to vector<2x32xf32>
      %302 = vector.extract_strided_slice %299 {offsets = [0, 0], sizes = [2, 32], strides = [1, 1]} : vector<8x32xf32> to vector<2x32xf32>
      %cst_132 = arith.constant dense<0.000000e+00> : vector<2x32xf32>
      %303 = tpu.matmul %arg18, %26, %cst_132 {dimension_numbers = #tpu.dot_dimension_numbers<[1], [0], [0], [1], [0, 0, 1, 1], [], []>} : vector<2x32xf32>, vector<32x32xf32>, vector<2x32xf32> -> vector<2x32xf32>
      %304 = arith.addf %300, %303 : vector<2x32xf32>
      %305 = arith.negf %304 : vector<2x32xf32>
      %306 = math.exp %305 : vector<2x32xf32>
      %cst_133 = arith.constant 1.000000e+00 : f32
      %307 = vector.broadcast %cst_133 : f32 to vector<2x32xf32>
      %308 = arith.addf %307, %306 : vector<2x32xf32>
      %309 = arith.divf %307, %308 : vector<2x32xf32>
      %cst_134 = arith.constant dense<0.000000e+00> : vector<2x32xf32>
      %310 = tpu.matmul %arg18, %28, %cst_134 {dimension_numbers = #tpu.dot_dimension_numbers<[1], [0], [0], [1], [0, 0, 1, 1], [], []>} : vector<2x32xf32>, vector<32x32xf32>, vector<2x32xf32> -> vector<2x32xf32>
      %311 = arith.addf %301, %310 : vector<2x32xf32>
      %312 = arith.negf %311 : vector<2x32xf32>
      %313 = math.exp %312 : vector<2x32xf32>
      %cst_135 = arith.constant 1.000000e+00 : f32
      %314 = vector.broadcast %cst_135 : f32 to vector<2x32xf32>
      %315 = arith.addf %314, %313 : vector<2x32xf32>
      %316 = arith.divf %314, %315 : vector<2x32xf32>
      %cst_136 = arith.constant dense<0.000000e+00> : vector<2x32xf32>
      %317 = tpu.matmul %arg18, %30, %cst_136 {dimension_numbers = #tpu.dot_dimension_numbers<[1], [0], [0], [1], [0, 0, 1, 1], [], []>} : vector<2x32xf32>, vector<32x32xf32>, vector<2x32xf32> -> vector<2x32xf32>
      %318 = arith.addf %317, %33 : vector<2x32xf32>
      %319 = arith.mulf %309, %318 : vector<2x32xf32>
      %320 = arith.addf %302, %319 : vector<2x32xf32>
      %321 = math.tanh %320 : vector<2x32xf32>
      %cst_137 = arith.constant 1.000000e+00 : f32
      %322 = vector.broadcast %cst_137 : f32 to vector<2x32xf32>
      %323 = arith.subf %322, %316 : vector<2x32xf32>
      %324 = arith.mulf %323, %321 : vector<2x32xf32>
      %325 = arith.mulf %316, %arg18 : vector<2x32xf32>
      %326 = arith.addf %324, %325 : vector<2x32xf32>
      %327 = vector.extract_strided_slice %295 {offsets = [2, 0], sizes = [2, 32], strides = [1, 1]} : vector<8x32xf32> to vector<2x32xf32>
      %328 = vector.extract_strided_slice %297 {offsets = [2, 0], sizes = [2, 32], strides = [1, 1]} : vector<8x32xf32> to vector<2x32xf32>
      %329 = vector.extract_strided_slice %299 {offsets = [2, 0], sizes = [2, 32], strides = [1, 1]} : vector<8x32xf32> to vector<2x32xf32>
      %cst_138 = arith.constant dense<0.000000e+00> : vector<2x32xf32>
      %330 = tpu.matmul %326, %26, %cst_138 {dimension_numbers = #tpu.dot_dimension_numbers<[1], [0], [0], [1], [0, 0, 1, 1], [], []>} : vector<2x32xf32>, vector<32x32xf32>, vector<2x32xf32> -> vector<2x32xf32>
      %331 = arith.addf %327, %330 : vector<2x32xf32>
      %332 = arith.negf %331 : vector<2x32xf32>
      %333 = math.exp %332 : vector<2x32xf32>
      %cst_139 = arith.constant 1.000000e+00 : f32
      %334 = vector.broadcast %cst_139 : f32 to vector<2x32xf32>
      %335 = arith.addf %334, %333 : vector<2x32xf32>
      %336 = arith.divf %334, %335 : vector<2x32xf32>
      %cst_140 = arith.constant dense<0.000000e+00> : vector<2x32xf32>
      %337 = tpu.matmul %326, %28, %cst_140 {dimension_numbers = #tpu.dot_dimension_numbers<[1], [0], [0], [1], [0, 0, 1, 1], [], []>} : vector<2x32xf32>, vector<32x32xf32>, vector<2x32xf32> -> vector<2x32xf32>
      %338 = arith.addf %328, %337 : vector<2x32xf32>
      %339 = arith.negf %338 : vector<2x32xf32>
      %340 = math.exp %339 : vector<2x32xf32>
      %cst_141 = arith.constant 1.000000e+00 : f32
      %341 = vector.broadcast %cst_141 : f32 to vector<2x32xf32>
      %342 = arith.addf %341, %340 : vector<2x32xf32>
      %343 = arith.divf %341, %342 : vector<2x32xf32>
      %cst_142 = arith.constant dense<0.000000e+00> : vector<2x32xf32>
      %344 = tpu.matmul %326, %30, %cst_142 {dimension_numbers = #tpu.dot_dimension_numbers<[1], [0], [0], [1], [0, 0, 1, 1], [], []>} : vector<2x32xf32>, vector<32x32xf32>, vector<2x32xf32> -> vector<2x32xf32>
      %345 = arith.addf %344, %33 : vector<2x32xf32>
      %346 = arith.mulf %336, %345 : vector<2x32xf32>
      %347 = arith.addf %329, %346 : vector<2x32xf32>
      %348 = math.tanh %347 : vector<2x32xf32>
      %cst_143 = arith.constant 1.000000e+00 : f32
      %349 = vector.broadcast %cst_143 : f32 to vector<2x32xf32>
      %350 = arith.subf %349, %343 : vector<2x32xf32>
      %351 = arith.mulf %350, %348 : vector<2x32xf32>
      %352 = arith.mulf %343, %326 : vector<2x32xf32>
      %353 = arith.addf %351, %352 : vector<2x32xf32>
      %354 = vector.extract_strided_slice %295 {offsets = [4, 0], sizes = [2, 32], strides = [1, 1]} : vector<8x32xf32> to vector<2x32xf32>
      %355 = vector.extract_strided_slice %297 {offsets = [4, 0], sizes = [2, 32], strides = [1, 1]} : vector<8x32xf32> to vector<2x32xf32>
      %356 = vector.extract_strided_slice %299 {offsets = [4, 0], sizes = [2, 32], strides = [1, 1]} : vector<8x32xf32> to vector<2x32xf32>
      %cst_144 = arith.constant dense<0.000000e+00> : vector<2x32xf32>
      %357 = tpu.matmul %353, %26, %cst_144 {dimension_numbers = #tpu.dot_dimension_numbers<[1], [0], [0], [1], [0, 0, 1, 1], [], []>} : vector<2x32xf32>, vector<32x32xf32>, vector<2x32xf32> -> vector<2x32xf32>
      %358 = arith.addf %354, %357 : vector<2x32xf32>
      %359 = arith.negf %358 : vector<2x32xf32>
      %360 = math.exp %359 : vector<2x32xf32>
      %cst_145 = arith.constant 1.000000e+00 : f32
      %361 = vector.broadcast %cst_145 : f32 to vector<2x32xf32>
      %362 = arith.addf %361, %360 : vector<2x32xf32>
      %363 = arith.divf %361, %362 : vector<2x32xf32>
      %cst_146 = arith.constant dense<0.000000e+00> : vector<2x32xf32>
      %364 = tpu.matmul %353, %28, %cst_146 {dimension_numbers = #tpu.dot_dimension_numbers<[1], [0], [0], [1], [0, 0, 1, 1], [], []>} : vector<2x32xf32>, vector<32x32xf32>, vector<2x32xf32> -> vector<2x32xf32>
      %365 = arith.addf %355, %364 : vector<2x32xf32>
      %366 = arith.negf %365 : vector<2x32xf32>
      %367 = math.exp %366 : vector<2x32xf32>
      %cst_147 = arith.constant 1.000000e+00 : f32
      %368 = vector.broadcast %cst_147 : f32 to vector<2x32xf32>
      %369 = arith.addf %368, %367 : vector<2x32xf32>
      %370 = arith.divf %368, %369 : vector<2x32xf32>
      %cst_148 = arith.constant dense<0.000000e+00> : vector<2x32xf32>
      %371 = tpu.matmul %353, %30, %cst_148 {dimension_numbers = #tpu.dot_dimension_numbers<[1], [0], [0], [1], [0, 0, 1, 1], [], []>} : vector<2x32xf32>, vector<32x32xf32>, vector<2x32xf32> -> vector<2x32xf32>
      %372 = arith.addf %371, %33 : vector<2x32xf32>
      %373 = arith.mulf %363, %372 : vector<2x32xf32>
      %374 = arith.addf %356, %373 : vector<2x32xf32>
      %375 = math.tanh %374 : vector<2x32xf32>
      %cst_149 = arith.constant 1.000000e+00 : f32
      %376 = vector.broadcast %cst_149 : f32 to vector<2x32xf32>
      %377 = arith.subf %376, %370 : vector<2x32xf32>
      %378 = arith.mulf %377, %375 : vector<2x32xf32>
      %379 = arith.mulf %370, %353 : vector<2x32xf32>
      %380 = arith.addf %378, %379 : vector<2x32xf32>
      %381 = vector.extract_strided_slice %295 {offsets = [6, 0], sizes = [2, 32], strides = [1, 1]} : vector<8x32xf32> to vector<2x32xf32>
      %382 = vector.extract_strided_slice %297 {offsets = [6, 0], sizes = [2, 32], strides = [1, 1]} : vector<8x32xf32> to vector<2x32xf32>
      %383 = vector.extract_strided_slice %299 {offsets = [6, 0], sizes = [2, 32], strides = [1, 1]} : vector<8x32xf32> to vector<2x32xf32>
      %cst_150 = arith.constant dense<0.000000e+00> : vector<2x32xf32>
      %384 = tpu.matmul %380, %26, %cst_150 {dimension_numbers = #tpu.dot_dimension_numbers<[1], [0], [0], [1], [0, 0, 1, 1], [], []>} : vector<2x32xf32>, vector<32x32xf32>, vector<2x32xf32> -> vector<2x32xf32>
      %385 = arith.addf %381, %384 : vector<2x32xf32>
      %386 = arith.negf %385 : vector<2x32xf32>
      %387 = math.exp %386 : vector<2x32xf32>
      %cst_151 = arith.constant 1.000000e+00 : f32
      %388 = vector.broadcast %cst_151 : f32 to vector<2x32xf32>
      %389 = arith.addf %388, %387 : vector<2x32xf32>
      %390 = arith.divf %388, %389 : vector<2x32xf32>
      %cst_152 = arith.constant dense<0.000000e+00> : vector<2x32xf32>
      %391 = tpu.matmul %380, %28, %cst_152 {dimension_numbers = #tpu.dot_dimension_numbers<[1], [0], [0], [1], [0, 0, 1, 1], [], []>} : vector<2x32xf32>, vector<32x32xf32>, vector<2x32xf32> -> vector<2x32xf32>
      %392 = arith.addf %382, %391 : vector<2x32xf32>
      %393 = arith.negf %392 : vector<2x32xf32>
      %394 = math.exp %393 : vector<2x32xf32>
      %cst_153 = arith.constant 1.000000e+00 : f32
      %395 = vector.broadcast %cst_153 : f32 to vector<2x32xf32>
      %396 = arith.addf %395, %394 : vector<2x32xf32>
      %397 = arith.divf %395, %396 : vector<2x32xf32>
      %cst_154 = arith.constant dense<0.000000e+00> : vector<2x32xf32>
      %398 = tpu.matmul %380, %30, %cst_154 {dimension_numbers = #tpu.dot_dimension_numbers<[1], [0], [0], [1], [0, 0, 1, 1], [], []>} : vector<2x32xf32>, vector<32x32xf32>, vector<2x32xf32> -> vector<2x32xf32>
      %399 = arith.addf %398, %33 : vector<2x32xf32>
      %400 = arith.mulf %390, %399 : vector<2x32xf32>
      %401 = arith.addf %383, %400 : vector<2x32xf32>
      %402 = math.tanh %401 : vector<2x32xf32>
      %cst_155 = arith.constant 1.000000e+00 : f32
      %403 = vector.broadcast %cst_155 : f32 to vector<2x32xf32>
      %404 = arith.subf %403, %397 : vector<2x32xf32>
      %405 = arith.mulf %404, %402 : vector<2x32xf32>
      %406 = arith.mulf %397, %380 : vector<2x32xf32>
      %407 = arith.addf %405, %406 : vector<2x32xf32>
      scf.yield %407 : vector<2x32xf32>
    }
    %c36_i32_37 = arith.constant 36 : i32
    %c0_38 = arith.constant 0 : index
    %c0_39 = arith.constant 0 : index
    %37 = vector.load %arg13[%c0_38, %c0_39] : memref<2x32xf32, #tpu.memory_space<vmem>>, vector<2x32xf32>
    tpu.vector_store %arg13[%c0_38, %c0_39], %36 {strides = array<i32>} : memref<2x32xf32, #tpu.memory_space<vmem>>, vector<2x32xf32>,
    %c0_40 = arith.constant 0 : index
    %c0_41 = arith.constant 0 : index
    %38 = vector.load %arg1[%c0_40, %c0_41] : memref<16x8xf32, #tpu.memory_space<vmem>>, vector<16x8xf32>
    %c0_42 = arith.constant 0 : index
    %c0_43 = arith.constant 0 : index
    %c0_44 = arith.constant 0 : index
    %39 = vector.load %arg6[%c0_42, %c0_43, %c0_44] : memref<3x8x32xf32, #tpu.memory_space<vmem>>, vector<1x8x32xf32>
    %40 = vector.shape_cast %39 : vector<1x8x32xf32> to vector<8x32xf32>
    %cst_45 = arith.constant dense<0.000000e+00> : vector<16x32xf32>
    %41 = tpu.matmul %38, %40, %cst_45 {dimension_numbers = #tpu.dot_dimension_numbers<[1], [0], [0], [1], [0, 0, 1, 1], [], []>} : vector<16x8xf32>, vector<8x32xf32>, vector<16x32xf32> -> vector<16x32xf32>
    %c0_46 = arith.constant 0 : index
    %c0_47 = arith.constant 0 : index
    %c0_48 = arith.constant 0 : index
    %42 = vector.load %arg8[%c0_46, %c0_47, %c0_48] : memref<3x1x32xf32, #tpu.memory_space<vmem>>, vector<1x1x32xf32>
    %43 = vector.shape_cast %42 : vector<1x1x32xf32> to vector<1x32xf32>
    %44 = vector.broadcast %43 : vector<1x32xf32> to vector<16x32xf32>
    %45 = arith.addf %41, %44 : vector<16x32xf32>
    %c1_49 = arith.constant 1 : index
    %c0_50 = arith.constant 0 : index
    %c0_51 = arith.constant 0 : index
    %46 = vector.load %arg6[%c1_49, %c0_50, %c0_51] : memref<3x8x32xf32, #tpu.memory_space<vmem>>, vector<1x8x32xf32>
    %47 = vector.shape_cast %46 : vector<1x8x32xf32> to vector<8x32xf32>
    %cst_52 = arith.constant dense<0.000000e+00> : vector<16x32xf32>
    %48 = tpu.matmul %38, %47, %cst_52 {dimension_numbers = #tpu.dot_dimension_numbers<[1], [0], [0], [1], [0, 0, 1, 1], [], []>} : vector<16x8xf32>, vector<8x32xf32>, vector<16x32xf32> -> vector<16x32xf32>
    %c1_53 = arith.constant 1 : index
    %c0_54 = arith.constant 0 : index
    %c0_55 = arith.constant 0 : index
    %49 = vector.load %arg8[%c1_53, %c0_54, %c0_55] : memref<3x1x32xf32, #tpu.memory_space<vmem>>, vector<1x1x32xf32>
    %50 = vector.shape_cast %49 : vector<1x1x32xf32> to vector<1x32xf32>
    %51 = vector.broadcast %50 : vector<1x32xf32> to vector<16x32xf32>
    %52 = arith.addf %48, %51 : vector<16x32xf32>
    %c2_56 = arith.constant 2 : index
    %c0_57 = arith.constant 0 : index
    %c0_58 = arith.constant 0 : index
    %53 = vector.load %arg6[%c2_56, %c0_57, %c0_58] : memref<3x8x32xf32, #tpu.memory_space<vmem>>, vector<1x8x32xf32>
    %54 = vector.shape_cast %53 : vector<1x8x32xf32> to vector<8x32xf32>
    %cst_59 = arith.constant dense<0.000000e+00> : vector<16x32xf32>
    %55 = tpu.matmul %38, %54, %cst_59 {dimension_numbers = #tpu.dot_dimension_numbers<[1], [0], [0], [1], [0, 0, 1, 1], [], []>} : vector<16x8xf32>, vector<8x32xf32>, vector<16x32xf32> -> vector<16x32xf32>
    %c2_60 = arith.constant 2 : index
    %c0_61 = arith.constant 0 : index
    %c0_62 = arith.constant 0 : index
    %56 = vector.load %arg8[%c2_60, %c0_61, %c0_62] : memref<3x1x32xf32, #tpu.memory_space<vmem>>, vector<1x1x32xf32>
    %57 = vector.shape_cast %56 : vector<1x1x32xf32> to vector<1x32xf32>
    %58 = vector.broadcast %57 : vector<1x32xf32> to vector<16x32xf32>
    %59 = arith.addf %55, %58 : vector<16x32xf32>
    %c0_63 = arith.constant 0 : index
    %c0_64 = arith.constant 0 : index
    %c0_65 = arith.constant 0 : index
    %60 = vector.load %arg7[%c0_63, %c0_64, %c0_65] : memref<3x32x32xf32, #tpu.memory_space<vmem>>, vector<1x32x32xf32>
    %61 = vector.shape_cast %60 : vector<1x32x32xf32> to vector<32x32xf32>
    %c1_66 = arith.constant 1 : index
    %c0_67 = arith.constant 0 : index
    %c0_68 = arith.constant 0 : index
    %62 = vector.load %arg7[%c1_66, %c0_67, %c0_68] : memref<3x32x32xf32, #tpu.memory_space<vmem>>, vector<1x32x32xf32>
    %63 = vector.shape_cast %62 : vector<1x32x32xf32> to vector<32x32xf32>
    %c2_69 = arith.constant 2 : index
    %c0_70 = arith.constant 0 : index
    %c0_71 = arith.constant 0 : index
    %64 = vector.load %arg7[%c2_69, %c0_70, %c0_71] : memref<3x32x32xf32, #tpu.memory_space<vmem>>, vector<1x32x32xf32>
    %65 = vector.shape_cast %64 : vector<1x32x32xf32> to vector<32x32xf32>
    %c0_72 = arith.constant 0 : index
    %c0_73 = arith.constant 0 : index
    %66 = vector.load %arg9[%c0_72, %c0_73] : memref<1x32xf32, #tpu.memory_space<vmem>>, vector<1x32xf32>
    %67 = vector.shape_cast %66 : vector<1x32xf32> to vector<1x32xf32>
    %68 = vector.broadcast %67 : vector<1x32xf32> to vector<2x32xf32>
    %69 = vector.extract_strided_slice %45 {offsets = [0, 0], sizes = [2, 32], strides = [1, 1]} : vector<16x32xf32> to vector<2x32xf32>
    %70 = vector.extract_strided_slice %52 {offsets = [0, 0], sizes = [2, 32], strides = [1, 1]} : vector<16x32xf32> to vector<2x32xf32>
    %71 = vector.extract_strided_slice %59 {offsets = [0, 0], sizes = [2, 32], strides = [1, 1]} : vector<16x32xf32> to vector<2x32xf32>
    %cst_74 = arith.constant dense<0.000000e+00> : vector<2x32xf32>
    %72 = tpu.matmul %36, %61, %cst_74 {dimension_numbers = #tpu.dot_dimension_numbers<[1], [0], [0], [1], [0, 0, 1, 1], [], []>} : vector<2x32xf32>, vector<32x32xf32>, vector<2x32xf32> -> vector<2x32xf32>
    %73 = arith.addf %69, %72 : vector<2x32xf32>
    %74 = arith.negf %73 : vector<2x32xf32>
    %75 = math.exp %74 : vector<2x32xf32>
    %cst_75 = arith.constant 1.000000e+00 : f32
    %76 = vector.broadcast %cst_75 : f32 to vector<2x32xf32>
    %77 = arith.addf %76, %75 : vector<2x32xf32>
    %78 = arith.divf %76, %77 : vector<2x32xf32>
    %cst_76 = arith.constant dense<0.000000e+00> : vector<2x32xf32>
    %79 = tpu.matmul %36, %63, %cst_76 {dimension_numbers = #tpu.dot_dimension_numbers<[1], [0], [0], [1], [0, 0, 1, 1], [], []>} : vector<2x32xf32>, vector<32x32xf32>, vector<2x32xf32> -> vector<2x32xf32>
    %80 = arith.addf %70, %79 : vector<2x32xf32>
    %81 = arith.negf %80 : vector<2x32xf32>
    %82 = math.exp %81 : vector<2x32xf32>
    %cst_77 = arith.constant 1.000000e+00 : f32
    %83 = vector.broadcast %cst_77 : f32 to vector<2x32xf32>
    %84 = arith.addf %83, %82 : vector<2x32xf32>
    %85 = arith.divf %83, %84 : vector<2x32xf32>
    %cst_78 = arith.constant dense<0.000000e+00> : vector<2x32xf32>
    %86 = tpu.matmul %36, %65, %cst_78 {dimension_numbers = #tpu.dot_dimension_numbers<[1], [0], [0], [1], [0, 0, 1, 1], [], []>} : vector<2x32xf32>, vector<32x32xf32>, vector<2x32xf32> -> vector<2x32xf32>
    %87 = arith.addf %86, %68 : vector<2x32xf32>
    %88 = arith.mulf %78, %87 : vector<2x32xf32>
    %89 = arith.addf %71, %88 : vector<2x32xf32>
    %90 = math.tanh %89 : vector<2x32xf32>
    %cst_79 = arith.constant 1.000000e+00 : f32
    %91 = vector.broadcast %cst_79 : f32 to vector<2x32xf32>
    %92 = arith.subf %91, %85 : vector<2x32xf32>
    %93 = arith.mulf %92, %90 : vector<2x32xf32>
    %94 = arith.mulf %85, %36 : vector<2x32xf32>
    %95 = arith.addf %93, %94 : vector<2x32xf32>
    %96 = vector.extract_strided_slice %45 {offsets = [2, 0], sizes = [2, 32], strides = [1, 1]} : vector<16x32xf32> to vector<2x32xf32>
    %97 = vector.extract_strided_slice %52 {offsets = [2, 0], sizes = [2, 32], strides = [1, 1]} : vector<16x32xf32> to vector<2x32xf32>
    %98 = vector.extract_strided_slice %59 {offsets = [2, 0], sizes = [2, 32], strides = [1, 1]} : vector<16x32xf32> to vector<2x32xf32>
    %cst_80 = arith.constant dense<0.000000e+00> : vector<2x32xf32>
    %99 = tpu.matmul %95, %61, %cst_80 {dimension_numbers = #tpu.dot_dimension_numbers<[1], [0], [0], [1], [0, 0, 1, 1], [], []>} : vector<2x32xf32>, vector<32x32xf32>, vector<2x32xf32> -> vector<2x32xf32>
    %100 = arith.addf %96, %99 : vector<2x32xf32>
    %101 = arith.negf %100 : vector<2x32xf32>
    %102 = math.exp %101 : vector<2x32xf32>
    %cst_81 = arith.constant 1.000000e+00 : f32
    %103 = vector.broadcast %cst_81 : f32 to vector<2x32xf32>
    %104 = arith.addf %103, %102 : vector<2x32xf32>
    %105 = arith.divf %103, %104 : vector<2x32xf32>
    %cst_82 = arith.constant dense<0.000000e+00> : vector<2x32xf32>
    %106 = tpu.matmul %95, %63, %cst_82 {dimension_numbers = #tpu.dot_dimension_numbers<[1], [0], [0], [1], [0, 0, 1, 1], [], []>} : vector<2x32xf32>, vector<32x32xf32>, vector<2x32xf32> -> vector<2x32xf32>
    %107 = arith.addf %97, %106 : vector<2x32xf32>
    %108 = arith.negf %107 : vector<2x32xf32>
    %109 = math.exp %108 : vector<2x32xf32>
    %cst_83 = arith.constant 1.000000e+00 : f32
    %110 = vector.broadcast %cst_83 : f32 to vector<2x32xf32>
    %111 = arith.addf %110, %109 : vector<2x32xf32>
    %112 = arith.divf %110, %111 : vector<2x32xf32>
    %cst_84 = arith.constant dense<0.000000e+00> : vector<2x32xf32>
    %113 = tpu.matmul %95, %65, %cst_84 {dimension_numbers = #tpu.dot_dimension_numbers<[1], [0], [0], [1], [0, 0, 1, 1], [], []>} : vector<2x32xf32>, vector<32x32xf32>, vector<2x32xf32> -> vector<2x32xf32>
    %114 = arith.addf %113, %68 : vector<2x32xf32>
    %115 = arith.mulf %105, %114 : vector<2x32xf32>
    %116 = arith.addf %98, %115 : vector<2x32xf32>
    %117 = math.tanh %116 : vector<2x32xf32>
    %cst_85 = arith.constant 1.000000e+00 : f32
    %118 = vector.broadcast %cst_85 : f32 to vector<2x32xf32>
    %119 = arith.subf %118, %112 : vector<2x32xf32>
    %120 = arith.mulf %119, %117 : vector<2x32xf32>
    %121 = arith.mulf %112, %95 : vector<2x32xf32>
    %122 = arith.addf %120, %121 : vector<2x32xf32>
    %123 = vector.extract_strided_slice %45 {offsets = [4, 0], sizes = [2, 32], strides = [1, 1]} : vector<16x32xf32> to vector<2x32xf32>
    %124 = vector.extract_strided_slice %52 {offsets = [4, 0], sizes = [2, 32], strides = [1, 1]} : vector<16x32xf32> to vector<2x32xf32>
    %125 = vector.extract_strided_slice %59 {offsets = [4, 0], sizes = [2, 32], strides = [1, 1]} : vector<16x32xf32> to vector<2x32xf32>
    %cst_86 = arith.constant dense<0.000000e+00> : vector<2x32xf32>
    %126 = tpu.matmul %122, %61, %cst_86 {dimension_numbers = #tpu.dot_dimension_numbers<[1], [0], [0], [1], [0, 0, 1, 1], [], []>} : vector<2x32xf32>, vector<32x32xf32>, vector<2x32xf32> -> vector<2x32xf32>
    %127 = arith.addf %123, %126 : vector<2x32xf32>
    %128 = arith.negf %127 : vector<2x32xf32>
    %129 = math.exp %128 : vector<2x32xf32>
    %cst_87 = arith.constant 1.000000e+00 : f32
    %130 = vector.broadcast %cst_87 : f32 to vector<2x32xf32>
    %131 = arith.addf %130, %129 : vector<2x32xf32>
    %132 = arith.divf %130, %131 : vector<2x32xf32>
    %cst_88 = arith.constant dense<0.000000e+00> : vector<2x32xf32>
    %133 = tpu.matmul %122, %63, %cst_88 {dimension_numbers = #tpu.dot_dimension_numbers<[1], [0], [0], [1], [0, 0, 1, 1], [], []>} : vector<2x32xf32>, vector<32x32xf32>, vector<2x32xf32> -> vector<2x32xf32>
    %134 = arith.addf %124, %133 : vector<2x32xf32>
    %135 = arith.negf %134 : vector<2x32xf32>
    %136 = math.exp %135 : vector<2x32xf32>
    %cst_89 = arith.constant 1.000000e+00 : f32
    %137 = vector.broadcast %cst_89 : f32 to vector<2x32xf32>
    %138 = arith.addf %137, %136 : vector<2x32xf32>
    %139 = arith.divf %137, %138 : vector<2x32xf32>
    %cst_90 = arith.constant dense<0.000000e+00> : vector<2x32xf32>
    %140 = tpu.matmul %122, %65, %cst_90 {dimension_numbers = #tpu.dot_dimension_numbers<[1], [0], [0], [1], [0, 0, 1, 1], [], []>} : vector<2x32xf32>, vector<32x32xf32>, vector<2x32xf32> -> vector<2x32xf32>
    %141 = arith.addf %140, %68 : vector<2x32xf32>
    %142 = arith.mulf %132, %141 : vector<2x32xf32>
    %143 = arith.addf %125, %142 : vector<2x32xf32>
    %144 = math.tanh %143 : vector<2x32xf32>
    %cst_91 = arith.constant 1.000000e+00 : f32
    %145 = vector.broadcast %cst_91 : f32 to vector<2x32xf32>
    %146 = arith.subf %145, %139 : vector<2x32xf32>
    %147 = arith.mulf %146, %144 : vector<2x32xf32>
    %148 = arith.mulf %139, %122 : vector<2x32xf32>
    %149 = arith.addf %147, %148 : vector<2x32xf32>
    %150 = vector.extract_strided_slice %45 {offsets = [6, 0], sizes = [2, 32], strides = [1, 1]} : vector<16x32xf32> to vector<2x32xf32>
    %151 = vector.extract_strided_slice %52 {offsets = [6, 0], sizes = [2, 32], strides = [1, 1]} : vector<16x32xf32> to vector<2x32xf32>
    %152 = vector.extract_strided_slice %59 {offsets = [6, 0], sizes = [2, 32], strides = [1, 1]} : vector<16x32xf32> to vector<2x32xf32>
    %cst_92 = arith.constant dense<0.000000e+00> : vector<2x32xf32>
    %153 = tpu.matmul %149, %61, %cst_92 {dimension_numbers = #tpu.dot_dimension_numbers<[1], [0], [0], [1], [0, 0, 1, 1], [], []>} : vector<2x32xf32>, vector<32x32xf32>, vector<2x32xf32> -> vector<2x32xf32>
    %154 = arith.addf %150, %153 : vector<2x32xf32>
    %155 = arith.negf %154 : vector<2x32xf32>
    %156 = math.exp %155 : vector<2x32xf32>
    %cst_93 = arith.constant 1.000000e+00 : f32
    %157 = vector.broadcast %cst_93 : f32 to vector<2x32xf32>
    %158 = arith.addf %157, %156 : vector<2x32xf32>
    %159 = arith.divf %157, %158 : vector<2x32xf32>
    %cst_94 = arith.constant dense<0.000000e+00> : vector<2x32xf32>
    %160 = tpu.matmul %149, %63, %cst_94 {dimension_numbers = #tpu.dot_dimension_numbers<[1], [0], [0], [1], [0, 0, 1, 1], [], []>} : vector<2x32xf32>, vector<32x32xf32>, vector<2x32xf32> -> vector<2x32xf32>
    %161 = arith.addf %151, %160 : vector<2x32xf32>
    %162 = arith.negf %161 : vector<2x32xf32>
    %163 = math.exp %162 : vector<2x32xf32>
    %cst_95 = arith.constant 1.000000e+00 : f32
    %164 = vector.broadcast %cst_95 : f32 to vector<2x32xf32>
    %165 = arith.addf %164, %163 : vector<2x32xf32>
    %166 = arith.divf %164, %165 : vector<2x32xf32>
    %cst_96 = arith.constant dense<0.000000e+00> : vector<2x32xf32>
    %167 = tpu.matmul %149, %65, %cst_96 {dimension_numbers = #tpu.dot_dimension_numbers<[1], [0], [0], [1], [0, 0, 1, 1], [], []>} : vector<2x32xf32>, vector<32x32xf32>, vector<2x32xf32> -> vector<2x32xf32>
    %168 = arith.addf %167, %68 : vector<2x32xf32>
    %169 = arith.mulf %159, %168 : vector<2x32xf32>
    %170 = arith.addf %152, %169 : vector<2x32xf32>
    %171 = math.tanh %170 : vector<2x32xf32>
    %cst_97 = arith.constant 1.000000e+00 : f32
    %172 = vector.broadcast %cst_97 : f32 to vector<2x32xf32>
    %173 = arith.subf %172, %166 : vector<2x32xf32>
    %174 = arith.mulf %173, %171 : vector<2x32xf32>
    %175 = arith.mulf %166, %149 : vector<2x32xf32>
    %176 = arith.addf %174, %175 : vector<2x32xf32>
    %177 = vector.extract_strided_slice %45 {offsets = [8, 0], sizes = [2, 32], strides = [1, 1]} : vector<16x32xf32> to vector<2x32xf32>
    %178 = vector.extract_strided_slice %52 {offsets = [8, 0], sizes = [2, 32], strides = [1, 1]} : vector<16x32xf32> to vector<2x32xf32>
    %179 = vector.extract_strided_slice %59 {offsets = [8, 0], sizes = [2, 32], strides = [1, 1]} : vector<16x32xf32> to vector<2x32xf32>
    %cst_98 = arith.constant dense<0.000000e+00> : vector<2x32xf32>
    %180 = tpu.matmul %176, %61, %cst_98 {dimension_numbers = #tpu.dot_dimension_numbers<[1], [0], [0], [1], [0, 0, 1, 1], [], []>} : vector<2x32xf32>, vector<32x32xf32>, vector<2x32xf32> -> vector<2x32xf32>
    %181 = arith.addf %177, %180 : vector<2x32xf32>
    %182 = arith.negf %181 : vector<2x32xf32>
    %183 = math.exp %182 : vector<2x32xf32>
    %cst_99 = arith.constant 1.000000e+00 : f32
    %184 = vector.broadcast %cst_99 : f32 to vector<2x32xf32>
    %185 = arith.addf %184, %183 : vector<2x32xf32>
    %186 = arith.divf %184, %185 : vector<2x32xf32>
    %cst_100 = arith.constant dense<0.000000e+00> : vector<2x32xf32>
    %187 = tpu.matmul %176, %63, %cst_100 {dimension_numbers = #tpu.dot_dimension_numbers<[1], [0], [0], [1], [0, 0, 1, 1], [], []>} : vector<2x32xf32>, vector<32x32xf32>, vector<2x32xf32> -> vector<2x32xf32>
    %188 = arith.addf %178, %187 : vector<2x32xf32>
    %189 = arith.negf %188 : vector<2x32xf32>
    %190 = math.exp %189 : vector<2x32xf32>
    %cst_101 = arith.constant 1.000000e+00 : f32
    %191 = vector.broadcast %cst_101 : f32 to vector<2x32xf32>
    %192 = arith.addf %191, %190 : vector<2x32xf32>
    %193 = arith.divf %191, %192 : vector<2x32xf32>
    %cst_102 = arith.constant dense<0.000000e+00> : vector<2x32xf32>
    %194 = tpu.matmul %176, %65, %cst_102 {dimension_numbers = #tpu.dot_dimension_numbers<[1], [0], [0], [1], [0, 0, 1, 1], [], []>} : vector<2x32xf32>, vector<32x32xf32>, vector<2x32xf32> -> vector<2x32xf32>
    %195 = arith.addf %194, %68 : vector<2x32xf32>
    %196 = arith.mulf %186, %195 : vector<2x32xf32>
    %197 = arith.addf %179, %196 : vector<2x32xf32>
    %198 = math.tanh %197 : vector<2x32xf32>
    %cst_103 = arith.constant 1.000000e+00 : f32
    %199 = vector.broadcast %cst_103 : f32 to vector<2x32xf32>
    %200 = arith.subf %199, %193 : vector<2x32xf32>
    %201 = arith.mulf %200, %198 : vector<2x32xf32>
    %202 = arith.mulf %193, %176 : vector<2x32xf32>
    %203 = arith.addf %201, %202 : vector<2x32xf32>
    %204 = vector.extract_strided_slice %45 {offsets = [10, 0], sizes = [2, 32], strides = [1, 1]} : vector<16x32xf32> to vector<2x32xf32>
    %205 = vector.extract_strided_slice %52 {offsets = [10, 0], sizes = [2, 32], strides = [1, 1]} : vector<16x32xf32> to vector<2x32xf32>
    %206 = vector.extract_strided_slice %59 {offsets = [10, 0], sizes = [2, 32], strides = [1, 1]} : vector<16x32xf32> to vector<2x32xf32>
    %cst_104 = arith.constant dense<0.000000e+00> : vector<2x32xf32>
    %207 = tpu.matmul %203, %61, %cst_104 {dimension_numbers = #tpu.dot_dimension_numbers<[1], [0], [0], [1], [0, 0, 1, 1], [], []>} : vector<2x32xf32>, vector<32x32xf32>, vector<2x32xf32> -> vector<2x32xf32>
    %208 = arith.addf %204, %207 : vector<2x32xf32>
    %209 = arith.negf %208 : vector<2x32xf32>
    %210 = math.exp %209 : vector<2x32xf32>
    %cst_105 = arith.constant 1.000000e+00 : f32
    %211 = vector.broadcast %cst_105 : f32 to vector<2x32xf32>
    %212 = arith.addf %211, %210 : vector<2x32xf32>
    %213 = arith.divf %211, %212 : vector<2x32xf32>
    %cst_106 = arith.constant dense<0.000000e+00> : vector<2x32xf32>
    %214 = tpu.matmul %203, %63, %cst_106 {dimension_numbers = #tpu.dot_dimension_numbers<[1], [0], [0], [1], [0, 0, 1, 1], [], []>} : vector<2x32xf32>, vector<32x32xf32>, vector<2x32xf32> -> vector<2x32xf32>
    %215 = arith.addf %205, %214 : vector<2x32xf32>
    %216 = arith.negf %215 : vector<2x32xf32>
    %217 = math.exp %216 : vector<2x32xf32>
    %cst_107 = arith.constant 1.000000e+00 : f32
    %218 = vector.broadcast %cst_107 : f32 to vector<2x32xf32>
    %219 = arith.addf %218, %217 : vector<2x32xf32>
    %220 = arith.divf %218, %219 : vector<2x32xf32>
    %cst_108 = arith.constant dense<0.000000e+00> : vector<2x32xf32>
    %221 = tpu.matmul %203, %65, %cst_108 {dimension_numbers = #tpu.dot_dimension_numbers<[1], [0], [0], [1], [0, 0, 1, 1], [], []>} : vector<2x32xf32>, vector<32x32xf32>, vector<2x32xf32> -> vector<2x32xf32>
    %222 = arith.addf %221, %68 : vector<2x32xf32>
    %223 = arith.mulf %213, %222 : vector<2x32xf32>
    %224 = arith.addf %206, %223 : vector<2x32xf32>
    %225 = math.tanh %224 : vector<2x32xf32>
    %cst_109 = arith.constant 1.000000e+00 : f32
    %226 = vector.broadcast %cst_109 : f32 to vector<2x32xf32>
    %227 = arith.subf %226, %220 : vector<2x32xf32>
    %228 = arith.mulf %227, %225 : vector<2x32xf32>
    %229 = arith.mulf %220, %203 : vector<2x32xf32>
    %230 = arith.addf %228, %229 : vector<2x32xf32>
    %231 = vector.extract_strided_slice %45 {offsets = [12, 0], sizes = [2, 32], strides = [1, 1]} : vector<16x32xf32> to vector<2x32xf32>
    %232 = vector.extract_strided_slice %52 {offsets = [12, 0], sizes = [2, 32], strides = [1, 1]} : vector<16x32xf32> to vector<2x32xf32>
    %233 = vector.extract_strided_slice %59 {offsets = [12, 0], sizes = [2, 32], strides = [1, 1]} : vector<16x32xf32> to vector<2x32xf32>
    %cst_110 = arith.constant dense<0.000000e+00> : vector<2x32xf32>
    %234 = tpu.matmul %230, %61, %cst_110 {dimension_numbers = #tpu.dot_dimension_numbers<[1], [0], [0], [1], [0, 0, 1, 1], [], []>} : vector<2x32xf32>, vector<32x32xf32>, vector<2x32xf32> -> vector<2x32xf32>
    %235 = arith.addf %231, %234 : vector<2x32xf32>
    %236 = arith.negf %235 : vector<2x32xf32>
    %237 = math.exp %236 : vector<2x32xf32>
    %cst_111 = arith.constant 1.000000e+00 : f32
    %238 = vector.broadcast %cst_111 : f32 to vector<2x32xf32>
    %239 = arith.addf %238, %237 : vector<2x32xf32>
    %240 = arith.divf %238, %239 : vector<2x32xf32>
    %cst_112 = arith.constant dense<0.000000e+00> : vector<2x32xf32>
    %241 = tpu.matmul %230, %63, %cst_112 {dimension_numbers = #tpu.dot_dimension_numbers<[1], [0], [0], [1], [0, 0, 1, 1], [], []>} : vector<2x32xf32>, vector<32x32xf32>, vector<2x32xf32> -> vector<2x32xf32>
    %242 = arith.addf %232, %241 : vector<2x32xf32>
    %243 = arith.negf %242 : vector<2x32xf32>
    %244 = math.exp %243 : vector<2x32xf32>
    %cst_113 = arith.constant 1.000000e+00 : f32
    %245 = vector.broadcast %cst_113 : f32 to vector<2x32xf32>
    %246 = arith.addf %245, %244 : vector<2x32xf32>
    %247 = arith.divf %245, %246 : vector<2x32xf32>
    %cst_114 = arith.constant dense<0.000000e+00> : vector<2x32xf32>
    %248 = tpu.matmul %230, %65, %cst_114 {dimension_numbers = #tpu.dot_dimension_numbers<[1], [0], [0], [1], [0, 0, 1, 1], [], []>} : vector<2x32xf32>, vector<32x32xf32>, vector<2x32xf32> -> vector<2x32xf32>
    %249 = arith.addf %248, %68 : vector<2x32xf32>
    %250 = arith.mulf %240, %249 : vector<2x32xf32>
    %251 = arith.addf %233, %250 : vector<2x32xf32>
    %252 = math.tanh %251 : vector<2x32xf32>
    %cst_115 = arith.constant 1.000000e+00 : f32
    %253 = vector.broadcast %cst_115 : f32 to vector<2x32xf32>
    %254 = arith.subf %253, %247 : vector<2x32xf32>
    %255 = arith.mulf %254, %252 : vector<2x32xf32>
    %256 = arith.mulf %247, %230 : vector<2x32xf32>
    %257 = arith.addf %255, %256 : vector<2x32xf32>
    %258 = vector.extract_strided_slice %45 {offsets = [14, 0], sizes = [2, 32], strides = [1, 1]} : vector<16x32xf32> to vector<2x32xf32>
    %259 = vector.extract_strided_slice %52 {offsets = [14, 0], sizes = [2, 32], strides = [1, 1]} : vector<16x32xf32> to vector<2x32xf32>
    %260 = vector.extract_strided_slice %59 {offsets = [14, 0], sizes = [2, 32], strides = [1, 1]} : vector<16x32xf32> to vector<2x32xf32>
    %cst_116 = arith.constant dense<0.000000e+00> : vector<2x32xf32>
    %261 = tpu.matmul %257, %61, %cst_116 {dimension_numbers = #tpu.dot_dimension_numbers<[1], [0], [0], [1], [0, 0, 1, 1], [], []>} : vector<2x32xf32>, vector<32x32xf32>, vector<2x32xf32> -> vector<2x32xf32>
    %262 = arith.addf %258, %261 : vector<2x32xf32>
    %263 = arith.negf %262 : vector<2x32xf32>
    %264 = math.exp %263 : vector<2x32xf32>
    %cst_117 = arith.constant 1.000000e+00 : f32
    %265 = vector.broadcast %cst_117 : f32 to vector<2x32xf32>
    %266 = arith.addf %265, %264 : vector<2x32xf32>
    %267 = arith.divf %265, %266 : vector<2x32xf32>
    %cst_118 = arith.constant dense<0.000000e+00> : vector<2x32xf32>
    %268 = tpu.matmul %257, %63, %cst_118 {dimension_numbers = #tpu.dot_dimension_numbers<[1], [0], [0], [1], [0, 0, 1, 1], [], []>} : vector<2x32xf32>, vector<32x32xf32>, vector<2x32xf32> -> vector<2x32xf32>
    %269 = arith.addf %259, %268 : vector<2x32xf32>
    %270 = arith.negf %269 : vector<2x32xf32>
    %271 = math.exp %270 : vector<2x32xf32>
    %cst_119 = arith.constant 1.000000e+00 : f32
    %272 = vector.broadcast %cst_119 : f32 to vector<2x32xf32>
    %273 = arith.addf %272, %271 : vector<2x32xf32>
    %274 = arith.divf %272, %273 : vector<2x32xf32>
    %cst_120 = arith.constant dense<0.000000e+00> : vector<2x32xf32>
    %275 = tpu.matmul %257, %65, %cst_120 {dimension_numbers = #tpu.dot_dimension_numbers<[1], [0], [0], [1], [0, 0, 1, 1], [], []>} : vector<2x32xf32>, vector<32x32xf32>, vector<2x32xf32> -> vector<2x32xf32>
    %276 = arith.addf %275, %68 : vector<2x32xf32>
    %277 = arith.mulf %267, %276 : vector<2x32xf32>
    %278 = arith.addf %260, %277 : vector<2x32xf32>
    %279 = math.tanh %278 : vector<2x32xf32>
    %cst_121 = arith.constant 1.000000e+00 : f32
    %280 = vector.broadcast %cst_121 : f32 to vector<2x32xf32>
    %281 = arith.subf %280, %274 : vector<2x32xf32>
    %282 = arith.mulf %281, %279 : vector<2x32xf32>
    %283 = arith.mulf %274, %257 : vector<2x32xf32>
    %284 = arith.addf %282, %283 : vector<2x32xf32>
    %285 = tpu.concatenate %95, %122, %149, %176, %203, %230, %257, %284 in 0 : vector<2x32xf32>, vector<2x32xf32>, vector<2x32xf32>, vector<2x32xf32>, vector<2x32xf32>, vector<2x32xf32>, vector<2x32xf32>, vector<2x32xf32> -> vector<16x32xf32>
    %c0_122 = arith.constant 0 : index
    %c0_123 = arith.constant 0 : index
    %286 = vector.load %arg10[%c0_122, %c0_123] : memref<32x8xf32, #tpu.memory_space<vmem>>, vector<32x8xf32>
    %cst_124 = arith.constant dense<0.000000e+00> : vector<16x8xf32>
    %287 = tpu.matmul %285, %286, %cst_124 {dimension_numbers = #tpu.dot_dimension_numbers<[1], [0], [0], [1], [0, 0, 1, 1], [], []>} : vector<16x32xf32>, vector<32x8xf32>, vector<16x8xf32> -> vector<16x8xf32>
    %c0_125 = arith.constant 0 : index
    %c0_126 = arith.constant 0 : index
    %288 = vector.load %arg11[%c0_125, %c0_126] : memref<1x8xf32, #tpu.memory_space<vmem>>, vector<1x8xf32>
    %289 = vector.broadcast %288 : vector<1x8xf32> to vector<16x8xf32>
    %290 = arith.addf %287, %289 : vector<16x8xf32>
    %c0_127 = arith.constant 0 : index
    %c0_128 = arith.constant 0 : index
    %291 = vector.load %arg12[%c0_127, %c0_128] : memref<16x8xf32, #tpu.memory_space<vmem>>, vector<16x8xf32>
    tpu.vector_store %arg12[%c0_127, %c0_128], %290 {strides = array<i32>} : memref<16x8xf32, #tpu.memory_space<vmem>>, vector<16x8xf32>,
    return
  }
}

</mosaic_0001>

<llo_original>
// kernel: cnnseq2seq_forward.3
$region0: #{cnnseq2seq_forward.3}
  #allocation0 [shape = 'u32[]', space=smem, size = 0x4, offset = 0x4, fixed_abs, tag = 'smem constant byte address 0x4 - core index']
  #allocation1 [shape = 'u32[144,128]{1,0:T(1,128)}', space=vmem, size = 0x12000, scoped, tag = 'internal scratch']
  %s0 = inlined_call_operand.vmem [shape: f32[256,36], index: 0, kind: input, shape index: {}]
  %s1 = inlined_call_operand.vmem [shape: f32[36,8], index: 1, kind: input, shape index: {}]
  %s2 = inlined_call_operand.vmem [shape: f32[1,8], index: 2, kind: input, shape index: {}]
  %s3 = inlined_call_operand.vmem [shape: f32[256,8], index: 3, kind: output, shape index: {}]
  %s4 = sld [smem:[#allocation0]]
  $region22: #{cnnseq2seq_forward.3} parent=0
    _
  %s6 = ssub.s32 1, %s4
  %s7 = scalar_select 0, %s6, %s4
  // Predicated region
  $region2: #{cnnseq2seq_forward.3} parent=0 // pred_check
    _
  $region3: #{cnnseq2seq_forward.3} parent=0 // pred_check_branch
    %9 = sbr.rel (0) target = $region5
  $region4: #{cnnseq2seq_forward.3} parent=0 // pred_region
    _
  $region5: #{cnnseq2seq_forward.3} parent=0 // pred_fallthru
    _
  // Predicated region
  $region6: #{cnnseq2seq_forward.3} parent=0 // pred_check
    _
  $region7: #{cnnseq2seq_forward.3} parent=0 // pred_check_branch
    %11 = sbr.rel (0) target = $region9
  $region8: #{cnnseq2seq_forward.3} parent=0 // pred_region
    _
  $region9: #{cnnseq2seq_forward.3} parent=0 // pred_fallthru
    _
  // Predicated region
  $region10: #{cnnseq2seq_forward.3} parent=0 // pred_check
    _
  $region11: #{cnnseq2seq_forward.3} parent=0 // pred_check_branch
    %13 = sbr.rel (0) target = $region13
  $region12: #{cnnseq2seq_forward.3} parent=0 // pred_region
    _
  $region13: #{cnnseq2seq_forward.3} parent=0 // pred_fallthru
    _
  %v14 = vld [vmem:[%s0] sm:$0xff]
  %v15 = vld [vmem:[%s0 + $0x8] sm:$0xff]
  %v16 = vld [vmem:[%s0 + $0x10] sm:$0xff]
  %v17 = vld [vmem:[%s0 + $0x18] sm:$0xff]
  %v18 = vld [vmem:[%s0 + $0x20] sm:$0xff]
  %v19 = vld [vmem:[%s0 + $0x28] sm:$0xff]
  %v20 = vld [vmem:[%s0 + $0x30] sm:$0xff]
  %v21 = vld [vmem:[%s0 + $0x38] sm:$0xff]
  %v22 = vld [vmem:[%s0 + $0x40] sm:$0xff]
  %v23 = vld [vmem:[%s0 + $0x48] sm:$0xff]
  %v24 = vld [vmem:[%s0 + $0x50] sm:$0xff]
  %v25 = vld [vmem:[%s0 + $0x58] sm:$0xff]
  %v26 = vld [vmem:[%s0 + $0x60] sm:$0xff]
  %v27 = vld [vmem:[%s0 + $0x68] sm:$0xff]
  %v28 = vld [vmem:[%s0 + $0x70] sm:$0xff]
  %v29 = vld [vmem:[%s0 + $0x78] sm:$0xff]
  %v30 = vld [vmem:[%s0 + $0x80] sm:$0xff]
  %v31 = vld [vmem:[%s0 + $0x88] sm:$0xff]
  %v32 = vld [vmem:[%s0 + $0x90] sm:$0xff]
  %v33 = vld [vmem:[%s0 + $0x98] sm:$0xff]
  %v34 = vld [vmem:[%s0 + $0xa0] sm:$0xff]
  %v35 = vld [vmem:[%s0 + $0xa8] sm:$0xff]
  %v36 = vld [vmem:[%s0 + $0xb0] sm:$0xff]
  %v37 = vld [vmem:[%s0 + $0xb8] sm:$0xff]
  %v38 = vld [vmem:[%s0 + $0xc0] sm:$0xff]
  %v39 = vld [vmem:[%s0 + $0xc8] sm:$0xff]
  %v40 = vld [vmem:[%s0 + $0xd0] sm:$0xff]
  %v41 = vld [vmem:[%s0 + $0xd8] sm:$0xff]
  %v42 = vld [vmem:[%s0 + $0xe0] sm:$0xff]
  %v43 = vld [vmem:[%s0 + $0xe8] sm:$0xff]
  %v44 = vld [vmem:[%s0 + $0xf0] sm:$0xff]
  %v45 = vld [vmem:[%s0 + $0xf8] sm:$0xff]
  %v46 = vld [vmem:[%s1] sm:$0xff]
  %v47 = vld [vmem:[%s1 + $0x8] sm:$0xff]
  %v48 = vld [vmem:[%s1 + $0x10] sm:$0xff]
  %v49 = vld [vmem:[%s1 + $0x18] sm:$0xff]
  %v50 = vld [vmem:[%s1 + $0x20] sm:$0xf]
  %v51 = vld [vmem:[%s2] sm:$0x1]
  %v53 = vlaneseq
  %v54 = vshrl.u32 %v53, 7
  %v55 = vsub.s32 0, %v54
  %v56 = vrot.slane %v51, %v55
  %vm58 = vcmask 293888
  %v60 = vsel %vm58, %v14, 0
  %v63 = vsel %vm58, %v15, 0
  %v66 = vsel %vm58, %v16, 0
  %v69 = vsel %vm58, %v17, 0
  %v72 = vsel %vm58, %v18, 0
  %v75 = vsel %vm58, %v19, 0
  %v78 = vsel %vm58, %v20, 0
  %v81 = vsel %vm58, %v21, 0
  %v84 = vsel %vm58, %v22, 0
  %v87 = vsel %vm58, %v23, 0
  %v90 = vsel %vm58, %v24, 0
  %v93 = vsel %vm58, %v25, 0
  %v96 = vsel %vm58, %v26, 0
  %v99 = vsel %vm58, %v27, 0
  %v102 = vsel %vm58, %v28, 0
  %v105 = vsel %vm58, %v29, 0
  %v108 = vsel %vm58, %v30, 0
  %v111 = vsel %vm58, %v31, 0
  %v114 = vsel %vm58, %v32, 0
  %v117 = vsel %vm58, %v33, 0
  %v120 = vsel %vm58, %v34, 0
  %v123 = vsel %vm58, %v35, 0
  %v126 = vsel %vm58, %v36, 0
  %v129 = vsel %vm58, %v37, 0
  %v132 = vsel %vm58, %v38, 0
  %v135 = vsel %vm58, %v39, 0
  %v138 = vsel %vm58, %v40, 0
  %v141 = vsel %vm58, %v41, 0
  %v144 = vsel %vm58, %v42, 0
  %v147 = vsel %vm58, %v43, 0
  %v150 = vsel %vm58, %v44, 0
  %v153 = vsel %vm58, %v45, 0
  %vm155 = vcmask 1043456
  %v157 = vsel %vm155, %v50, 0
  %159 = vmatprep.subr.mxu0 0.0
  %160 = vmatpush1.msra.mxu0 0.0
  %161 = vmatprep.subr.mxu0 0.0
  %162 = vmatpush1.msra.mxu0 0.0
  %163 = vmatprep.subr.mxu0 0.0
  %164 = vmatpush1.msra.mxu0 0.0
  %165 = vmatprep.subr.mxu0 0.0
  %166 = vmatpush1.msra.mxu0 0.0
  %167 = vmatprep.subr.mxu0 0.0
  %168 = vmatpush1.msra.mxu0 0.0
  %169 = vmatprep.subr.mxu0 0.0
  %170 = vmatpush1.msra.mxu0 0.0
  %171 = vmatprep.subr.mxu0 0.0
  %172 = vmatpush1.msra.mxu0 0.0
  %173 = vmatprep.subr.mxu0 0.0
  %174 = vmatpush1.msra.mxu0 0.0
  %175 = vmatprep.subr.mxu0 0.0
  %176 = vmatpush1.msra.mxu0 0.0
  %177 = vmatprep.subr.mxu0 0.0
  %178 = vmatpush1.msra.mxu0 0.0
  %179 = vmatprep.subr.mxu0 0.0
  %180 = vmatpush1.msra.mxu0 0.0
  %181 = vmatprep.subr.mxu0 0.0
  %182 = vmatpush1.msra.mxu0 %v157
  %183 = vmatprep.subr.mxu0 0.0
  %184 = vmatpush1.msra.mxu0 %v49
  %185 = vmatprep.subr.mxu0 0.0
  %186 = vmatpush1.msra.mxu0 %v48
  %187 = vmatprep.subr.mxu0 0.0
  %188 = vmatpush1.msra.mxu0 %v47
  %189 = vmatprep.subr.mxu0 0.0
  %190 = vmatpush1.msra.mxu0 %v46
  %191 = vmatprep.subr.mxu0 0.0
  %192 = vmatpush2.msra.mxu0 0.0
  %193 = vmatprep.subr.mxu0 0.0
  %194 = vmatpush2.msra.mxu0 0.0
  %195 = vmatprep.subr.mxu0 0.0
  %196 = vmatpush2.msra.mxu0 0.0
  %197 = vmatprep.subr.mxu0 0.0
  %198 = vmatpush2.msra.mxu0 0.0
  %199 = vmatprep.subr.mxu0 0.0
  %200 = vmatpush2.msra.mxu0 0.0
  %201 = vmatprep.subr.mxu0 0.0
  %202 = vmatpush2.msra.mxu0 0.0
  %203 = vmatprep.subr.mxu0 0.0
  %204 = vmatpush2.msra.mxu0 0.0
  %205 = vmatprep.subr.mxu0 0.0
  %206 = vmatpush2.msra.mxu0 0.0
  %207 = vmatprep.subr.mxu0 0.0
  %208 = vmatpush2.msra.mxu0 0.0
  %209 = vmatprep.subr.mxu0 0.0
  %210 = vmatpush2.msra.mxu0 0.0
  %211 = vmatprep.subr.mxu0 0.0
  %212 = vmatpush2.msra.mxu0 0.0
  %213 = vmatprep.subr.mxu0 0.0
  %214 = vmatpush2.msra.mxu0 0.0
  %215 = vmatprep.subr.mxu0 0.0
  %216 = vmatpush2.msra.mxu0 0.0
  %217 = vmatprep.subr.mxu0 0.0
  %218 = vmatpush2.msra.mxu0 0.0
  %219 = vmatprep.subr.mxu0 0.0
  %220 = vmatpush2.msra.mxu0 0.0
  %221 = vmatprep.subr.mxu0 0.0
  %222 = vmatpush2.msra.mxu0 0.0
  %223 = vmatprep.mubr.f32.mxu0 0.0
  %224 = vmatmul.mubr.f32.gmra.mxu0 %v60
  %v225 = vpop.f32.mrf.mxu0
  %v226 = vadd.f32 %v56, %v225
  %v227 = vpop.f32.mrf.mxu0
  %228 = vmatprep.mubr.f32.mxu0 0.0
  %229 = vmatmul.mubr.f32.gmra.mxu0 %v63
  %v230 = vpop.f32.mrf.mxu0
  %v231 = vadd.f32 %v56, %v230
  %v232 = vpop.f32.mrf.mxu0
  %233 = vmatprep.mubr.f32.mxu0 0.0
  %234 = vmatmul.mubr.f32.gmra.mxu0 %v66
  %v235 = vpop.f32.mrf.mxu0
  %v236 = vadd.f32 %v56, %v235
  %v237 = vpop.f32.mrf.mxu0
  %238 = vmatprep.mubr.f32.mxu0 0.0
  %239 = vmatmul.mubr.f32.gmra.mxu0 %v69
  %v240 = vpop.f32.mrf.mxu0
  %v241 = vadd.f32 %v56, %v240
  %v242 = vpop.f32.mrf.mxu0
  %243 = vmatprep.mubr.f32.mxu0 0.0
  %244 = vmatmul.mubr.f32.gmra.mxu0 %v72
  %v245 = vpop.f32.mrf.mxu0
  %v246 = vadd.f32 %v56, %v245
  %v247 = vpop.f32.mrf.mxu0
  %248 = vmatprep.mubr.f32.mxu0 0.0
  %249 = vmatmul.mubr.f32.gmra.mxu0 %v75
  %v250 = vpop.f32.mrf.mxu0
  %v251 = vadd.f32 %v56, %v250
  %v252 = vpop.f32.mrf.mxu0
  %253 = vmatprep.mubr.f32.mxu0 0.0
  %254 = vmatmul.mubr.f32.gmra.mxu0 %v78
  %v255 = vpop.f32.mrf.mxu0
  %v256 = vadd.f32 %v56, %v255
  %v257 = vpop.f32.mrf.mxu0
  %258 = vmatprep.mubr.f32.mxu0 0.0
  %259 = vmatmul.mubr.f32.gmra.mxu0 %v81
  %v260 = vpop.f32.mrf.mxu0
  %v261 = vadd.f32 %v56, %v260
  %v262 = vpop.f32.mrf.mxu0
  %263 = vmatprep.mubr.f32.mxu0 0.0
  %264 = vmatmul.mubr.f32.gmra.mxu0 %v84
  %v265 = vpop.f32.mrf.mxu0
  %v266 = vadd.f32 %v56, %v265
  %v267 = vpop.f32.mrf.mxu0
  %268 = vmatprep.mubr.f32.mxu0 0.0
  %269 = vmatmul.mubr.f32.gmra.mxu0 %v87
  %v270 = vpop.f32.mrf.mxu0
  %v271 = vadd.f32 %v56, %v270
  %v272 = vpop.f32.mrf.mxu0
  %273 = vmatprep.mubr.f32.mxu0 0.0
  %274 = vmatmul.mubr.f32.gmra.mxu0 %v90
  %v275 = vpop.f32.mrf.mxu0
  %v276 = vadd.f32 %v56, %v275
  %v277 = vpop.f32.mrf.mxu0
  %278 = vmatprep.mubr.f32.mxu0 0.0
  %279 = vmatmul.mubr.f32.gmra.mxu0 %v93
  %v280 = vpop.f32.mrf.mxu0
  %v281 = vadd.f32 %v56, %v280
  %v282 = vpop.f32.mrf.mxu0
  %283 = vmatprep.mubr.f32.mxu0 0.0
  %284 = vmatmul.mubr.f32.gmra.mxu0 %v96
  %v285 = vpop.f32.mrf.mxu0
  %v286 = vadd.f32 %v56, %v285
  %v287 = vpop.f32.mrf.mxu0
  %288 = vmatprep.mubr.f32.mxu0 0.0
  %289 = vmatmul.mubr.f32.gmra.mxu0 %v99
  %v290 = vpop.f32.mrf.mxu0
  %v291 = vadd.f32 %v56, %v290
  %v292 = vpop.f32.mrf.mxu0
  %293 = vmatprep.mubr.f32.mxu0 0.0
  %294 = vmatmul.mubr.f32.gmra.mxu0 %v102
  %v295 = vpop.f32.mrf.mxu0
  %v296 = vadd.f32 %v56, %v295
  %v297 = vpop.f32.mrf.mxu0
  %298 = vmatprep.mubr.f32.mxu0 0.0
  %299 = vmatmul.mubr.f32.gmra.mxu0 %v105
  %v300 = vpop.f32.mrf.mxu0
  %v301 = vadd.f32 %v56, %v300
  %v302 = vpop.f32.mrf.mxu0
  %303 = vmatprep.mubr.f32.mxu0 0.0
  %304 = vmatmul.mubr.f32.gmra.mxu0 %v108
  %v305 = vpop.f32.mrf.mxu0
  %v306 = vadd.f32 %v56, %v305
  %v307 = vpop.f32.mrf.mxu0
  %308 = vmatprep.mubr.f32.mxu0 0.0
  %309 = vmatmul.mubr.f32.gmra.mxu0 %v111
  %v310 = vpop.f32.mrf.mxu0
  %v311 = vadd.f32 %v56, %v310
  %v312 = vpop.f32.mrf.mxu0
  %313 = vmatprep.mubr.f32.mxu0 0.0
  %314 = vmatmul.mubr.f32.gmra.mxu0 %v114
  %v315 = vpop.f32.mrf.mxu0
  %v316 = vadd.f32 %v56, %v315
  %v317 = vpop.f32.mrf.mxu0
  %318 = vmatprep.mubr.f32.mxu0 0.0
  %319 = vmatmul.mubr.f32.gmra.mxu0 %v117
  %v320 = vpop.f32.mrf.mxu0
  %v321 = vadd.f32 %v56, %v320
  %v322 = vpop.f32.mrf.mxu0
  %323 = vmatprep.mubr.f32.mxu0 0.0
  %324 = vmatmul.mubr.f32.gmra.mxu0 %v120
  %v325 = vpop.f32.mrf.mxu0
  %v326 = vadd.f32 %v56, %v325
  %v327 = vpop.f32.mrf.mxu0
  %328 = vmatprep.mubr.f32.mxu0 0.0
  %329 = vmatmul.mubr.f32.gmra.mxu0 %v123
  %v330 = vpop.f32.mrf.mxu0
  %v331 = vadd.f32 %v56, %v330
  %v332 = vpop.f32.mrf.mxu0
  %333 = vmatprep.mubr.f32.mxu0 0.0
  %334 = vmatmul.mubr.f32.gmra.mxu0 %v126
  %v335 = vpop.f32.mrf.mxu0
  %v336 = vadd.f32 %v56, %v335
  %v337 = vpop.f32.mrf.mxu0
  %338 = vmatprep.mubr.f32.mxu0 0.0
  %339 = vmatmul.mubr.f32.gmra.mxu0 %v129
  %v340 = vpop.f32.mrf.mxu0
  %v341 = vadd.f32 %v56, %v340
  %v342 = vpop.f32.mrf.mxu0
  %343 = vmatprep.mubr.f32.mxu0 0.0
  %344 = vmatmul.mubr.f32.gmra.mxu0 %v132
  %v345 = vpop.f32.mrf.mxu0
  %v346 = vadd.f32 %v56, %v345
  %v347 = vpop.f32.mrf.mxu0
  %348 = vmatprep.mubr.f32.mxu0 0.0
  %349 = vmatmul.mubr.f32.gmra.mxu0 %v135
  %v350 = vpop.f32.mrf.mxu0
  %v351 = vadd.f32 %v56, %v350
  %v352 = vpop.f32.mrf.mxu0
  %353 = vmatprep.mubr.f32.mxu0 0.0
  %354 = vmatmul.mubr.f32.gmra.mxu0 %v138
  %v355 = vpop.f32.mrf.mxu0
  %v356 = vadd.f32 %v56, %v355
  %v357 = vpop.f32.mrf.mxu0
  %358 = vmatprep.mubr.f32.mxu0 0.0
  %359 = vmatmul.mubr.f32.gmra.mxu0 %v141
  %v360 = vpop.f32.mrf.mxu0
  %v361 = vadd.f32 %v56, %v360
  %v362 = vpop.f32.mrf.mxu0
  %363 = vmatprep.mubr.f32.mxu0 0.0
  %364 = vmatmul.mubr.f32.gmra.mxu0 %v144
  %v365 = vpop.f32.mrf.mxu0
  %v366 = vadd.f32 %v56, %v365
  %v367 = vpop.f32.mrf.mxu0
  %368 = vmatprep.mubr.f32.mxu0 0.0
  %369 = vmatmul.mubr.f32.gmra.mxu0 %v147
  %v370 = vpop.f32.mrf.mxu0
  %v371 = vadd.f32 %v56, %v370
  %v372 = vpop.f32.mrf.mxu0
  %373 = vmatprep.mubr.f32.mxu0 0.0
  %374 = vmatmul.mubr.f32.gmra.mxu0 %v150
  %v375 = vpop.f32.mrf.mxu0
  %v376 = vadd.f32 %v56, %v375
  %v377 = vpop.f32.mrf.mxu0
  %378 = vmatprep.mubr.f32.mxu0 0.0
  %379 = vmatmul.mubr.f32.gmra.mxu0 %v153
  %v380 = vpop.f32.mrf.mxu0
  %v381 = vadd.f32 %v56, %v380
  %v382 = vpop.f32.mrf.mxu0
  %383 = vdwg.mxu0
  %v384 = vmax.f32 %v226, 0.0
  %v385 = vmax.f32 %v231, 0.0
  %v386 = vmax.f32 %v236, 0.0
  %v387 = vmax.f32 %v241, 0.0
  %v388 = vmax.f32 %v246, 0.0
  %v389 = vmax.f32 %v251, 0.0
  %v390 = vmax.f32 %v256, 0.0
  %v391 = vmax.f32 %v261, 0.0
  %v392 = vmax.f32 %v266, 0.0
  %v393 = vmax.f32 %v271, 0.0
  %v394 = vmax.f32 %v276, 0.0
  %v395 = vmax.f32 %v281, 0.0
  %v396 = vmax.f32 %v286, 0.0
  %v397 = vmax.f32 %v291, 0.0
  %v398 = vmax.f32 %v296, 0.0
  %v399 = vmax.f32 %v301, 0.0
  %v400 = vmax.f32 %v306, 0.0
  %v401 = vmax.f32 %v311, 0.0
  %v402 = vmax.f32 %v316, 0.0
  %v403 = vmax.f32 %v321, 0.0
  %v404 = vmax.f32 %v326, 0.0
  %v405 = vmax.f32 %v331, 0.0
  %v406 = vmax.f32 %v336, 0.0
  %v407 = vmax.f32 %v341, 0.0
  %v408 = vmax.f32 %v346, 0.0
  %v409 = vmax.f32 %v351, 0.0
  %v410 = vmax.f32 %v356, 0.0
  %v411 = vmax.f32 %v361, 0.0
  %v412 = vmax.f32 %v366, 0.0
  %v413 = vmax.f32 %v371, 0.0
  %v414 = vmax.f32 %v376, 0.0
  %v415 = vmax.f32 %v381, 0.0
  %vm416 = vcmask 64512
  %417 = vst.msk [vmem:[%s3] sm:$0xff] %vm416, %v384
  %418 = vst.msk [vmem:[%s3 + $0x8] sm:$0xff] %vm416, %v385
  %419 = vst.msk [vmem:[%s3 + $0x10] sm:$0xff] %vm416, %v386
  %420 = vst.msk [vmem:[%s3 + $0x18] sm:$0xff] %vm416, %v387
  %421 = vst.msk [vmem:[%s3 + $0x20] sm:$0xff] %vm416, %v388
  %422 = vst.msk [vmem:[%s3 + $0x28] sm:$0xff] %vm416, %v389
  %423 = vst.msk [vmem:[%s3 + $0x30] sm:$0xff] %vm416, %v390
  %424 = vst.msk [vmem:[%s3 + $0x38] sm:$0xff] %vm416, %v391
  %425 = vst.msk [vmem:[%s3 + $0x40] sm:$0xff] %vm416, %v392
  %426 = vst.msk [vmem:[%s3 + $0x48] sm:$0xff] %vm416, %v393
  %427 = vst.msk [vmem:[%s3 + $0x50] sm:$0xff] %vm416, %v394
  %428 = vst.msk [vmem:[%s3 + $0x58] sm:$0xff] %vm416, %v395
  %429 = vst.msk [vmem:[%s3 + $0x60] sm:$0xff] %vm416, %v396
  %430 = vst.msk [vmem:[%s3 + $0x68] sm:$0xff] %vm416, %v397
  %431 = vst.msk [vmem:[%s3 + $0x70] sm:$0xff] %vm416, %v398
  %432 = vst.msk [vmem:[%s3 + $0x78] sm:$0xff] %vm416, %v399
  %433 = vst.msk [vmem:[%s3 + $0x80] sm:$0xff] %vm416, %v400
  %434 = vst.msk [vmem:[%s3 + $0x88] sm:$0xff] %vm416, %v401
  %435 = vst.msk [vmem:[%s3 + $0x90] sm:$0xff] %vm416, %v402
  %436 = vst.msk [vmem:[%s3 + $0x98] sm:$0xff] %vm416, %v403
  %437 = vst.msk [vmem:[%s3 + $0xa0] sm:$0xff] %vm416, %v404
  %438 = vst.msk [vmem:[%s3 + $0xa8] sm:$0xff] %vm416, %v405
  %439 = vst.msk [vmem:[%s3 + $0xb0] sm:$0xff] %vm416, %v406
  %440 = vst.msk [vmem:[%s3 + $0xb8] sm:$0xff] %vm416, %v407
  %441 = vst.msk [vmem:[%s3 + $0xc0] sm:$0xff] %vm416, %v408
  %442 = vst.msk [vmem:[%s3 + $0xc8] sm:$0xff] %vm416, %v409
  %443 = vst.msk [vmem:[%s3 + $0xd0] sm:$0xff] %vm416, %v410
  %444 = vst.msk [vmem:[%s3 + $0xd8] sm:$0xff] %vm416, %v411
  %445 = vst.msk [vmem:[%s3 + $0xe0] sm:$0xff] %vm416, %v412
  %446 = vst.msk [vmem:[%s3 + $0xe8] sm:$0xff] %vm416, %v413
  %447 = vst.msk [vmem:[%s3 + $0xf0] sm:$0xff] %vm416, %v414
  %448 = vst.msk [vmem:[%s3 + $0xf8] sm:$0xff] %vm416, %v415
  // Predicated region
  $region14: #{cnnseq2seq_forward.3} parent=0 // pred_check
    _
  $region15: #{cnnseq2seq_forward.3} parent=0 // pred_check_branch
    %450 = sbr.rel (0) target = $region17
  $region16: #{cnnseq2seq_forward.3} parent=0 // pred_region
    _
  $region17: #{cnnseq2seq_forward.3} parent=0 // pred_fallthru
    _
  // Predicated region
  $region18: #{cnnseq2seq_forward.3} parent=0 // pred_check
    _
  $region19: #{cnnseq2seq_forward.3} parent=0 // pred_check_branch
    %452 = sbr.rel (0) target = $region21
  $region20: #{cnnseq2seq_forward.3} parent=0 // pred_region
    _
  $region21: #{cnnseq2seq_forward.3} parent=0 // pred_fallthru
    _

// kernel: cnnseq2seq_forward.4
$region0: #{cnnseq2seq_forward.4}
  #allocation0 [shape = 'u32[]', space=smem, size = 0x4, offset = 0x4, fixed_abs, tag = 'smem constant byte address 0x4 - core index']
  #allocation1 [shape = 'u32[144,128]{1,0:T(1,128)}', space=vmem, size = 0x12000, scoped, tag = 'internal scratch']
  %s0 = inlined_call_operand.vmem [shape: f32[4,512], index: 0, kind: input, shape index: {}]
  %s1 = inlined_call_operand.vmem [shape: f32[512,144], index: 1, kind: input, shape index: {}]
  %s2 = inlined_call_operand.vmem [shape: f32[1,144], index: 2, kind: input, shape index: {}]
  %s3 = inlined_call_operand.vmem [shape: f32[4,144], index: 3, kind: output, shape index: {}]
  %s4 = sld [smem:[#allocation0]]
  $region22: #{cnnseq2seq_forward.4} parent=0
    _
  %s6 = ssub.s32 1, %s4
  %s7 = scalar_select 0, %s6, %s4
  // Predicated region
  $region2: #{cnnseq2seq_forward.4} parent=0 // pred_check
    _
  $region3: #{cnnseq2seq_forward.4} parent=0 // pred_check_branch
    %9 = sbr.rel (0) target = $region5
  $region4: #{cnnseq2seq_forward.4} parent=0 // pred_region
    _
  $region5: #{cnnseq2seq_forward.4} parent=0 // pred_fallthru
    _
  // Predicated region
  $region6: #{cnnseq2seq_forward.4} parent=0 // pred_check
    _
  $region7: #{cnnseq2seq_forward.4} parent=0 // pred_check_branch
    %11 = sbr.rel (0) target = $region9
  $region8: #{cnnseq2seq_forward.4} parent=0 // pred_region
    _
  $region9: #{cnnseq2seq_forward.4} parent=0 // pred_fallthru
    _
  // Predicated region
  $region10: #{cnnseq2seq_forward.4} parent=0 // pred_check
    _
  $region11: #{cnnseq2seq_forward.4} parent=0 // pred_check_branch
    %13 = sbr.rel (0) target = $region13
  $region12: #{cnnseq2seq_forward.4} parent=0 // pred_region
    _
  $region13: #{cnnseq2seq_forward.4} parent=0 // pred_fallthru
    _
  %v14 = vld [vmem:[%s0] sm:$0xff]
  %v15 = vld [vmem:[%s0 + $0x8] sm:$0xff]
  %v16 = vld [vmem:[%s1] sm:$0xff]
  %v17 = vld [vmem:[%s1 + $0x8] sm:$0xff]
  %v18 = vld [vmem:[%s1 + $0x10] sm:$0xff]
  %v19 = vld [vmem:[%s1 + $0x18] sm:$0xff]
  %v20 = vld [vmem:[%s1 + $0x20] sm:$0xff]
  %v21 = vld [vmem:[%s1 + $0x28] sm:$0xff]
  %v22 = vld [vmem:[%s1 + $0x30] sm:$0xff]
  %v23 = vld [vmem:[%s1 + $0x38] sm:$0xff]
  %v24 = vld [vmem:[%s1 + $0x40] sm:$0xff]
  %v25 = vld [vmem:[%s1 + $0x48] sm:$0xff]
  %v26 = vld [vmem:[%s1 + $0x50] sm:$0xff]
  %v27 = vld [vmem:[%s1 + $0x58] sm:$0xff]
  %v28 = vld [vmem:[%s1 + $0x60] sm:$0xff]
  %v29 = vld [vmem:[%s1 + $0x68] sm:$0xff]
  %v30 = vld [vmem:[%s1 + $0x70] sm:$0xff]
  %v31 = vld [vmem:[%s1 + $0x78] sm:$0xff]
  %v32 = vld [vmem:[%s1 + $0x80] sm:$0xff]
  %v33 = vld [vmem:[%s1 + $0x88] sm:$0xff]
  %v34 = vld [vmem:[%s1 + $0x90] sm:$0xff]
  %v35 = vld [vmem:[%s1 + $0x98] sm:$0xff]
  %v36 = vld [vmem:[%s1 + $0xa0] sm:$0xff]
  %v37 = vld [vmem:[%s1 + $0xa8] sm:$0xff]
  %v38 = vld [vmem:[%s1 + $0xb0] sm:$0xff]
  %v39 = vld [vmem:[%s1 + $0xb8] sm:$0xff]
  %v40 = vld [vmem:[%s1 + $0xc0] sm:$0xff]
  %v41 = vld [vmem:[%s1 + $0xc8] sm:$0xff]
  %v42 = vld [vmem:[%s1 + $0xd0] sm:$0xff]
  %v43 = vld [vmem:[%s1 + $0xd8] sm:$0xff]
  %v44 = vld [vmem:[%s1 + $0xe0] sm:$0xff]
  %v45 = vld [vmem:[%s1 + $0xe8] sm:$0xff]
  %v46 = vld [vmem:[%s1 + $0xf0] sm:$0xff]
  %v47 = vld [vmem:[%s1 + $0xf8] sm:$0xff]
  %v48 = vld [vmem:[%s1 + $0x100] sm:$0xff]
  %v49 = vld [vmem:[%s1 + $0x108] sm:$0xff]
  %v50 = vld [vmem:[%s1 + $0x110] sm:$0xff]
  %v51 = vld [vmem:[%s1 + $0x118] sm:$0xff]
  %v52 = vld [vmem:[%s1 + $0x120] sm:$0xff]
  %v53 = vld [vmem:[%s1 + $0x128] sm:$0xff]
  %v54 = vld [vmem:[%s1 + $0x130] sm:$0xff]
  %v55 = vld [vmem:[%s1 + $0x138] sm:$0xff]
  %v56 = vld [vmem:[%s1 + $0x140] sm:$0xff]
  %v57 = vld [vmem:[%s1 + $0x148] sm:$0xff]
  %v58 = vld [vmem:[%s1 + $0x150] sm:$0xff]
  %v59 = vld [vmem:[%s1 + $0x158] sm:$0xff]
  %v60 = vld [vmem:[%s1 + $0x160] sm:$0xff]
  %v61 = vld [vmem:[%s1 + $0x168] sm:$0xff]
  %v62 = vld [vmem:[%s1 + $0x170] sm:$0xff]
  %v63 = vld [vmem:[%s1 + $0x178] sm:$0xff]
  %v64 = vld [vmem:[%s1 + $0x180] sm:$0xff]
  %v65 = vld [vmem:[%s1 + $0x188] sm:$0xff]
  %v66 = vld [vmem:[%s1 + $0x190] sm:$0xff]
  %v67 = vld [vmem:[%s1 + $0x198] sm:$0xff]
  %v68 = vld [vmem:[%s1 + $0x1a0] sm:$0xff]
  %v69 = vld [vmem:[%s1 + $0x1a8] sm:$0xff]
  %v70 = vld [vmem:[%s1 + $0x1b0] sm:$0xff]
  %v71 = vld [vmem:[%s1 + $0x1b8] sm:$0xff]
  %v72 = vld [vmem:[%s1 + $0x1c0] sm:$0xff]
  %v73 = vld [vmem:[%s1 + $0x1c8] sm:$0xff]
  %v74 = vld [vmem:[%s1 + $0x1d0] sm:$0xff]
  %v75 = vld [vmem:[%s1 + $0x1d8] sm:$0xff]
  %v76 = vld [vmem:[%s1 + $0x1e0] sm:$0xff]
  %v77 = vld [vmem:[%s1 + $0x1e8] sm:$0xff]
  %v78 = vld [vmem:[%s1 + $0x1f0] sm:$0xff]
  %v79 = vld [vmem:[%s1 + $0x1f8] sm:$0xff]
  %v80 = vld [vmem:[%s1 + $0x200] sm:$0xff]
  %v81 = vld [vmem:[%s1 + $0x208] sm:$0xff]
  %v82 = vld [vmem:[%s1 + $0x210] sm:$0xff]
  %v83 = vld [vmem:[%s1 + $0x218] sm:$0xff]
  %v84 = vld [vmem:[%s1 + $0x220] sm:$0xff]
  %v85 = vld [vmem:[%s1 + $0x228] sm:$0xff]
  %v86 = vld [vmem:[%s1 + $0x230] sm:$0xff]
  %v87 = vld [vmem:[%s1 + $0x238] sm:$0xff]
  %v88 = vld [vmem:[%s1 + $0x240] sm:$0xff]
  %v89 = vld [vmem:[%s1 + $0x248] sm:$0xff]
  %v90 = vld [vmem:[%s1 + $0x250] sm:$0xff]
  %v91 = vld [vmem:[%s1 + $0x258] sm:$0xff]
  %v92 = vld [vmem:[%s1 + $0x260] sm:$0xff]
  %v93 = vld [vmem:[%s1 + $0x268] sm:$0xff]
  %v94 = vld [vmem:[%s1 + $0x270] sm:$0xff]
  %v95 = vld [vmem:[%s1 + $0x278] sm:$0xff]
  %v96 = vld [vmem:[%s1 + $0x280] sm:$0xff]
  %v97 = vld [vmem:[%s1 + $0x288] sm:$0xff]
  %v98 = vld [vmem:[%s1 + $0x290] sm:$0xff]
  %v99 = vld [vmem:[%s1 + $0x298] sm:$0xff]
  %v100 = vld [vmem:[%s1 + $0x2a0] sm:$0xff]
  %v101 = vld [vmem:[%s1 + $0x2a8] sm:$0xff]
  %v102 = vld [vmem:[%s1 + $0x2b0] sm:$0xff]
  %v103 = vld [vmem:[%s1 + $0x2b8] sm:$0xff]
  %v104 = vld [vmem:[%s1 + $0x2c0] sm:$0xff]
  %v105 = vld [vmem:[%s1 + $0x2c8] sm:$0xff]
  %v106 = vld [vmem:[%s1 + $0x2d0] sm:$0xff]
  %v107 = vld [vmem:[%s1 + $0x2d8] sm:$0xff]
  %v108 = vld [vmem:[%s1 + $0x2e0] sm:$0xff]
  %v109 = vld [vmem:[%s1 + $0x2e8] sm:$0xff]
  %v110 = vld [vmem:[%s1 + $0x2f0] sm:$0xff]
  %v111 = vld [vmem:[%s1 + $0x2f8] sm:$0xff]
  %v112 = vld [vmem:[%s1 + $0x300] sm:$0xff]
  %v113 = vld [vmem:[%s1 + $0x308] sm:$0xff]
  %v114 = vld [vmem:[%s1 + $0x310] sm:$0xff]
  %v115 = vld [vmem:[%s1 + $0x318] sm:$0xff]
  %v116 = vld [vmem:[%s1 + $0x320] sm:$0xff]
  %v117 = vld [vmem:[%s1 + $0x328] sm:$0xff]
  %v118 = vld [vmem:[%s1 + $0x330] sm:$0xff]
  %v119 = vld [vmem:[%s1 + $0x338] sm:$0xff]
  %v120 = vld [vmem:[%s1 + $0x340] sm:$0xff]
  %v121 = vld [vmem:[%s1 + $0x348] sm:$0xff]
  %v122 = vld [vmem:[%s1 + $0x350] sm:$0xff]
  %v123 = vld [vmem:[%s1 + $0x358] sm:$0xff]
  %v124 = vld [vmem:[%s1 + $0x360] sm:$0xff]
  %v125 = vld [vmem:[%s1 + $0x368] sm:$0xff]
  %v126 = vld [vmem:[%s1 + $0x370] sm:$0xff]
  %v127 = vld [vmem:[%s1 + $0x378] sm:$0xff]
  %v128 = vld [vmem:[%s1 + $0x380] sm:$0xff]
  %v129 = vld [vmem:[%s1 + $0x388] sm:$0xff]
  %v130 = vld [vmem:[%s1 + $0x390] sm:$0xff]
  %v131 = vld [vmem:[%s1 + $0x398] sm:$0xff]
  %v132 = vld [vmem:[%s1 + $0x3a0] sm:$0xff]
  %v133 = vld [vmem:[%s1 + $0x3a8] sm:$0xff]
  %v134 = vld [vmem:[%s1 + $0x3b0] sm:$0xff]
  %v135 = vld [vmem:[%s1 + $0x3b8] sm:$0xff]
  %v136 = vld [vmem:[%s1 + $0x3c0] sm:$0xff]
  %v137 = vld [vmem:[%s1 + $0x3c8] sm:$0xff]
  %v138 = vld [vmem:[%s1 + $0x3d0] sm:$0xff]
  %v139 = vld [vmem:[%s1 + $0x3d8] sm:$0xff]
  %v140 = vld [vmem:[%s1 + $0x3e0] sm:$0xff]
  %v141 = vld [vmem:[%s1 + $0x3e8] sm:$0xff]
  %v142 = vld [vmem:[%s1 + $0x3f0] sm:$0xff]
  %v143 = vld [vmem:[%s1 + $0x3f8] sm:$0xff]
  %v144 = vld [vmem:[%s2] sm:$0x3]
  %v146 = vlaneseq
  %v147 = vshrl.u32 %v146, 7
  %v148 = vsub.s32 0, %v147
  %v149 = vrot.slane %v144, %v148
  %v150 = vlaneseq
  %v151 = vshrl.u32 %v150, 7
  %v152 = vsub.s32 1, %v151
  %v153 = vrot.slane %v144, %v152
  %v158 = vcombine.high %v14, %v14
  %v159 = vcombine.high %v15, %v15
  %162 = vmatprep.subr.mxu0 %v47
  %163 = vmatpush1.msra.mxu0 %v46
  %164 = vmatprep.subr.mxu0 %v45
  %165 = vmatpush1.msra.mxu0 %v44
  %166 = vmatprep.subr.mxu0 %v43
  %167 = vmatpush1.msra.mxu0 %v42
  %168 = vmatprep.subr.mxu0 %v41
  %169 = vmatpush1.msra.mxu0 %v40
  %170 = vmatprep.subr.mxu0 %v39
  %171 = vmatpush1.msra.mxu0 %v38
  %172 = vmatprep.subr.mxu0 %v37
  %173 = vmatpush1.msra.mxu0 %v36
  %174 = vmatprep.subr.mxu0 %v35
  %175 = vmatpush1.msra.mxu0 %v34
  %176 = vmatprep.subr.mxu0 %v33
  %177 = vmatpush1.msra.mxu0 %v32
  %178 = vmatprep.subr.mxu0 %v31
  %179 = vmatpush1.msra.mxu0 %v30
  %180 = vmatprep.subr.mxu0 %v29
  %181 = vmatpush1.msra.mxu0 %v28
  %182 = vmatprep.subr.mxu0 %v27
  %183 = vmatpush1.msra.mxu0 %v26
  %184 = vmatprep.subr.mxu0 %v25
  %185 = vmatpush1.msra.mxu0 %v24
  %186 = vmatprep.subr.mxu0 %v23
  %187 = vmatpush1.msra.mxu0 %v22
  %188 = vmatprep.subr.mxu0 %v21
  %189 = vmatpush1.msra.mxu0 %v20
  %190 = vmatprep.subr.mxu0 %v19
  %191 = vmatpush1.msra.mxu0 %v18
  %192 = vmatprep.subr.mxu0 %v17
  %193 = vmatpush1.msra.mxu0 %v16
  %194 = vmatprep.subr.mxu0 %v79
  %195 = vmatpush2.msra.mxu0 %v78
  %196 = vmatprep.subr.mxu0 %v77
  %197 = vmatpush2.msra.mxu0 %v76
  %198 = vmatprep.subr.mxu0 %v75
  %199 = vmatpush2.msra.mxu0 %v74
  %200 = vmatprep.subr.mxu0 %v73
  %201 = vmatpush2.msra.mxu0 %v72
  %202 = vmatprep.subr.mxu0 %v71
  %203 = vmatpush2.msra.mxu0 %v70
  %204 = vmatprep.subr.mxu0 %v69
  %205 = vmatpush2.msra.mxu0 %v68
  %206 = vmatprep.subr.mxu0 %v67
  %207 = vmatpush2.msra.mxu0 %v66
  %208 = vmatprep.subr.mxu0 %v65
  %209 = vmatpush2.msra.mxu0 %v64
  %210 = vmatprep.subr.mxu0 %v63
  %211 = vmatpush2.msra.mxu0 %v62
  %212 = vmatprep.subr.mxu0 %v61
  %213 = vmatpush2.msra.mxu0 %v60
  %214 = vmatprep.subr.mxu0 %v59
  %215 = vmatpush2.msra.mxu0 %v58
  %216 = vmatprep.subr.mxu0 %v57
  %217 = vmatpush2.msra.mxu0 %v56
  %218 = vmatprep.subr.mxu0 %v55
  %219 = vmatpush2.msra.mxu0 %v54
  %220 = vmatprep.subr.mxu0 %v53
  %221 = vmatpush2.msra.mxu0 %v52
  %222 = vmatprep.subr.mxu0 %v51
  %223 = vmatpush2.msra.mxu0 %v50
  %224 = vmatprep.subr.mxu0 %v49
  %225 = vmatpush2.msra.mxu0 %v48
  %226 = vmatprep.mubr.f32.mxu0 %v158
  %227 = vmatmul.mubr.f32.gmra.mxu0 %v14
  %v228 = vpop.f32.mrf.mxu0
  %v229 = vadd.f32 %v149, %v228
  %v230 = vpop.f32.mrf.mxu0
  %v231 = vadd.f32 %v153, %v230
  %232 = vdwg.mxu0
  %233 = vmatprep.subr.mxu0 %v111
  %234 = vmatpush1.msra.mxu0 %v110
  %235 = vmatprep.subr.mxu0 %v109
  %236 = vmatpush1.msra.mxu0 %v108
  %237 = vmatprep.subr.mxu0 %v107
  %238 = vmatpush1.msra.mxu0 %v106
  %239 = vmatprep.subr.mxu0 %v105
  %240 = vmatpush1.msra.mxu0 %v104
  %241 = vmatprep.subr.mxu0 %v103
  %242 = vmatpush1.msra.mxu0 %v102
  %243 = vmatprep.subr.mxu0 %v101
  %244 = vmatpush1.msra.mxu0 %v100
  %245 = vmatprep.subr.mxu0 %v99
  %246 = vmatpush1.msra.mxu0 %v98
  %247 = vmatprep.subr.mxu0 %v97
  %248 = vmatpush1.msra.mxu0 %v96
  %249 = vmatprep.subr.mxu0 %v95
  %250 = vmatpush1.msra.mxu0 %v94
  %251 = vmatprep.subr.mxu0 %v93
  %252 = vmatpush1.msra.mxu0 %v92
  %253 = vmatprep.subr.mxu0 %v91
  %254 = vmatpush1.msra.mxu0 %v90
  %255 = vmatprep.subr.mxu0 %v89
  %256 = vmatpush1.msra.mxu0 %v88
  %257 = vmatprep.subr.mxu0 %v87
  %258 = vmatpush1.msra.mxu0 %v86
  %259 = vmatprep.subr.mxu0 %v85
  %260 = vmatpush1.msra.mxu0 %v84
  %261 = vmatprep.subr.mxu0 %v83
  %262 = vmatpush1.msra.mxu0 %v82
  %263 = vmatprep.subr.mxu0 %v81
  %264 = vmatpush1.msra.mxu0 %v80
  %265 = vmatprep.subr.mxu0 %v143
  %266 = vmatpush2.msra.mxu0 %v142
  %267 = vmatprep.subr.mxu0 %v141
  %268 = vmatpush2.msra.mxu0 %v140
  %269 = vmatprep.subr.mxu0 %v139
  %270 = vmatpush2.msra.mxu0 %v138
  %271 = vmatprep.subr.mxu0 %v137
  %272 = vmatpush2.msra.mxu0 %v136
  %273 = vmatprep.subr.mxu0 %v135
  %274 = vmatpush2.msra.mxu0 %v134
  %275 = vmatprep.subr.mxu0 %v133
  %276 = vmatpush2.msra.mxu0 %v132
  %277 = vmatprep.subr.mxu0 %v131
  %278 = vmatpush2.msra.mxu0 %v130
  %279 = vmatprep.subr.mxu0 %v129
  %280 = vmatpush2.msra.mxu0 %v128
  %281 = vmatprep.subr.mxu0 %v127
  %282 = vmatpush2.msra.mxu0 %v126
  %283 = vmatprep.subr.mxu0 %v125
  %284 = vmatpush2.msra.mxu0 %v124
  %285 = vmatprep.subr.mxu0 %v123
  %286 = vmatpush2.msra.mxu0 %v122
  %287 = vmatprep.subr.mxu0 %v121
  %288 = vmatpush2.msra.mxu0 %v120
  %289 = vmatprep.subr.mxu0 %v119
  %290 = vmatpush2.msra.mxu0 %v118
  %291 = vmatprep.subr.mxu0 %v117
  %292 = vmatpush2.msra.mxu0 %v116
  %293 = vmatprep.subr.mxu0 %v115
  %294 = vmatpush2.msra.mxu0 %v114
  %295 = vmatprep.subr.mxu0 %v113
  %296 = vmatpush2.msra.mxu0 %v112
  %297 = vmatprep.mubr.f32.mxu0 %v159
  %298 = vmatmul.mubr.f32.gmra.mxu0 %v15
  %v299 = vpop.f32.mrf.mxu0
  %v300 = vadd.f32 %v229, %v299
  %v301 = vpop.f32.mrf.mxu0
  %v302 = vadd.f32 %v231, %v301
  %303 = vdwg.mxu0
  %v306 = vcombine.low %v300, %v302
  %vm308 = vcmask 1043456
  %vm309 = vcmask 130052
  %vm310 = vmor %vm309, %vm308
  %311 = vst.msk [vmem:[%s3] sm:$0xff] %vm310, %v306
  // Predicated region
  $region14: #{cnnseq2seq_forward.4} parent=0 // pred_check
    _
  $region15: #{cnnseq2seq_forward.4} parent=0 // pred_check_branch
    %313 = sbr.rel (0) target = $region17
  $region16: #{cnnseq2seq_forward.4} parent=0 // pred_region
    _
  $region17: #{cnnseq2seq_forward.4} parent=0 // pred_fallthru
    _
  // Predicated region
  $region18: #{cnnseq2seq_forward.4} parent=0 // pred_check
    _
  $region19: #{cnnseq2seq_forward.4} parent=0 // pred_check_branch
    %315 = sbr.rel (0) target = $region21
  $region20: #{cnnseq2seq_forward.4} parent=0 // pred_region
    _
  $region21: #{cnnseq2seq_forward.4} parent=0 // pred_fallthru
    _

// kernel: cnnseq2seq_forward.5
$region0: #{cnnseq2seq_forward.5}
  #allocation0 [shape = 'u32[]', space=smem, size = 0x4, offset = 0x4, fixed_abs, tag = 'smem constant byte address 0x4 - core index']
  #allocation1 [shape = 'u32[144,128]{1,0:T(1,128)}', space=vmem, size = 0x12000, scoped, tag = 'internal scratch']
  #allocation2 [shape = 'f32[288,32]{1,0:T(8,128)}', space=vmem, size = 0x24000, scoped, tag = 'scratch operand']
  #allocation3 [shape = 'f32[288,32]{1,0:T(8,128)}', space=vmem, size = 0x24000, scoped, tag = 'scratch operand']
  #allocation4 [shape = 'f32[288,32]{1,0:T(8,128)}', space=vmem, size = 0x24000, scoped, tag = 'scratch operand']
  %s0 = inlined_call_operand.vmem [shape: f32[288,2], index: 0, kind: input, shape index: {}]
  %s1 = inlined_call_operand.vmem [shape: f32[16,8], index: 1, kind: input, shape index: {}]
  %s2 = inlined_call_operand.vmem [shape: f32[3,2,32], index: 2, kind: input, shape index: {}]
  %s3 = inlined_call_operand.vmem [shape: f32[3,32,32], index: 3, kind: input, shape index: {}]
  %s4 = inlined_call_operand.vmem [shape: f32[3,1,32], index: 4, kind: input, shape index: {}]
  %s5 = inlined_call_operand.vmem [shape: f32[1,32], index: 5, kind: input, shape index: {}]
  %s6 = inlined_call_operand.vmem [shape: f32[3,8,32], index: 6, kind: input, shape index: {}]
  %s7 = inlined_call_operand.vmem [shape: f32[3,32,32], index: 7, kind: input, shape index: {}]
  %s8 = inlined_call_operand.vmem [shape: f32[3,1,32], index: 8, kind: input, shape index: {}]
  %s9 = inlined_call_operand.vmem [shape: f32[1,32], index: 9, kind: input, shape index: {}]
  %s10 = inlined_call_operand.vmem [shape: f32[32,8], index: 10, kind: input, shape index: {}]
  %s11 = inlined_call_operand.vmem [shape: f32[1,8], index: 11, kind: input, shape index: {}]
  %s12 = inlined_call_operand.vmem [shape: f32[16,8], index: 12, kind: output, shape index: {0}]
  %s13 = inlined_call_operand.hbm [shape: f32[2,32], index: 13, kind: output, shape index: {1}]
  %14 = xla_tuple %s12, %s13
  %s15 = sld [smem:[#allocation0]]
  $region73: #{cnnseq2seq_forward.5} parent=0
    _
  %s17 = ssub.s32 1, %s15
  %s18 = scalar_select 0, %s17, %s15
  $region1: #{cnnseq2seq_forward.5} parent=0
    #allocation5 [shape = 'u8[1024]{0}', space=vmem, size = 0x400, scoped, tag = 'output window, operand 1, single buffered']
    #allocation6 [shape = 's32[1]{0}', space=sflag, size = 0x4, scoped, tag = 'scoped memory for cnnseq2seq_forward.5']
    %19 = vsyncpa [#allocation6], 0
    // Predicated region
    $region2: #{cnnseq2seq_forward.5} parent=1 // pred_check
      _
    $region3: #{cnnseq2seq_forward.5} parent=1 // pred_check_branch
      %21 = sbr.rel (0) target = $region5
    $region4: #{cnnseq2seq_forward.5} parent=1 // pred_region
      _
    $region5: #{cnnseq2seq_forward.5} parent=1 // pred_fallthru
      _
    // Predicated region
    $region6: #{cnnseq2seq_forward.5} parent=1 // pred_check
      _
    $region7: #{cnnseq2seq_forward.5} parent=1 // pred_check_branch
      %23 = sbr.rel (0) target = $region9
    $region8: #{cnnseq2seq_forward.5} parent=1 // pred_region
      _
    $region9: #{cnnseq2seq_forward.5} parent=1 // pred_fallthru
      _
    // Predicated region
    $region10: #{cnnseq2seq_forward.5} parent=1 // pred_check
      _
    $region11: #{cnnseq2seq_forward.5} parent=1 // pred_check_branch
      %25 = sbr.rel (0) target = $region13
    $region12: #{cnnseq2seq_forward.5} parent=1 // pred_region
      _
    $region13: #{cnnseq2seq_forward.5} parent=1 // pred_fallthru
      _
    // Predicated region
    $region14: #{cnnseq2seq_forward.5} parent=1 // pred_check
      _
    $region15: #{cnnseq2seq_forward.5} parent=1 // pred_check_branch
      %27 = sbr.rel (0) target = $region17
    $region16: #{cnnseq2seq_forward.5} parent=1 // pred_region
      _
    $region17: #{cnnseq2seq_forward.5} parent=1 // pred_fallthru
      _
    // Predicated region
    $region18: #{cnnseq2seq_forward.5} parent=1 // pred_check
      _
    $region19: #{cnnseq2seq_forward.5} parent=1 // pred_check_branch
      %29 = sbr.rel (0) target = $region21
    $region20: #{cnnseq2seq_forward.5} parent=1 // pred_region
      _
    $region21: #{cnnseq2seq_forward.5} parent=1 // pred_fallthru
      _
    // Predicated region
    $region22: #{cnnseq2seq_forward.5} parent=1 // pred_check
      _
    $region23: #{cnnseq2seq_forward.5} parent=1 // pred_check_branch
      %31 = sbr.rel (0) target = $region25
    $region24: #{cnnseq2seq_forward.5} parent=1 // pred_region
      _
    $region25: #{cnnseq2seq_forward.5} parent=1 // pred_fallthru
      _
    // Predicated region
    $region26: #{cnnseq2seq_forward.5} parent=1 // pred_check
      _
    $region27: #{cnnseq2seq_forward.5} parent=1 // pred_check_branch
      %33 = sbr.rel (0) target = $region29
    $region28: #{cnnseq2seq_forward.5} parent=1 // pred_region
      _
    $region29: #{cnnseq2seq_forward.5} parent=1 // pred_fallthru
      _
    // Predicated region
    $region30: #{cnnseq2seq_forward.5} parent=1 // pred_check
      _
    $region31: #{cnnseq2seq_forward.5} parent=1 // pred_check_branch
      %35 = sbr.rel (0) target = $region33
    $region32: #{cnnseq2seq_forward.5} parent=1 // pred_region
      _
    $region33: #{cnnseq2seq_forward.5} parent=1 // pred_fallthru
      _
    // Predicated region
    $region34: #{cnnseq2seq_forward.5} parent=1 // pred_check
      _
    $region35: #{cnnseq2seq_forward.5} parent=1 // pred_check_branch
      %37 = sbr.rel (0) target = $region37
    $region36: #{cnnseq2seq_forward.5} parent=1 // pred_region
      _
    $region37: #{cnnseq2seq_forward.5} parent=1 // pred_fallthru
      _
    // Predicated region
    $region38: #{cnnseq2seq_forward.5} parent=1 // pred_check
      _
    $region39: #{cnnseq2seq_forward.5} parent=1 // pred_check_branch
      %39 = sbr.rel (0) target = $region41
    $region40: #{cnnseq2seq_forward.5} parent=1 // pred_region
      _
    $region41: #{cnnseq2seq_forward.5} parent=1 // pred_fallthru
      _
    // Predicated region
    $region42: #{cnnseq2seq_forward.5} parent=1 // pred_check
      _
    $region43: #{cnnseq2seq_forward.5} parent=1 // pred_check_branch
      %41 = sbr.rel (0) target = $region45
    $region44: #{cnnseq2seq_forward.5} parent=1 // pred_region
      _
    $region45: #{cnnseq2seq_forward.5} parent=1 // pred_fallthru
      _
    // Predicated region
    $region46: #{cnnseq2seq_forward.5} parent=1 // pred_check
      _
    $region47: #{cnnseq2seq_forward.5} parent=1 // pred_check_branch
      %43 = sbr.rel (0) target = $region49
    $region48: #{cnnseq2seq_forward.5} parent=1 // pred_region
      _
    $region49: #{cnnseq2seq_forward.5} parent=1 // pred_fallthru
      _
    %v44 = vld [vmem:[%s0] sm:$0xff]
    %v45 = vld [vmem:[%s0 + $0x8] sm:$0xff]
    %v46 = vld [vmem:[%s0 + $0x10] sm:$0xff]
    %v47 = vld [vmem:[%s0 + $0x18] sm:$0xff]
    %v48 = vld [vmem:[%s0 + $0x20] sm:$0xff]
    %v49 = vld [vmem:[%s0 + $0x28] sm:$0xff]
    %v50 = vld [vmem:[%s0 + $0x30] sm:$0xff]
    %v51 = vld [vmem:[%s0 + $0x38] sm:$0xff]
    %v52 = vld [vmem:[%s0 + $0x40] sm:$0xff]
    %v53 = vld [vmem:[%s0 + $0x48] sm:$0xff]
    %v54 = vld [vmem:[%s0 + $0x50] sm:$0xff]
    %v55 = vld [vmem:[%s0 + $0x58] sm:$0xff]
    %v56 = vld [vmem:[%s0 + $0x60] sm:$0xff]
    %v57 = vld [vmem:[%s0 + $0x68] sm:$0xff]
    %v58 = vld [vmem:[%s0 + $0x70] sm:$0xff]
    %v59 = vld [vmem:[%s0 + $0x78] sm:$0xff]
    %v60 = vld [vmem:[%s0 + $0x80] sm:$0xff]
    %v61 = vld [vmem:[%s0 + $0x88] sm:$0xff]
    %v62 = vld [vmem:[%s0 + $0x90] sm:$0xff]
    %v63 = vld [vmem:[%s0 + $0x98] sm:$0xff]
    %v64 = vld [vmem:[%s0 + $0xa0] sm:$0xff]
    %v65 = vld [vmem:[%s0 + $0xa8] sm:$0xff]
    %v66 = vld [vmem:[%s0 + $0xb0] sm:$0xff]
    %v67 = vld [vmem:[%s0 + $0xb8] sm:$0xff]
    %v68 = vld [vmem:[%s0 + $0xc0] sm:$0xff]
    %v69 = vld [vmem:[%s0 + $0xc8] sm:$0xff]
    %v70 = vld [vmem:[%s0 + $0xd0] sm:$0xff]
    %v71 = vld [vmem:[%s0 + $0xd8] sm:$0xff]
    %v72 = vld [vmem:[%s0 + $0xe0] sm:$0xff]
    %v73 = vld [vmem:[%s0 + $0xe8] sm:$0xff]
    %v74 = vld [vmem:[%s0 + $0xf0] sm:$0xff]
    %v75 = vld [vmem:[%s0 + $0xf8] sm:$0xff]
    %v76 = vld [vmem:[%s0 + $0x100] sm:$0xff]
    %v77 = vld [vmem:[%s0 + $0x108] sm:$0xff]
    %v78 = vld [vmem:[%s0 + $0x110] sm:$0xff]
    %v79 = vld [vmem:[%s0 + $0x118] sm:$0xff]
    %v80 = vld [vmem:[%s2] sm:$0x3]
    %v81 = vld [vmem:[%s4] sm:$0x1]
    %v83 = vlaneseq
    %v84 = vshrl.u32 %v83, 7
    %v85 = vsub.s32 0, %v84
    %v86 = vrot.slane %v81, %v85
    %vm88 = vcmask 15360
    %v90 = vsel %vm88, %v44, 0
    %v93 = vsel %vm88, %v45, 0
    %v96 = vsel %vm88, %v46, 0
    %v99 = vsel %vm88, %v47, 0
    %v102 = vsel %vm88, %v48, 0
    %v105 = vsel %vm88, %v49, 0
    %v108 = vsel %vm88, %v50, 0
    %v111 = vsel %vm88, %v51, 0
    %v114 = vsel %vm88, %v52, 0
    %v117 = vsel %vm88, %v53, 0
    %v120 = vsel %vm88, %v54, 0
    %v123 = vsel %vm88, %v55, 0
    %v126 = vsel %vm88, %v56, 0
    %v129 = vsel %vm88, %v57, 0
    %v132 = vsel %vm88, %v58, 0
    %v135 = vsel %vm88, %v59, 0
    %v138 = vsel %vm88, %v60, 0
    %v141 = vsel %vm88, %v61, 0
    %v144 = vsel %vm88, %v62, 0
    %v147 = vsel %vm88, %v63, 0
    %v150 = vsel %vm88, %v64, 0
    %v153 = vsel %vm88, %v65, 0
    %v156 = vsel %vm88, %v66, 0
    %v159 = vsel %vm88, %v67, 0
    %v162 = vsel %vm88, %v68, 0
    %v165 = vsel %vm88, %v69, 0
    %v168 = vsel %vm88, %v70, 0
    %v171 = vsel %vm88, %v71, 0
    %v174 = vsel %vm88, %v72, 0
    %v177 = vsel %vm88, %v73, 0
    %v180 = vsel %vm88, %v74, 0
    %v183 = vsel %vm88, %v75, 0
    %v186 = vsel %vm88, %v76, 0
    %v189 = vsel %vm88, %v77, 0
    %v192 = vsel %vm88, %v78, 0
    %v195 = vsel %vm88, %v79, 0
    %vm197 = vcmask 1041408
    %v199 = vsel %vm197, %v80, 0
    %201 = vmatprep.subr.mxu0 0.0
    %202 = vmatpush1.msra.mxu0 0.0
    %203 = vmatprep.subr.mxu0 0.0
    %204 = vmatpush1.msra.mxu0 0.0
    %205 = vmatprep.subr.mxu0 0.0
    %206 = vmatpush1.msra.mxu0 0.0
    %207 = vmatprep.subr.mxu0 0.0
    %208 = vmatpush1.msra.mxu0 0.0
    %209 = vmatprep.subr.mxu0 0.0
    %210 = vmatpush1.msra.mxu0 0.0
    %211 = vmatprep.subr.mxu0 0.0
    %212 = vmatpush1.msra.mxu0 0.0
    %213 = vmatprep.subr.mxu0 0.0
    %214 = vmatpush1.msra.mxu0 0.0
    %215 = vmatprep.subr.mxu0 0.0
    %216 = vmatpush1.msra.mxu0 0.0
    %217 = vmatprep.subr.mxu0 0.0
    %218 = vmatpush1.msra.mxu0 0.0
    %219 = vmatprep.subr.mxu0 0.0
    %220 = vmatpush1.msra.mxu0 0.0
    %221 = vmatprep.subr.mxu0 0.0
    %222 = vmatpush1.msra.mxu0 0.0
    %223 = vmatprep.subr.mxu0 0.0
    %224 = vmatpush1.msra.mxu0 0.0
    %225 = vmatprep.subr.mxu0 0.0
    %226 = vmatpush1.msra.mxu0 0.0
    %227 = vmatprep.subr.mxu0 0.0
    %228 = vmatpush1.msra.mxu0 0.0
    %229 = vmatprep.subr.mxu0 0.0
    %230 = vmatpush1.msra.mxu0 0.0
    %231 = vmatprep.subr.mxu0 0.0
    %232 = vmatpush1.msra.mxu0 %v199
    %233 = vmatprep.subr.mxu0 0.0
    %234 = vmatpush2.msra.mxu0 0.0
    %235 = vmatprep.subr.mxu0 0.0
    %236 = vmatpush2.msra.mxu0 0.0
    %237 = vmatprep.subr.mxu0 0.0
    %238 = vmatpush2.msra.mxu0 0.0
    %239 = vmatprep.subr.mxu0 0.0
    %240 = vmatpush2.msra.mxu0 0.0
    %241 = vmatprep.subr.mxu0 0.0
    %242 = vmatpush2.msra.mxu0 0.0
    %243 = vmatprep.subr.mxu0 0.0
    %244 = vmatpush2.msra.mxu0 0.0
    %245 = vmatprep.subr.mxu0 0.0
    %246 = vmatpush2.msra.mxu0 0.0
    %247 = vmatprep.subr.mxu0 0.0
    %248 = vmatpush2.msra.mxu0 0.0
    %249 = vmatprep.subr.mxu0 0.0
    %250 = vmatpush2.msra.mxu0 0.0
    %251 = vmatprep.subr.mxu0 0.0
    %252 = vmatpush2.msra.mxu0 0.0
    %253 = vmatprep.subr.mxu0 0.0
    %254 = vmatpush2.msra.mxu0 0.0
    %255 = vmatprep.subr.mxu0 0.0
    %256 = vmatpush2.msra.mxu0 0.0
    %257 = vmatprep.subr.mxu0 0.0
    %258 = vmatpush2.msra.mxu0 0.0
    %259 = vmatprep.subr.mxu0 0.0
    %260 = vmatpush2.msra.mxu0 0.0
    %261 = vmatprep.subr.mxu0 0.0
    %262 = vmatpush2.msra.mxu0 0.0
    %263 = vmatprep.subr.mxu0 0.0
    %264 = vmatpush2.msra.mxu0 0.0
    %265 = vmatprep.mubr.f32.mxu0 0.0
    %266 = vmatmul.mubr.f32.gmra.mxu0 %v90
    %v267 = vpop.f32.mrf.mxu0
    %v268 = vadd.f32 %v86, %v267
    %v269 = vpop.f32.mrf.mxu0
    %270 = vmatprep.mubr.f32.mxu0 0.0
    %271 = vmatmul.mubr.f32.gmra.mxu0 %v93
    %v272 = vpop.f32.mrf.mxu0
    %v273 = vadd.f32 %v86, %v272
    %v274 = vpop.f32.mrf.mxu0
    %275 = vmatprep.mubr.f32.mxu0 0.0
    %276 = vmatmul.mubr.f32.gmra.mxu0 %v96
    %v277 = vpop.f32.mrf.mxu0
    %v278 = vadd.f32 %v86, %v277
    %v279 = vpop.f32.mrf.mxu0
    %280 = vmatprep.mubr.f32.mxu0 0.0
    %281 = vmatmul.mubr.f32.gmra.mxu0 %v99
    %v282 = vpop.f32.mrf.mxu0
    %v283 = vadd.f32 %v86, %v282
    %v284 = vpop.f32.mrf.mxu0
    %285 = vmatprep.mubr.f32.mxu0 0.0
    %286 = vmatmul.mubr.f32.gmra.mxu0 %v102
    %v287 = vpop.f32.mrf.mxu0
    %v288 = vadd.f32 %v86, %v287
    %v289 = vpop.f32.mrf.mxu0
    %290 = vmatprep.mubr.f32.mxu0 0.0
    %291 = vmatmul.mubr.f32.gmra.mxu0 %v105
    %v292 = vpop.f32.mrf.mxu0
    %v293 = vadd.f32 %v86, %v292
    %v294 = vpop.f32.mrf.mxu0
    %295 = vmatprep.mubr.f32.mxu0 0.0
    %296 = vmatmul.mubr.f32.gmra.mxu0 %v108
    %v297 = vpop.f32.mrf.mxu0
    %v298 = vadd.f32 %v86, %v297
    %v299 = vpop.f32.mrf.mxu0
    %300 = vmatprep.mubr.f32.mxu0 0.0
    %301 = vmatmul.mubr.f32.gmra.mxu0 %v111
    %v302 = vpop.f32.mrf.mxu0
    %v303 = vadd.f32 %v86, %v302
    %v304 = vpop.f32.mrf.mxu0
    %305 = vmatprep.mubr.f32.mxu0 0.0
    %306 = vmatmul.mubr.f32.gmra.mxu0 %v114
    %v307 = vpop.f32.mrf.mxu0
    %v308 = vadd.f32 %v86, %v307
    %v309 = vpop.f32.mrf.mxu0
    %310 = vmatprep.mubr.f32.mxu0 0.0
    %311 = vmatmul.mubr.f32.gmra.mxu0 %v117
    %v312 = vpop.f32.mrf.mxu0
    %v313 = vadd.f32 %v86, %v312
    %v314 = vpop.f32.mrf.mxu0
    %315 = vmatprep.mubr.f32.mxu0 0.0
    %316 = vmatmul.mubr.f32.gmra.mxu0 %v120
    %v317 = vpop.f32.mrf.mxu0
    %v318 = vadd.f32 %v86, %v317
    %v319 = vpop.f32.mrf.mxu0
    %320 = vmatprep.mubr.f32.mxu0 0.0
    %321 = vmatmul.mubr.f32.gmra.mxu0 %v123
    %v322 = vpop.f32.mrf.mxu0
    %v323 = vadd.f32 %v86, %v322
    %v324 = vpop.f32.mrf.mxu0
    %325 = vmatprep.mubr.f32.mxu0 0.0
    %326 = vmatmul.mubr.f32.gmra.mxu0 %v126
    %v327 = vpop.f32.mrf.mxu0
    %v328 = vadd.f32 %v86, %v327
    %v329 = vpop.f32.mrf.mxu0
    %330 = vmatprep.mubr.f32.mxu0 0.0
    %331 = vmatmul.mubr.f32.gmra.mxu0 %v129
    %v332 = vpop.f32.mrf.mxu0
    %v333 = vadd.f32 %v86, %v332
    %v334 = vpop.f32.mrf.mxu0
    %335 = vmatprep.mubr.f32.mxu0 0.0
    %336 = vmatmul.mubr.f32.gmra.mxu0 %v132
    %v337 = vpop.f32.mrf.mxu0
    %v338 = vadd.f32 %v86, %v337
    %v339 = vpop.f32.mrf.mxu0
    %340 = vmatprep.mubr.f32.mxu0 0.0
    %341 = vmatmul.mubr.f32.gmra.mxu0 %v135
    %v342 = vpop.f32.mrf.mxu0
    %v343 = vadd.f32 %v86, %v342
    %v344 = vpop.f32.mrf.mxu0
    %345 = vmatprep.mubr.f32.mxu0 0.0
    %346 = vmatmul.mubr.f32.gmra.mxu0 %v138
    %v347 = vpop.f32.mrf.mxu0
    %v348 = vadd.f32 %v86, %v347
    %v349 = vpop.f32.mrf.mxu0
    %350 = vmatprep.mubr.f32.mxu0 0.0
    %351 = vmatmul.mubr.f32.gmra.mxu0 %v141
    %v352 = vpop.f32.mrf.mxu0
    %v353 = vadd.f32 %v86, %v352
    %v354 = vpop.f32.mrf.mxu0
    %355 = vmatprep.mubr.f32.mxu0 0.0
    %356 = vmatmul.mubr.f32.gmra.mxu0 %v144
    %v357 = vpop.f32.mrf.mxu0
    %v358 = vadd.f32 %v86, %v357
    %v359 = vpop.f32.mrf.mxu0
    %360 = vmatprep.mubr.f32.mxu0 0.0
    %361 = vmatmul.mubr.f32.gmra.mxu0 %v147
    %v362 = vpop.f32.mrf.mxu0
    %v363 = vadd.f32 %v86, %v362
    %v364 = vpop.f32.mrf.mxu0
    %365 = vmatprep.mubr.f32.mxu0 0.0
    %366 = vmatmul.mubr.f32.gmra.mxu0 %v150
    %v367 = vpop.f32.mrf.mxu0
    %v368 = vadd.f32 %v86, %v367
    %v369 = vpop.f32.mrf.mxu0
    %370 = vmatprep.mubr.f32.mxu0 0.0
    %371 = vmatmul.mubr.f32.gmra.mxu0 %v153
    %v372 = vpop.f32.mrf.mxu0
    %v373 = vadd.f32 %v86, %v372
    %v374 = vpop.f32.mrf.mxu0
    %375 = vmatprep.mubr.f32.mxu0 0.0
    %376 = vmatmul.mubr.f32.gmra.mxu0 %v156
    %v377 = vpop.f32.mrf.mxu0
    %v378 = vadd.f32 %v86, %v377
    %v379 = vpop.f32.mrf.mxu0
    %380 = vmatprep.mubr.f32.mxu0 0.0
    %381 = vmatmul.mubr.f32.gmra.mxu0 %v159
    %v382 = vpop.f32.mrf.mxu0
    %v383 = vadd.f32 %v86, %v382
    %v384 = vpop.f32.mrf.mxu0
    %385 = vmatprep.mubr.f32.mxu0 0.0
    %386 = vmatmul.mubr.f32.gmra.mxu0 %v162
    %v387 = vpop.f32.mrf.mxu0
    %v388 = vadd.f32 %v86, %v387
    %v389 = vpop.f32.mrf.mxu0
    %390 = vmatprep.mubr.f32.mxu0 0.0
    %391 = vmatmul.mubr.f32.gmra.mxu0 %v165
    %v392 = vpop.f32.mrf.mxu0
    %v393 = vadd.f32 %v86, %v392
    %v394 = vpop.f32.mrf.mxu0
    %395 = vmatprep.mubr.f32.mxu0 0.0
    %396 = vmatmul.mubr.f32.gmra.mxu0 %v168
    %v397 = vpop.f32.mrf.mxu0
    %v398 = vadd.f32 %v86, %v397
    %v399 = vpop.f32.mrf.mxu0
    %400 = vmatprep.mubr.f32.mxu0 0.0
    %401 = vmatmul.mubr.f32.gmra.mxu0 %v171
    %v402 = vpop.f32.mrf.mxu0
    %v403 = vadd.f32 %v86, %v402
    %v404 = vpop.f32.mrf.mxu0
    %405 = vmatprep.mubr.f32.mxu0 0.0
    %406 = vmatmul.mubr.f32.gmra.mxu0 %v174
    %v407 = vpop.f32.mrf.mxu0
    %v408 = vadd.f32 %v86, %v407
    %v409 = vpop.f32.mrf.mxu0
    %410 = vmatprep.mubr.f32.mxu0 0.0
    %411 = vmatmul.mubr.f32.gmra.mxu0 %v177
    %v412 = vpop.f32.mrf.mxu0
    %v413 = vadd.f32 %v86, %v412
    %v414 = vpop.f32.mrf.mxu0
    %415 = vmatprep.mubr.f32.mxu0 0.0
    %416 = vmatmul.mubr.f32.gmra.mxu0 %v180
    %v417 = vpop.f32.mrf.mxu0
    %v418 = vadd.f32 %v86, %v417
    %v419 = vpop.f32.mrf.mxu0
    %420 = vmatprep.mubr.f32.mxu0 0.0
    %421 = vmatmul.mubr.f32.gmra.mxu0 %v183
    %v422 = vpop.f32.mrf.mxu0
    %v423 = vadd.f32 %v86, %v422
    %v424 = vpop.f32.mrf.mxu0
    %425 = vmatprep.mubr.f32.mxu0 0.0
    %426 = vmatmul.mubr.f32.gmra.mxu0 %v186
    %v427 = vpop.f32.mrf.mxu0
    %v428 = vadd.f32 %v86, %v427
    %v429 = vpop.f32.mrf.mxu0
    %430 = vmatprep.mubr.f32.mxu0 0.0
    %431 = vmatmul.mubr.f32.gmra.mxu0 %v189
    %v432 = vpop.f32.mrf.mxu0
    %v433 = vadd.f32 %v86, %v432
    %v434 = vpop.f32.mrf.mxu0
    %435 = vmatprep.mubr.f32.mxu0 0.0
    %436 = vmatmul.mubr.f32.gmra.mxu0 %v192
    %v437 = vpop.f32.mrf.mxu0
    %v438 = vadd.f32 %v86, %v437
    %v439 = vpop.f32.mrf.mxu0
    %440 = vmatprep.mubr.f32.mxu0 0.0
    %441 = vmatmul.mubr.f32.gmra.mxu0 %v195
    %v442 = vpop.f32.mrf.mxu0
    %v443 = vadd.f32 %v86, %v442
    %v444 = vpop.f32.mrf.mxu0
    %445 = vdwg.mxu0
    %vm446 = vcmask 261120
    %447 = vst.msk [vmem:[#allocation2] sm:$0xff] %vm446, %v268
    %448 = vst.msk [vmem:[#allocation2 + $0x8] sm:$0xff] %vm446, %v273
    %449 = vst.msk [vmem:[#allocation2 + $0x10] sm:$0xff] %vm446, %v278
    %450 = vst.msk [vmem:[#allocation2 + $0x18] sm:$0xff] %vm446, %v283
    %451 = vst.msk [vmem:[#allocation2 + $0x20] sm:$0xff] %vm446, %v288
    %452 = vst.msk [vmem:[#allocation2 + $0x28] sm:$0xff] %vm446, %v293
    %453 = vst.msk [vmem:[#allocation2 + $0x30] sm:$0xff] %vm446, %v298
    %454 = vst.msk [vmem:[#allocation2 + $0x38] sm:$0xff] %vm446, %v303
    %455 = vst.msk [vmem:[#allocation2 + $0x40] sm:$0xff] %vm446, %v308
    %456 = vst.msk [vmem:[#allocation2 + $0x48] sm:$0xff] %vm446, %v313
    %457 = vst.msk [vmem:[#allocation2 + $0x50] sm:$0xff] %vm446, %v318
    %458 = vst.msk [vmem:[#allocation2 + $0x58] sm:$0xff] %vm446, %v323
    %459 = vst.msk [vmem:[#allocation2 + $0x60] sm:$0xff] %vm446, %v328
    %460 = vst.msk [vmem:[#allocation2 + $0x68] sm:$0xff] %vm446, %v333
    %461 = vst.msk [vmem:[#allocation2 + $0x70] sm:$0xff] %vm446, %v338
    %462 = vst.msk [vmem:[#allocation2 + $0x78] sm:$0xff] %vm446, %v343
    %463 = vst.msk [vmem:[#allocation2 + $0x80] sm:$0xff] %vm446, %v348
    %464 = vst.msk [vmem:[#allocation2 + $0x88] sm:$0xff] %vm446, %v353
    %465 = vst.msk [vmem:[#allocation2 + $0x90] sm:$0xff] %vm446, %v358
    %466 = vst.msk [vmem:[#allocation2 + $0x98] sm:$0xff] %vm446, %v363
    %467 = vst.msk [vmem:[#allocation2 + $0xa0] sm:$0xff] %vm446, %v368
    %468 = vst.msk [vmem:[#allocation2 + $0xa8] sm:$0xff] %vm446, %v373
    %469 = vst.msk [vmem:[#allocation2 + $0xb0] sm:$0xff] %vm446, %v378
    %470 = vst.msk [vmem:[#allocation2 + $0xb8] sm:$0xff] %vm446, %v383
    %471 = vst.msk [vmem:[#allocation2 + $0xc0] sm:$0xff] %vm446, %v388
    %472 = vst.msk [vmem:[#allocation2 + $0xc8] sm:$0xff] %vm446, %v393
    %473 = vst.msk [vmem:[#allocation2 + $0xd0] sm:$0xff] %vm446, %v398
    %474 = vst.msk [vmem:[#allocation2 + $0xd8] sm:$0xff] %vm446, %v403
    %475 = vst.msk [vmem:[#allocation2 + $0xe0] sm:$0xff] %vm446, %v408
    %476 = vst.msk [vmem:[#allocation2 + $0xe8] sm:$0xff] %vm446, %v413
    %477 = vst.msk [vmem:[#allocation2 + $0xf0] sm:$0xff] %vm446, %v418
    %478 = vst.msk [vmem:[#allocation2 + $0xf8] sm:$0xff] %vm446, %v423
    %479 = vst.msk [vmem:[#allocation2 + $0x100] sm:$0xff] %vm446, %v428
    %480 = vst.msk [vmem:[#allocation2 + $0x108] sm:$0xff] %vm446, %v433
    %481 = vst.msk [vmem:[#allocation2 + $0x110] sm:$0xff] %vm446, %v438
    %482 = vst.msk [vmem:[#allocation2 + $0x118] sm:$0xff] %vm446, %v443
    %s483 = scalar_lea.vmem %s2, 2
    %v484 = vld [vmem:[%s483] sm:$0x3]
    %s485 = scalar_lea.vmem %s4, 1
    %v486 = vld [vmem:[%s485] sm:$0x1]
    %v488 = vlaneseq
    %v489 = vshrl.u32 %v488, 7
    %v490 = vsub.s32 0, %v489
    %v491 = vrot.slane %v486, %v490
    %v494 = vsel %vm197, %v484, 0
    %496 = vmatprep.subr.mxu0 0.0
    %497 = vmatpush1.msra.mxu0 0.0
    %498 = vmatprep.subr.mxu0 0.0
    %499 = vmatpush1.msra.mxu0 0.0
    %500 = vmatprep.subr.mxu0 0.0
    %501 = vmatpush1.msra.mxu0 0.0
    %502 = vmatprep.subr.mxu0 0.0
    %503 = vmatpush1.msra.mxu0 0.0
    %504 = vmatprep.subr.mxu0 0.0
    %505 = vmatpush1.msra.mxu0 0.0
    %506 = vmatprep.subr.mxu0 0.0
    %507 = vmatpush1.msra.mxu0 0.0
    %508 = vmatprep.subr.mxu0 0.0
    %509 = vmatpush1.msra.mxu0 0.0
    %510 = vmatprep.subr.mxu0 0.0
    %511 = vmatpush1.msra.mxu0 0.0
    %512 = vmatprep.subr.mxu0 0.0
    %513 = vmatpush1.msra.mxu0 0.0
    %514 = vmatprep.subr.mxu0 0.0
    %515 = vmatpush1.msra.mxu0 0.0
    %516 = vmatprep.subr.mxu0 0.0
    %517 = vmatpush1.msra.mxu0 0.0
    %518 = vmatprep.subr.mxu0 0.0
    %519 = vmatpush1.msra.mxu0 0.0
    %520 = vmatprep.subr.mxu0 0.0
    %521 = vmatpush1.msra.mxu0 0.0
    %522 = vmatprep.subr.mxu0 0.0
    %523 = vmatpush1.msra.mxu0 0.0
    %524 = vmatprep.subr.mxu0 0.0
    %525 = vmatpush1.msra.mxu0 0.0
    %526 = vmatprep.subr.mxu0 0.0
    %527 = vmatpush1.msra.mxu0 %v494
    %528 = vmatprep.subr.mxu0 0.0
    %529 = vmatpush2.msra.mxu0 0.0
    %530 = vmatprep.subr.mxu0 0.0
    %531 = vmatpush2.msra.mxu0 0.0
    %532 = vmatprep.subr.mxu0 0.0
    %533 = vmatpush2.msra.mxu0 0.0
    %534 = vmatprep.subr.mxu0 0.0
    %535 = vmatpush2.msra.mxu0 0.0
    %536 = vmatprep.subr.mxu0 0.0
    %537 = vmatpush2.msra.mxu0 0.0
    %538 = vmatprep.subr.mxu0 0.0
    %539 = vmatpush2.msra.mxu0 0.0
    %540 = vmatprep.subr.mxu0 0.0
    %541 = vmatpush2.msra.mxu0 0.0
    %542 = vmatprep.subr.mxu0 0.0
    %543 = vmatpush2.msra.mxu0 0.0
    %544 = vmatprep.subr.mxu0 0.0
    %545 = vmatpush2.msra.mxu0 0.0
    %546 = vmatprep.subr.mxu0 0.0
    %547 = vmatpush2.msra.mxu0 0.0
    %548 = vmatprep.subr.mxu0 0.0
    %549 = vmatpush2.msra.mxu0 0.0
    %550 = vmatprep.subr.mxu0 0.0
    %551 = vmatpush2.msra.mxu0 0.0
    %552 = vmatprep.subr.mxu0 0.0
    %553 = vmatpush2.msra.mxu0 0.0
    %554 = vmatprep.subr.mxu0 0.0
    %555 = vmatpush2.msra.mxu0 0.0
    %556 = vmatprep.subr.mxu0 0.0
    %557 = vmatpush2.msra.mxu0 0.0
    %558 = vmatprep.subr.mxu0 0.0
    %559 = vmatpush2.msra.mxu0 0.0
    %560 = vmatprep.mubr.f32.mxu0 0.0
    %561 = vmatmul.mubr.f32.gmra.mxu0 %v90
    %v562 = vpop.f32.mrf.mxu0
    %v563 = vadd.f32 %v491, %v562
    %v564 = vpop.f32.mrf.mxu0
    %565 = vmatprep.mubr.f32.mxu0 0.0
    %566 = vmatmul.mubr.f32.gmra.mxu0 %v93
    %v567 = vpop.f32.mrf.mxu0
    %v568 = vadd.f32 %v491, %v567
    %v569 = vpop.f32.mrf.mxu0
    %570 = vmatprep.mubr.f32.mxu0 0.0
    %571 = vmatmul.mubr.f32.gmra.mxu0 %v96
    %v572 = vpop.f32.mrf.mxu0
    %v573 = vadd.f32 %v491, %v572
    %v574 = vpop.f32.mrf.mxu0
    %575 = vmatprep.mubr.f32.mxu0 0.0
    %576 = vmatmul.mubr.f32.gmra.mxu0 %v99
    %v577 = vpop.f32.mrf.mxu0
    %v578 = vadd.f32 %v491, %v577
    %v579 = vpop.f32.mrf.mxu0
    %580 = vmatprep.mubr.f32.mxu0 0.0
    %581 = vmatmul.mubr.f32.gmra.mxu0 %v102
    %v582 = vpop.f32.mrf.mxu0
    %v583 = vadd.f32 %v491, %v582
    %v584 = vpop.f32.mrf.mxu0
    %585 = vmatprep.mubr.f32.mxu0 0.0
    %586 = vmatmul.mubr.f32.gmra.mxu0 %v105
    %v587 = vpop.f32.mrf.mxu0
    %v588 = vadd.f32 %v491, %v587
    %v589 = vpop.f32.mrf.mxu0
    %590 = vmatprep.mubr.f32.mxu0 0.0
    %591 = vmatmul.mubr.f32.gmra.mxu0 %v108
    %v592 = vpop.f32.mrf.mxu0
    %v593 = vadd.f32 %v491, %v592
    %v594 = vpop.f32.mrf.mxu0
    %595 = vmatprep.mubr.f32.mxu0 0.0
    %596 = vmatmul.mubr.f32.gmra.mxu0 %v111
    %v597 = vpop.f32.mrf.mxu0
    %v598 = vadd.f32 %v491, %v597
    %v599 = vpop.f32.mrf.mxu0
    %600 = vmatprep.mubr.f32.mxu0 0.0
    %601 = vmatmul.mubr.f32.gmra.mxu0 %v114
    %v602 = vpop.f32.mrf.mxu0
    %v603 = vadd.f32 %v491, %v602
    %v604 = vpop.f32.mrf.mxu0
    %605 = vmatprep.mubr.f32.mxu0 0.0
    %606 = vmatmul.mubr.f32.gmra.mxu0 %v117
    %v607 = vpop.f32.mrf.mxu0
    %v608 = vadd.f32 %v491, %v607
    %v609 = vpop.f32.mrf.mxu0
    %610 = vmatprep.mubr.f32.mxu0 0.0
    %611 = vmatmul.mubr.f32.gmra.mxu0 %v120
    %v612 = vpop.f32.mrf.mxu0
    %v613 = vadd.f32 %v491, %v612
    %v614 = vpop.f32.mrf.mxu0
    %615 = vmatprep.mubr.f32.mxu0 0.0
    %616 = vmatmul.mubr.f32.gmra.mxu0 %v123
    %v617 = vpop.f32.mrf.mxu0
    %v618 = vadd.f32 %v491, %v617
    %v619 = vpop.f32.mrf.mxu0
    %620 = vmatprep.mubr.f32.mxu0 0.0
    %621 = vmatmul.mubr.f32.gmra.mxu0 %v126
    %v622 = vpop.f32.mrf.mxu0
    %v623 = vadd.f32 %v491, %v622
    %v624 = vpop.f32.mrf.mxu0
    %625 = vmatprep.mubr.f32.mxu0 0.0
    %626 = vmatmul.mubr.f32.gmra.mxu0 %v129
    %v627 = vpop.f32.mrf.mxu0
    %v628 = vadd.f32 %v491, %v627
    %v629 = vpop.f32.mrf.mxu0
    %630 = vmatprep.mubr.f32.mxu0 0.0
    %631 = vmatmul.mubr.f32.gmra.mxu0 %v132
    %v632 = vpop.f32.mrf.mxu0
    %v633 = vadd.f32 %v491, %v632
    %v634 = vpop.f32.mrf.mxu0
    %635 = vmatprep.mubr.f32.mxu0 0.0
    %636 = vmatmul.mubr.f32.gmra.mxu0 %v135
    %v637 = vpop.f32.mrf.mxu0
    %v638 = vadd.f32 %v491, %v637
    %v639 = vpop.f32.mrf.mxu0
    %640 = vmatprep.mubr.f32.mxu0 0.0
    %641 = vmatmul.mubr.f32.gmra.mxu0 %v138
    %v642 = vpop.f32.mrf.mxu0
    %v643 = vadd.f32 %v491, %v642
    %v644 = vpop.f32.mrf.mxu0
    %645 = vmatprep.mubr.f32.mxu0 0.0
    %646 = vmatmul.mubr.f32.gmra.mxu0 %v141
    %v647 = vpop.f32.mrf.mxu0
    %v648 = vadd.f32 %v491, %v647
    %v649 = vpop.f32.mrf.mxu0
    %650 = vmatprep.mubr.f32.mxu0 0.0
    %651 = vmatmul.mubr.f32.gmra.mxu0 %v144
    %v652 = vpop.f32.mrf.mxu0
    %v653 = vadd.f32 %v491, %v652
    %v654 = vpop.f32.mrf.mxu0
    %655 = vmatprep.mubr.f32.mxu0 0.0
    %656 = vmatmul.mubr.f32.gmra.mxu0 %v147
    %v657 = vpop.f32.mrf.mxu0
    %v658 = vadd.f32 %v491, %v657
    %v659 = vpop.f32.mrf.mxu0
    %660 = vmatprep.mubr.f32.mxu0 0.0
    %661 = vmatmul.mubr.f32.gmra.mxu0 %v150
    %v662 = vpop.f32.mrf.mxu0
    %v663 = vadd.f32 %v491, %v662
    %v664 = vpop.f32.mrf.mxu0
    %665 = vmatprep.mubr.f32.mxu0 0.0
    %666 = vmatmul.mubr.f32.gmra.mxu0 %v153
    %v667 = vpop.f32.mrf.mxu0
    %v668 = vadd.f32 %v491, %v667
    %v669 = vpop.f32.mrf.mxu0
    %670 = vmatprep.mubr.f32.mxu0 0.0
    %671 = vmatmul.mubr.f32.gmra.mxu0 %v156
    %v672 = vpop.f32.mrf.mxu0
    %v673 = vadd.f32 %v491, %v672
    %v674 = vpop.f32.mrf.mxu0
    %675 = vmatprep.mubr.f32.mxu0 0.0
    %676 = vmatmul.mubr.f32.gmra.mxu0 %v159
    %v677 = vpop.f32.mrf.mxu0
    %v678 = vadd.f32 %v491, %v677
    %v679 = vpop.f32.mrf.mxu0
    %680 = vmatprep.mubr.f32.mxu0 0.0
    %681 = vmatmul.mubr.f32.gmra.mxu0 %v162
    %v682 = vpop.f32.mrf.mxu0
    %v683 = vadd.f32 %v491, %v682
    %v684 = vpop.f32.mrf.mxu0
    %685 = vmatprep.mubr.f32.mxu0 0.0
    %686 = vmatmul.mubr.f32.gmra.mxu0 %v165
    %v687 = vpop.f32.mrf.mxu0
    %v688 = vadd.f32 %v491, %v687
    %v689 = vpop.f32.mrf.mxu0
    %690 = vmatprep.mubr.f32.mxu0 0.0
    %691 = vmatmul.mubr.f32.gmra.mxu0 %v168
    %v692 = vpop.f32.mrf.mxu0
    %v693 = vadd.f32 %v491, %v692
    %v694 = vpop.f32.mrf.mxu0
    %695 = vmatprep.mubr.f32.mxu0 0.0
    %696 = vmatmul.mubr.f32.gmra.mxu0 %v171
    %v697 = vpop.f32.mrf.mxu0
    %v698 = vadd.f32 %v491, %v697
    %v699 = vpop.f32.mrf.mxu0
    %700 = vmatprep.mubr.f32.mxu0 0.0
    %701 = vmatmul.mubr.f32.gmra.mxu0 %v174
    %v702 = vpop.f32.mrf.mxu0
    %v703 = vadd.f32 %v491, %v702
    %v704 = vpop.f32.mrf.mxu0
    %705 = vmatprep.mubr.f32.mxu0 0.0
    %706 = vmatmul.mubr.f32.gmra.mxu0 %v177
    %v707 = vpop.f32.mrf.mxu0
    %v708 = vadd.f32 %v491, %v707
    %v709 = vpop.f32.mrf.mxu0
    %710 = vmatprep.mubr.f32.mxu0 0.0
    %711 = vmatmul.mubr.f32.gmra.mxu0 %v180
    %v712 = vpop.f32.mrf.mxu0
    %v713 = vadd.f32 %v491, %v712
    %v714 = vpop.f32.mrf.mxu0
    %715 = vmatprep.mubr.f32.mxu0 0.0
    %716 = vmatmul.mubr.f32.gmra.mxu0 %v183
    %v717 = vpop.f32.mrf.mxu0
    %v718 = vadd.f32 %v491, %v717
    %v719 = vpop.f32.mrf.mxu0
    %720 = vmatprep.mubr.f32.mxu0 0.0
    %721 = vmatmul.mubr.f32.gmra.mxu0 %v186
    %v722 = vpop.f32.mrf.mxu0
    %v723 = vadd.f32 %v491, %v722
    %v724 = vpop.f32.mrf.mxu0
    %725 = vmatprep.mubr.f32.mxu0 0.0
    %726 = vmatmul.mubr.f32.gmra.mxu0 %v189
    %v727 = vpop.f32.mrf.mxu0
    %v728 = vadd.f32 %v491, %v727
    %v729 = vpop.f32.mrf.mxu0
    %730 = vmatprep.mubr.f32.mxu0 0.0
    %731 = vmatmul.mubr.f32.gmra.mxu0 %v192
    %v732 = vpop.f32.mrf.mxu0
    %v733 = vadd.f32 %v491, %v732
    %v734 = vpop.f32.mrf.mxu0
    %735 = vmatprep.mubr.f32.mxu0 0.0
    %736 = vmatmul.mubr.f32.gmra.mxu0 %v195
    %v737 = vpop.f32.mrf.mxu0
    %v738 = vadd.f32 %v491, %v737
    %v739 = vpop.f32.mrf.mxu0
    %740 = vdwg.mxu0
    %741 = vst.msk [vmem:[#allocation3] sm:$0xff] %vm446, %v563
    %742 = vst.msk [vmem:[#allocation3 + $0x8] sm:$0xff] %vm446, %v568
    %743 = vst.msk [vmem:[#allocation3 + $0x10] sm:$0xff] %vm446, %v573
    %744 = vst.msk [vmem:[#allocation3 + $0x18] sm:$0xff] %vm446, %v578
    %745 = vst.msk [vmem:[#allocation3 + $0x20] sm:$0xff] %vm446, %v583
    %746 = vst.msk [vmem:[#allocation3 + $0x28] sm:$0xff] %vm446, %v588
    %747 = vst.msk [vmem:[#allocation3 + $0x30] sm:$0xff] %vm446, %v593
    %748 = vst.msk [vmem:[#allocation3 + $0x38] sm:$0xff] %vm446, %v598
    %749 = vst.msk [vmem:[#allocation3 + $0x40] sm:$0xff] %vm446, %v603
    %750 = vst.msk [vmem:[#allocation3 + $0x48] sm:$0xff] %vm446, %v608
    %751 = vst.msk [vmem:[#allocation3 + $0x50] sm:$0xff] %vm446, %v613
    %752 = vst.msk [vmem:[#allocation3 + $0x58] sm:$0xff] %vm446, %v618
    %753 = vst.msk [vmem:[#allocation3 + $0x60] sm:$0xff] %vm446, %v623
    %754 = vst.msk [vmem:[#allocation3 + $0x68] sm:$0xff] %vm446, %v628
    %755 = vst.msk [vmem:[#allocation3 + $0x70] sm:$0xff] %vm446, %v633
    %756 = vst.msk [vmem:[#allocation3 + $0x78] sm:$0xff] %vm446, %v638
    %757 = vst.msk [vmem:[#allocation3 + $0x80] sm:$0xff] %vm446, %v643
    %758 = vst.msk [vmem:[#allocation3 + $0x88] sm:$0xff] %vm446, %v648
    %759 = vst.msk [vmem:[#allocation3 + $0x90] sm:$0xff] %vm446, %v653
    %760 = vst.msk [vmem:[#allocation3 + $0x98] sm:$0xff] %vm446, %v658
    %761 = vst.msk [vmem:[#allocation3 + $0xa0] sm:$0xff] %vm446, %v663
    %762 = vst.msk [vmem:[#allocation3 + $0xa8] sm:$0xff] %vm446, %v668
    %763 = vst.msk [vmem:[#allocation3 + $0xb0] sm:$0xff] %vm446, %v673
    %764 = vst.msk [vmem:[#allocation3 + $0xb8] sm:$0xff] %vm446, %v678
    %765 = vst.msk [vmem:[#allocation3 + $0xc0] sm:$0xff] %vm446, %v683
    %766 = vst.msk [vmem:[#allocation3 + $0xc8] sm:$0xff] %vm446, %v688
    %767 = vst.msk [vmem:[#allocation3 + $0xd0] sm:$0xff] %vm446, %v693
    %768 = vst.msk [vmem:[#allocation3 + $0xd8] sm:$0xff] %vm446, %v698
    %769 = vst.msk [vmem:[#allocation3 + $0xe0] sm:$0xff] %vm446, %v703
    %770 = vst.msk [vmem:[#allocation3 + $0xe8] sm:$0xff] %vm446, %v708
    %771 = vst.msk [vmem:[#allocation3 + $0xf0] sm:$0xff] %vm446, %v713
    %772 = vst.msk [vmem:[#allocation3 + $0xf8] sm:$0xff] %vm446, %v718
    %773 = vst.msk [vmem:[#allocation3 + $0x100] sm:$0xff] %vm446, %v723
    %774 = vst.msk [vmem:[#allocation3 + $0x108] sm:$0xff] %vm446, %v728
    %775 = vst.msk [vmem:[#allocation3 + $0x110] sm:$0xff] %vm446, %v733
    %776 = vst.msk [vmem:[#allocation3 + $0x118] sm:$0xff] %vm446, %v738
    %s777 = scalar_lea.vmem %s2, 4
    %v778 = vld [vmem:[%s777] sm:$0x3]
    %s779 = scalar_lea.vmem %s4, 2
    %v780 = vld [vmem:[%s779] sm:$0x1]
    %v782 = vlaneseq
    %v783 = vshrl.u32 %v782, 7
    %v784 = vsub.s32 0, %v783
    %v785 = vrot.slane %v780, %v784
    %v788 = vsel %vm197, %v778, 0
    %790 = vmatprep.subr.mxu0 0.0
    %791 = vmatpush1.msra.mxu0 0.0
    %792 = vmatprep.subr.mxu0 0.0
    %793 = vmatpush1.msra.mxu0 0.0
    %794 = vmatprep.subr.mxu0 0.0
    %795 = vmatpush1.msra.mxu0 0.0
    %796 = vmatprep.subr.mxu0 0.0
    %797 = vmatpush1.msra.mxu0 0.0
    %798 = vmatprep.subr.mxu0 0.0
    %799 = vmatpush1.msra.mxu0 0.0
    %800 = vmatprep.subr.mxu0 0.0
    %801 = vmatpush1.msra.mxu0 0.0
    %802 = vmatprep.subr.mxu0 0.0
    %803 = vmatpush1.msra.mxu0 0.0
    %804 = vmatprep.subr.mxu0 0.0
    %805 = vmatpush1.msra.mxu0 0.0
    %806 = vmatprep.subr.mxu0 0.0
    %807 = vmatpush1.msra.mxu0 0.0
    %808 = vmatprep.subr.mxu0 0.0
    %809 = vmatpush1.msra.mxu0 0.0
    %810 = vmatprep.subr.mxu0 0.0
    %811 = vmatpush1.msra.mxu0 0.0
    %812 = vmatprep.subr.mxu0 0.0
    %813 = vmatpush1.msra.mxu0 0.0
    %814 = vmatprep.subr.mxu0 0.0
    %815 = vmatpush1.msra.mxu0 0.0
    %816 = vmatprep.subr.mxu0 0.0
    %817 = vmatpush1.msra.mxu0 0.0
    %818 = vmatprep.subr.mxu0 0.0
    %819 = vmatpush1.msra.mxu0 0.0
    %820 = vmatprep.subr.mxu0 0.0
    %821 = vmatpush1.msra.mxu0 %v788
    %822 = vmatprep.subr.mxu0 0.0
    %823 = vmatpush2.msra.mxu0 0.0
    %824 = vmatprep.subr.mxu0 0.0
    %825 = vmatpush2.msra.mxu0 0.0
    %826 = vmatprep.subr.mxu0 0.0
    %827 = vmatpush2.msra.mxu0 0.0
    %828 = vmatprep.subr.mxu0 0.0
    %829 = vmatpush2.msra.mxu0 0.0
    %830 = vmatprep.subr.mxu0 0.0
    %831 = vmatpush2.msra.mxu0 0.0
    %832 = vmatprep.subr.mxu0 0.0
    %833 = vmatpush2.msra.mxu0 0.0
    %834 = vmatprep.subr.mxu0 0.0
    %835 = vmatpush2.msra.mxu0 0.0
    %836 = vmatprep.subr.mxu0 0.0
    %837 = vmatpush2.msra.mxu0 0.0
    %838 = vmatprep.subr.mxu0 0.0
    %839 = vmatpush2.msra.mxu0 0.0
    %840 = vmatprep.subr.mxu0 0.0
    %841 = vmatpush2.msra.mxu0 0.0
    %842 = vmatprep.subr.mxu0 0.0
    %843 = vmatpush2.msra.mxu0 0.0
    %844 = vmatprep.subr.mxu0 0.0
    %845 = vmatpush2.msra.mxu0 0.0
    %846 = vmatprep.subr.mxu0 0.0
    %847 = vmatpush2.msra.mxu0 0.0
    %848 = vmatprep.subr.mxu0 0.0
    %849 = vmatpush2.msra.mxu0 0.0
    %850 = vmatprep.subr.mxu0 0.0
    %851 = vmatpush2.msra.mxu0 0.0
    %852 = vmatprep.subr.mxu0 0.0
    %853 = vmatpush2.msra.mxu0 0.0
    %854 = vmatprep.mubr.f32.mxu0 0.0
    %855 = vmatmul.mubr.f32.gmra.mxu0 %v90
    %v856 = vpop.f32.mrf.mxu0
    %v857 = vadd.f32 %v785, %v856
    %v858 = vpop.f32.mrf.mxu0
    %859 = vmatprep.mubr.f32.mxu0 0.0
    %860 = vmatmul.mubr.f32.gmra.mxu0 %v93
    %v861 = vpop.f32.mrf.mxu0
    %v862 = vadd.f32 %v785, %v861
    %v863 = vpop.f32.mrf.mxu0
    %864 = vmatprep.mubr.f32.mxu0 0.0
    %865 = vmatmul.mubr.f32.gmra.mxu0 %v96
    %v866 = vpop.f32.mrf.mxu0
    %v867 = vadd.f32 %v785, %v866
    %v868 = vpop.f32.mrf.mxu0
    %869 = vmatprep.mubr.f32.mxu0 0.0
    %870 = vmatmul.mubr.f32.gmra.mxu0 %v99
    %v871 = vpop.f32.mrf.mxu0
    %v872 = vadd.f32 %v785, %v871
    %v873 = vpop.f32.mrf.mxu0
    %874 = vmatprep.mubr.f32.mxu0 0.0
    %875 = vmatmul.mubr.f32.gmra.mxu0 %v102
    %v876 = vpop.f32.mrf.mxu0
    %v877 = vadd.f32 %v785, %v876
    %v878 = vpop.f32.mrf.mxu0
    %879 = vmatprep.mubr.f32.mxu0 0.0
    %880 = vmatmul.mubr.f32.gmra.mxu0 %v105
    %v881 = vpop.f32.mrf.mxu0
    %v882 = vadd.f32 %v785, %v881
    %v883 = vpop.f32.mrf.mxu0
    %884 = vmatprep.mubr.f32.mxu0 0.0
    %885 = vmatmul.mubr.f32.gmra.mxu0 %v108
    %v886 = vpop.f32.mrf.mxu0
    %v887 = vadd.f32 %v785, %v886
    %v888 = vpop.f32.mrf.mxu0
    %889 = vmatprep.mubr.f32.mxu0 0.0
    %890 = vmatmul.mubr.f32.gmra.mxu0 %v111
    %v891 = vpop.f32.mrf.mxu0
    %v892 = vadd.f32 %v785, %v891
    %v893 = vpop.f32.mrf.mxu0
    %894 = vmatprep.mubr.f32.mxu0 0.0
    %895 = vmatmul.mubr.f32.gmra.mxu0 %v114
    %v896 = vpop.f32.mrf.mxu0
    %v897 = vadd.f32 %v785, %v896
    %v898 = vpop.f32.mrf.mxu0
    %899 = vmatprep.mubr.f32.mxu0 0.0
    %900 = vmatmul.mubr.f32.gmra.mxu0 %v117
    %v901 = vpop.f32.mrf.mxu0
    %v902 = vadd.f32 %v785, %v901
    %v903 = vpop.f32.mrf.mxu0
    %904 = vmatprep.mubr.f32.mxu0 0.0
    %905 = vmatmul.mubr.f32.gmra.mxu0 %v120
    %v906 = vpop.f32.mrf.mxu0
    %v907 = vadd.f32 %v785, %v906
    %v908 = vpop.f32.mrf.mxu0
    %909 = vmatprep.mubr.f32.mxu0 0.0
    %910 = vmatmul.mubr.f32.gmra.mxu0 %v123
    %v911 = vpop.f32.mrf.mxu0
    %v912 = vadd.f32 %v785, %v911
    %v913 = vpop.f32.mrf.mxu0
    %914 = vmatprep.mubr.f32.mxu0 0.0
    %915 = vmatmul.mubr.f32.gmra.mxu0 %v126
    %v916 = vpop.f32.mrf.mxu0
    %v917 = vadd.f32 %v785, %v916
    %v918 = vpop.f32.mrf.mxu0
    %919 = vmatprep.mubr.f32.mxu0 0.0
    %920 = vmatmul.mubr.f32.gmra.mxu0 %v129
    %v921 = vpop.f32.mrf.mxu0
    %v922 = vadd.f32 %v785, %v921
    %v923 = vpop.f32.mrf.mxu0
    %924 = vmatprep.mubr.f32.mxu0 0.0
    %925 = vmatmul.mubr.f32.gmra.mxu0 %v132
    %v926 = vpop.f32.mrf.mxu0
    %v927 = vadd.f32 %v785, %v926
    %v928 = vpop.f32.mrf.mxu0
    %929 = vmatprep.mubr.f32.mxu0 0.0
    %930 = vmatmul.mubr.f32.gmra.mxu0 %v135
    %v931 = vpop.f32.mrf.mxu0
    %v932 = vadd.f32 %v785, %v931
    %v933 = vpop.f32.mrf.mxu0
    %934 = vmatprep.mubr.f32.mxu0 0.0
    %935 = vmatmul.mubr.f32.gmra.mxu0 %v138
    %v936 = vpop.f32.mrf.mxu0
    %v937 = vadd.f32 %v785, %v936
    %v938 = vpop.f32.mrf.mxu0
    %939 = vmatprep.mubr.f32.mxu0 0.0
    %940 = vmatmul.mubr.f32.gmra.mxu0 %v141
    %v941 = vpop.f32.mrf.mxu0
    %v942 = vadd.f32 %v785, %v941
    %v943 = vpop.f32.mrf.mxu0
    %944 = vmatprep.mubr.f32.mxu0 0.0
    %945 = vmatmul.mubr.f32.gmra.mxu0 %v144
    %v946 = vpop.f32.mrf.mxu0
    %v947 = vadd.f32 %v785, %v946
    %v948 = vpop.f32.mrf.mxu0
    %949 = vmatprep.mubr.f32.mxu0 0.0
    %950 = vmatmul.mubr.f32.gmra.mxu0 %v147
    %v951 = vpop.f32.mrf.mxu0
    %v952 = vadd.f32 %v785, %v951
    %v953 = vpop.f32.mrf.mxu0
    %954 = vmatprep.mubr.f32.mxu0 0.0
    %955 = vmatmul.mubr.f32.gmra.mxu0 %v150
    %v956 = vpop.f32.mrf.mxu0
    %v957 = vadd.f32 %v785, %v956
    %v958 = vpop.f32.mrf.mxu0
    %959 = vmatprep.mubr.f32.mxu0 0.0
    %960 = vmatmul.mubr.f32.gmra.mxu0 %v153
    %v961 = vpop.f32.mrf.mxu0
    %v962 = vadd.f32 %v785, %v961
    %v963 = vpop.f32.mrf.mxu0
    %964 = vmatprep.mubr.f32.mxu0 0.0
    %965 = vmatmul.mubr.f32.gmra.mxu0 %v156
    %v966 = vpop.f32.mrf.mxu0
    %v967 = vadd.f32 %v785, %v966
    %v968 = vpop.f32.mrf.mxu0
    %969 = vmatprep.mubr.f32.mxu0 0.0
    %970 = vmatmul.mubr.f32.gmra.mxu0 %v159
    %v971 = vpop.f32.mrf.mxu0
    %v972 = vadd.f32 %v785, %v971
    %v973 = vpop.f32.mrf.mxu0
    %974 = vmatprep.mubr.f32.mxu0 0.0
    %975 = vmatmul.mubr.f32.gmra.mxu0 %v162
    %v976 = vpop.f32.mrf.mxu0
    %v977 = vadd.f32 %v785, %v976
    %v978 = vpop.f32.mrf.mxu0
    %979 = vmatprep.mubr.f32.mxu0 0.0
    %980 = vmatmul.mubr.f32.gmra.mxu0 %v165
    %v981 = vpop.f32.mrf.mxu0
    %v982 = vadd.f32 %v785, %v981
    %v983 = vpop.f32.mrf.mxu0
    %984 = vmatprep.mubr.f32.mxu0 0.0
    %985 = vmatmul.mubr.f32.gmra.mxu0 %v168
    %v986 = vpop.f32.mrf.mxu0
    %v987 = vadd.f32 %v785, %v986
    %v988 = vpop.f32.mrf.mxu0
    %989 = vmatprep.mubr.f32.mxu0 0.0
    %990 = vmatmul.mubr.f32.gmra.mxu0 %v171
    %v991 = vpop.f32.mrf.mxu0
    %v992 = vadd.f32 %v785, %v991
    %v993 = vpop.f32.mrf.mxu0
    %994 = vmatprep.mubr.f32.mxu0 0.0
    %995 = vmatmul.mubr.f32.gmra.mxu0 %v174
    %v996 = vpop.f32.mrf.mxu0
    %v997 = vadd.f32 %v785, %v996
    %v998 = vpop.f32.mrf.mxu0
    %999 = vmatprep.mubr.f32.mxu0 0.0
    %1000 = vmatmul.mubr.f32.gmra.mxu0 %v177
    %v1001 = vpop.f32.mrf.mxu0
    %v1002 = vadd.f32 %v785, %v1001
    %v1003 = vpop.f32.mrf.mxu0
    %1004 = vmatprep.mubr.f32.mxu0 0.0
    %1005 = vmatmul.mubr.f32.gmra.mxu0 %v180
    %v1006 = vpop.f32.mrf.mxu0
    %v1007 = vadd.f32 %v785, %v1006
    %v1008 = vpop.f32.mrf.mxu0
    %1009 = vmatprep.mubr.f32.mxu0 0.0
    %1010 = vmatmul.mubr.f32.gmra.mxu0 %v183
    %v1011 = vpop.f32.mrf.mxu0
    %v1012 = vadd.f32 %v785, %v1011
    %v1013 = vpop.f32.mrf.mxu0
    %1014 = vmatprep.mubr.f32.mxu0 0.0
    %1015 = vmatmul.mubr.f32.gmra.mxu0 %v186
    %v1016 = vpop.f32.mrf.mxu0
    %v1017 = vadd.f32 %v785, %v1016
    %v1018 = vpop.f32.mrf.mxu0
    %1019 = vmatprep.mubr.f32.mxu0 0.0
    %1020 = vmatmul.mubr.f32.gmra.mxu0 %v189
    %v1021 = vpop.f32.mrf.mxu0
    %v1022 = vadd.f32 %v785, %v1021
    %v1023 = vpop.f32.mrf.mxu0
    %1024 = vmatprep.mubr.f32.mxu0 0.0
    %1025 = vmatmul.mubr.f32.gmra.mxu0 %v192
    %v1026 = vpop.f32.mrf.mxu0
    %v1027 = vadd.f32 %v785, %v1026
    %v1028 = vpop.f32.mrf.mxu0
    %1029 = vmatprep.mubr.f32.mxu0 0.0
    %1030 = vmatmul.mubr.f32.gmra.mxu0 %v195
    %v1031 = vpop.f32.mrf.mxu0
    %v1032 = vadd.f32 %v785, %v1031
    %v1033 = vpop.f32.mrf.mxu0
    %1034 = vdwg.mxu0
    %1035 = vst.msk [vmem:[#allocation4] sm:$0xff] %vm446, %v857
    %1036 = vst.msk [vmem:[#allocation4 + $0x8] sm:$0xff] %vm446, %v862
    %1037 = vst.msk [vmem:[#allocation4 + $0x10] sm:$0xff] %vm446, %v867
    %1038 = vst.msk [vmem:[#allocation4 + $0x18] sm:$0xff] %vm446, %v872
    %1039 = vst.msk [vmem:[#allocation4 + $0x20] sm:$0xff] %vm446, %v877
    %1040 = vst.msk [vmem:[#allocation4 + $0x28] sm:$0xff] %vm446, %v882
    %1041 = vst.msk [vmem:[#allocation4 + $0x30] sm:$0xff] %vm446, %v887
    %1042 = vst.msk [vmem:[#allocation4 + $0x38] sm:$0xff] %vm446, %v892
    %1043 = vst.msk [vmem:[#allocation4 + $0x40] sm:$0xff] %vm446, %v897
    %1044 = vst.msk [vmem:[#allocation4 + $0x48] sm:$0xff] %vm446, %v902
    %1045 = vst.msk [vmem:[#allocation4 + $0x50] sm:$0xff] %vm446, %v907
    %1046 = vst.msk [vmem:[#allocation4 + $0x58] sm:$0xff] %vm446, %v912
    %1047 = vst.msk [vmem:[#allocation4 + $0x60] sm:$0xff] %vm446, %v917
    %1048 = vst.msk [vmem:[#allocation4 + $0x68] sm:$0xff] %vm446, %v922
    %1049 = vst.msk [vmem:[#allocation4 + $0x70] sm:$0xff] %vm446, %v927
    %1050 = vst.msk [vmem:[#allocation4 + $0x78] sm:$0xff] %vm446, %v932
    %1051 = vst.msk [vmem:[#allocation4 + $0x80] sm:$0xff] %vm446, %v937
    %1052 = vst.msk [vmem:[#allocation4 + $0x88] sm:$0xff] %vm446, %v942
    %1053 = vst.msk [vmem:[#allocation4 + $0x90] sm:$0xff] %vm446, %v947
    %1054 = vst.msk [vmem:[#allocation4 + $0x98] sm:$0xff] %vm446, %v952
    %1055 = vst.msk [vmem:[#allocation4 + $0xa0] sm:$0xff] %vm446, %v957
    %1056 = vst.msk [vmem:[#allocation4 + $0xa8] sm:$0xff] %vm446, %v962
    %1057 = vst.msk [vmem:[#allocation4 + $0xb0] sm:$0xff] %vm446, %v967
    %1058 = vst.msk [vmem:[#allocation4 + $0xb8] sm:$0xff] %vm446, %v972
    %1059 = vst.msk [vmem:[#allocation4 + $0xc0] sm:$0xff] %vm446, %v977
    %1060 = vst.msk [vmem:[#allocation4 + $0xc8] sm:$0xff] %vm446, %v982
    %1061 = vst.msk [vmem:[#allocation4 + $0xd0] sm:$0xff] %vm446, %v987
    %1062 = vst.msk [vmem:[#allocation4 + $0xd8] sm:$0xff] %vm446, %v992
    %1063 = vst.msk [vmem:[#allocation4 + $0xe0] sm:$0xff] %vm446, %v997
    %1064 = vst.msk [vmem:[#allocation4 + $0xe8] sm:$0xff] %vm446, %v1002
    %1065 = vst.msk [vmem:[#allocation4 + $0xf0] sm:$0xff] %vm446, %v1007
    %1066 = vst.msk [vmem:[#allocation4 + $0xf8] sm:$0xff] %vm446, %v1012
    %1067 = vst.msk [vmem:[#allocation4 + $0x100] sm:$0xff] %vm446, %v1017
    %1068 = vst.msk [vmem:[#allocation4 + $0x108] sm:$0xff] %vm446, %v1022
    %1069 = vst.msk [vmem:[#allocation4 + $0x110] sm:$0xff] %vm446, %v1027
    %1070 = vst.msk [vmem:[#allocation4 + $0x118] sm:$0xff] %vm446, %v1032
    %v1071 = vld [vmem:[%s3] sm:$0xff]
    %v1072 = vld [vmem:[%s3 + $0x8] sm:$0xff]
    %v1073 = vld [vmem:[%s3 + $0x10] sm:$0xff]
    %v1074 = vld [vmem:[%s3 + $0x18] sm:$0xff]
    %s1075 = scalar_lea.vmem %s3, 32
    %v1076 = vld [vmem:[%s1075] sm:$0xff]
    %v1077 = vld [vmem:[%s1075 + $0x8] sm:$0xff]
    %v1078 = vld [vmem:[%s1075 + $0x10] sm:$0xff]
    %v1079 = vld [vmem:[%s1075 + $0x18] sm:$0xff]
    %s1080 = scalar_lea.vmem %s3, 64
    %v1081 = vld [vmem:[%s1080] sm:$0xff]
    %v1082 = vld [vmem:[%s1080 + $0x8] sm:$0xff]
    %v1083 = vld [vmem:[%s1080 + $0x10] sm:$0xff]
    %v1084 = vld [vmem:[%s1080 + $0x18] sm:$0xff]
    %v1085 = vld [vmem:[%s5] sm:$0x1]
    %v1087 = vlaneseq
    %v1088 = vshrl.u32 %v1087, 7
    %v1089 = vsub.s32 0, %v1088
    %v1090 = vrot.slane %v1085, %v1089
    loop: start=0, step=1, limit=36
    $region50: #{cnnseq2seq_forward.5} parent=1 // loop_pre_header
      _
    $region51: #{cnnseq2seq_forward.5} parent=1 // loop_header
      %s1093 = sphi 0, %s1097
      %p1094 = scmp.ge.s32.totalorder %s1093, 36
      %v1098 = vphi 0.0, %v2078
    $region52: #{cnnseq2seq_forward.5} parent=1 // loop_header_branch
      %1096 = sbr.rel (%p1094) target = $region56
    $region53: #{cnnseq2seq_forward.5} parent=1 // loop_body
      %s1099 = smul.u32 %s1093, 8
      %s1100 = scalar_lea.vmem [#allocation2], %s1099
      %v1101 = vld [vmem:[%s1100] sm:$0xff]
      %s1102 = scalar_lea.vmem [#allocation3], %s1099
      %v1103 = vld [vmem:[%s1102] sm:$0xff]
      %s1104 = scalar_lea.vmem [#allocation4], %s1099
      %v1105 = vld [vmem:[%s1104] sm:$0xff]
      %v1107 = vrot.slane %v1098, 6
      %v1108 = vsel %vm446, %v1107, 0
      %1110 = vmatprep.subr.mxu0 0.0
      %1111 = vmatpush1.msra.mxu0 0.0
      %1112 = vmatprep.subr.mxu0 0.0
      %1113 = vmatpush1.msra.mxu0 0.0
      %1114 = vmatprep.subr.mxu0 0.0
      %1115 = vmatpush1.msra.mxu0 0.0
      %1116 = vmatprep.subr.mxu0 0.0
      %1117 = vmatpush1.msra.mxu0 0.0
      %1118 = vmatprep.subr.mxu0 0.0
      %1119 = vmatpush1.msra.mxu0 0.0
      %1120 = vmatprep.subr.mxu0 0.0
      %1121 = vmatpush1.msra.mxu0 0.0
      %1122 = vmatprep.subr.mxu0 0.0
      %1123 = vmatpush1.msra.mxu0 0.0
      %1124 = vmatprep.subr.mxu0 0.0
      %1125 = vmatpush1.msra.mxu0 0.0
      %1126 = vmatprep.subr.mxu0 0.0
      %1127 = vmatpush1.msra.mxu0 0.0
      %1128 = vmatprep.subr.mxu0 0.0
      %1129 = vmatpush1.msra.mxu0 0.0
      %1130 = vmatprep.subr.mxu0 0.0
      %1131 = vmatpush1.msra.mxu0 0.0
      %1132 = vmatprep.subr.mxu0 0.0
      %1133 = vmatpush1.msra.mxu0 0.0
      %1134 = vmatprep.subr.mxu0 0.0
      %1135 = vmatpush1.msra.mxu0 %v1074
      %1136 = vmatprep.subr.mxu0 0.0
      %1137 = vmatpush1.msra.mxu0 %v1073
      %1138 = vmatprep.subr.mxu0 0.0
      %1139 = vmatpush1.msra.mxu0 %v1072
      %1140 = vmatprep.subr.mxu0 0.0
      %1141 = vmatpush1.msra.mxu0 %v1071
      %1142 = vmatprep.subr.mxu0 0.0
      %1143 = vmatpush2.msra.mxu0 0.0
      %1144 = vmatprep.subr.mxu0 0.0
      %1145 = vmatpush2.msra.mxu0 0.0
      %1146 = vmatprep.subr.mxu0 0.0
      %1147 = vmatpush2.msra.mxu0 0.0
      %1148 = vmatprep.subr.mxu0 0.0
      %1149 = vmatpush2.msra.mxu0 0.0
      %1150 = vmatprep.subr.mxu0 0.0
      %1151 = vmatpush2.msra.mxu0 0.0
      %1152 = vmatprep.subr.mxu0 0.0
      %1153 = vmatpush2.msra.mxu0 0.0
      %1154 = vmatprep.subr.mxu0 0.0
      %1155 = vmatpush2.msra.mxu0 0.0
      %1156 = vmatprep.subr.mxu0 0.0
      %1157 = vmatpush2.msra.mxu0 0.0
      %1158 = vmatprep.subr.mxu0 0.0
      %1159 = vmatpush2.msra.mxu0 0.0
      %1160 = vmatprep.subr.mxu0 0.0
      %1161 = vmatpush2.msra.mxu0 0.0
      %1162 = vmatprep.subr.mxu0 0.0
      %1163 = vmatpush2.msra.mxu0 0.0
      %1164 = vmatprep.subr.mxu0 0.0
      %1165 = vmatpush2.msra.mxu0 0.0
      %1166 = vmatprep.subr.mxu0 0.0
      %1167 = vmatpush2.msra.mxu0 0.0
      %1168 = vmatprep.subr.mxu0 0.0
      %1169 = vmatpush2.msra.mxu0 0.0
      %1170 = vmatprep.subr.mxu0 0.0
      %1171 = vmatpush2.msra.mxu0 0.0
      %1172 = vmatprep.subr.mxu0 0.0
      %1173 = vmatpush2.msra.mxu0 0.0
      %1174 = vmatprep.mubr.f32.mxu0 0.0
      %1175 = vmatmul.mubr.f32.gmra.mxu0 %v1108
      %v1176 = vpop.f32.mrf.mxu0
      %v1177 = vadd.f32 0.0, %v1176
      %v1178 = vpop.f32.mrf.mxu0
      %1179 = vdwg.mxu0
      %v1180 = vadd.f32 %v1101, %v1177
      %v1181 = vxor.u32 %v1180, 2147483648
      %v1182 = vmul.f32 %v1181, 1.442695
      %v1183 = vpow.pop %v1182
      %v1184 = vadd.f32 %v1183, 1.0
      %v1185 = vrcp.pop %v1184
      %v1186 = vmul.f32 1.0, %v1185
      %1187 = vmatprep.subr.mxu0 0.0
      %1188 = vmatpush1.msra.mxu0 0.0
      %1189 = vmatprep.subr.mxu0 0.0
      %1190 = vmatpush1.msra.mxu0 0.0
      %1191 = vmatprep.subr.mxu0 0.0
      %1192 = vmatpush1.msra.mxu0 0.0
      %1193 = vmatprep.subr.mxu0 0.0
      %1194 = vmatpush1.msra.mxu0 0.0
      %1195 = vmatprep.subr.mxu0 0.0
      %1196 = vmatpush1.msra.mxu0 0.0
      %1197 = vmatprep.subr.mxu0 0.0
      %1198 = vmatpush1.msra.mxu0 0.0
      %1199 = vmatprep.subr.mxu0 0.0
      %1200 = vmatpush1.msra.mxu0 0.0
      %1201 = vmatprep.subr.mxu0 0.0
      %1202 = vmatpush1.msra.mxu0 0.0
      %1203 = vmatprep.subr.mxu0 0.0
      %1204 = vmatpush1.msra.mxu0 0.0
      %1205 = vmatprep.subr.mxu0 0.0
      %1206 = vmatpush1.msra.mxu0 0.0
      %1207 = vmatprep.subr.mxu0 0.0
      %1208 = vmatpush1.msra.mxu0 0.0
      %1209 = vmatprep.subr.mxu0 0.0
      %1210 = vmatpush1.msra.mxu0 0.0
      %1211 = vmatprep.subr.mxu0 0.0
      %1212 = vmatpush1.msra.mxu0 %v1079
      %1213 = vmatprep.subr.mxu0 0.0
      %1214 = vmatpush1.msra.mxu0 %v1078
      %1215 = vmatprep.subr.mxu0 0.0
      %1216 = vmatpush1.msra.mxu0 %v1077
      %1217 = vmatprep.subr.mxu0 0.0
      %1218 = vmatpush1.msra.mxu0 %v1076
      %1219 = vmatprep.subr.mxu0 0.0
      %1220 = vmatpush2.msra.mxu0 0.0
      %1221 = vmatprep.subr.mxu0 0.0
      %1222 = vmatpush2.msra.mxu0 0.0
      %1223 = vmatprep.subr.mxu0 0.0
      %1224 = vmatpush2.msra.mxu0 0.0
      %1225 = vmatprep.subr.mxu0 0.0
      %1226 = vmatpush2.msra.mxu0 0.0
      %1227 = vmatprep.subr.mxu0 0.0
      %1228 = vmatpush2.msra.mxu0 0.0
      %1229 = vmatprep.subr.mxu0 0.0
      %1230 = vmatpush2.msra.mxu0 0.0
      %1231 = vmatprep.subr.mxu0 0.0
      %1232 = vmatpush2.msra.mxu0 0.0
      %1233 = vmatprep.subr.mxu0 0.0
      %1234 = vmatpush2.msra.mxu0 0.0
      %1235 = vmatprep.subr.mxu0 0.0
      %1236 = vmatpush2.msra.mxu0 0.0
      %1237 = vmatprep.subr.mxu0 0.0
      %1238 = vmatpush2.msra.mxu0 0.0
      %1239 = vmatprep.subr.mxu0 0.0
      %1240 = vmatpush2.msra.mxu0 0.0
      %1241 = vmatprep.subr.mxu0 0.0
      %1242 = vmatpush2.msra.mxu0 0.0
      %1243 = vmatprep.subr.mxu0 0.0
      %1244 = vmatpush2.msra.mxu0 0.0
      %1245 = vmatprep.subr.mxu0 0.0
      %1246 = vmatpush2.msra.mxu0 0.0
      %1247 = vmatprep.subr.mxu0 0.0
      %1248 = vmatpush2.msra.mxu0 0.0
      %1249 = vmatprep.subr.mxu0 0.0
      %1250 = vmatpush2.msra.mxu0 0.0
      %1251 = vmatprep.mubr.f32.mxu0 0.0
      %1252 = vmatmul.mubr.f32.gmra.mxu0 %v1108
      %v1253 = vpop.f32.mrf.mxu0
      %v1254 = vadd.f32 0.0, %v1253
      %v1255 = vpop.f32.mrf.mxu0
      %1256 = vdwg.mxu0
      %v1257 = vadd.f32 %v1103, %v1254
      %v1258 = vxor.u32 %v1257, 2147483648
      %v1259 = vmul.f32 %v1258, 1.442695
      %v1260 = vpow.pop %v1259
      %v1261 = vadd.f32 %v1260, 1.0
      %v1262 = vrcp.pop %v1261
      %v1263 = vmul.f32 1.0, %v1262
      %1264 = vmatprep.subr.mxu0 0.0
      %1265 = vmatpush1.msra.mxu0 0.0
      %1266 = vmatprep.subr.mxu0 0.0
      %1267 = vmatpush1.msra.mxu0 0.0
      %1268 = vmatprep.subr.mxu0 0.0
      %1269 = vmatpush1.msra.mxu0 0.0
      %1270 = vmatprep.subr.mxu0 0.0
      %1271 = vmatpush1.msra.mxu0 0.0
      %1272 = vmatprep.subr.mxu0 0.0
      %1273 = vmatpush1.msra.mxu0 0.0
      %1274 = vmatprep.subr.mxu0 0.0
      %1275 = vmatpush1.msra.mxu0 0.0
      %1276 = vmatprep.subr.mxu0 0.0
      %1277 = vmatpush1.msra.mxu0 0.0
      %1278 = vmatprep.subr.mxu0 0.0
      %1279 = vmatpush1.msra.mxu0 0.0
      %1280 = vmatprep.subr.mxu0 0.0
      %1281 = vmatpush1.msra.mxu0 0.0
      %1282 = vmatprep.subr.mxu0 0.0
      %1283 = vmatpush1.msra.mxu0 0.0
      %1284 = vmatprep.subr.mxu0 0.0
      %1285 = vmatpush1.msra.mxu0 0.0
      %1286 = vmatprep.subr.mxu0 0.0
      %1287 = vmatpush1.msra.mxu0 0.0
      %1288 = vmatprep.subr.mxu0 0.0
      %1289 = vmatpush1.msra.mxu0 %v1084
      %1290 = vmatprep.subr.mxu0 0.0
      %1291 = vmatpush1.msra.mxu0 %v1083
      %1292 = vmatprep.subr.mxu0 0.0
      %1293 = vmatpush1.msra.mxu0 %v1082
      %1294 = vmatprep.subr.mxu0 0.0
      %1295 = vmatpush1.msra.mxu0 %v1081
      %1296 = vmatprep.subr.mxu0 0.0
      %1297 = vmatpush2.msra.mxu0 0.0
      %1298 = vmatprep.subr.mxu0 0.0
      %1299 = vmatpush2.msra.mxu0 0.0
      %1300 = vmatprep.subr.mxu0 0.0
      %1301 = vmatpush2.msra.mxu0 0.0
      %1302 = vmatprep.subr.mxu0 0.0
      %1303 = vmatpush2.msra.mxu0 0.0
      %1304 = vmatprep.subr.mxu0 0.0
      %1305 = vmatpush2.msra.mxu0 0.0
      %1306 = vmatprep.subr.mxu0 0.0
      %1307 = vmatpush2.msra.mxu0 0.0
      %1308 = vmatprep.subr.mxu0 0.0
      %1309 = vmatpush2.msra.mxu0 0.0
      %1310 = vmatprep.subr.mxu0 0.0
      %1311 = vmatpush2.msra.mxu0 0.0
      %1312 = vmatprep.subr.mxu0 0.0
      %1313 = vmatpush2.msra.mxu0 0.0
      %1314 = vmatprep.subr.mxu0 0.0
      %1315 = vmatpush2.msra.mxu0 0.0
      %1316 = vmatprep.subr.mxu0 0.0
      %1317 = vmatpush2.msra.mxu0 0.0
      %1318 = vmatprep.subr.mxu0 0.0
      %1319 = vmatpush2.msra.mxu0 0.0
      %1320 = vmatprep.subr.mxu0 0.0
      %1321 = vmatpush2.msra.mxu0 0.0
      %1322 = vmatprep.subr.mxu0 0.0
      %1323 = vmatpush2.msra.mxu0 0.0
      %1324 = vmatprep.subr.mxu0 0.0
      %1325 = vmatpush2.msra.mxu0 0.0
      %1326 = vmatprep.subr.mxu0 0.0
      %1327 = vmatpush2.msra.mxu0 0.0
      %1328 = vmatprep.mubr.f32.mxu0 0.0
      %1329 = vmatmul.mubr.f32.gmra.mxu0 %v1108
      %v1330 = vpop.f32.mrf.mxu0
      %v1331 = vadd.f32 %v1090, %v1330
      %v1332 = vpop.f32.mrf.mxu0
      %1333 = vdwg.mxu0
      %v1334 = vmul.f32 %v1186, %v1331
      %v1335 = vadd.f32 %v1105, %v1334
      %v1336 = vtanh.pop %v1335
      %v1337 = vsub.f32 1.0, %v1263
      %v1338 = vmul.f32 %v1337, %v1336
      %v1340 = vmul.f32 %v1263, %v1107
      %v1341 = vadd.f32 %v1338, %v1340
      %v1343 = vsel %vm446, %v1341, 0
      %1345 = vmatprep.subr.mxu0 0.0
      %1346 = vmatpush1.msra.mxu0 0.0
      %1347 = vmatprep.subr.mxu0 0.0
      %1348 = vmatpush1.msra.mxu0 0.0
      %1349 = vmatprep.subr.mxu0 0.0
      %1350 = vmatpush1.msra.mxu0 0.0
      %1351 = vmatprep.subr.mxu0 0.0
      %1352 = vmatpush1.msra.mxu0 0.0
      %1353 = vmatprep.subr.mxu0 0.0
      %1354 = vmatpush1.msra.mxu0 0.0
      %1355 = vmatprep.subr.mxu0 0.0
      %1356 = vmatpush1.msra.mxu0 0.0
      %1357 = vmatprep.subr.mxu0 0.0
      %1358 = vmatpush1.msra.mxu0 0.0
      %1359 = vmatprep.subr.mxu0 0.0
      %1360 = vmatpush1.msra.mxu0 0.0
      %1361 = vmatprep.subr.mxu0 0.0
      %1362 = vmatpush1.msra.mxu0 0.0
      %1363 = vmatprep.subr.mxu0 0.0
      %1364 = vmatpush1.msra.mxu0 0.0
      %1365 = vmatprep.subr.mxu0 0.0
      %1366 = vmatpush1.msra.mxu0 0.0
      %1367 = vmatprep.subr.mxu0 0.0
      %1368 = vmatpush1.msra.mxu0 0.0
      %1369 = vmatprep.subr.mxu0 0.0
      %1370 = vmatpush1.msra.mxu0 %v1074
      %1371 = vmatprep.subr.mxu0 0.0
      %1372 = vmatpush1.msra.mxu0 %v1073
      %1373 = vmatprep.subr.mxu0 0.0
      %1374 = vmatpush1.msra.mxu0 %v1072
      %1375 = vmatprep.subr.mxu0 0.0
      %1376 = vmatpush1.msra.mxu0 %v1071
      %1377 = vmatprep.subr.mxu0 0.0
      %1378 = vmatpush2.msra.mxu0 0.0
      %1379 = vmatprep.subr.mxu0 0.0
      %1380 = vmatpush2.msra.mxu0 0.0
      %1381 = vmatprep.subr.mxu0 0.0
      %1382 = vmatpush2.msra.mxu0 0.0
      %1383 = vmatprep.subr.mxu0 0.0
      %1384 = vmatpush2.msra.mxu0 0.0
      %1385 = vmatprep.subr.mxu0 0.0
      %1386 = vmatpush2.msra.mxu0 0.0
      %1387 = vmatprep.subr.mxu0 0.0
      %1388 = vmatpush2.msra.mxu0 0.0
      %1389 = vmatprep.subr.mxu0 0.0
      %1390 = vmatpush2.msra.mxu0 0.0
      %1391 = vmatprep.subr.mxu0 0.0
      %1392 = vmatpush2.msra.mxu0 0.0
      %1393 = vmatprep.subr.mxu0 0.0
      %1394 = vmatpush2.msra.mxu0 0.0
      %1395 = vmatprep.subr.mxu0 0.0
      %1396 = vmatpush2.msra.mxu0 0.0
      %1397 = vmatprep.subr.mxu0 0.0
      %1398 = vmatpush2.msra.mxu0 0.0
      %1399 = vmatprep.subr.mxu0 0.0
      %1400 = vmatpush2.msra.mxu0 0.0
      %1401 = vmatprep.subr.mxu0 0.0
      %1402 = vmatpush2.msra.mxu0 0.0
      %1403 = vmatprep.subr.mxu0 0.0
      %1404 = vmatpush2.msra.mxu0 0.0
      %1405 = vmatprep.subr.mxu0 0.0
      %1406 = vmatpush2.msra.mxu0 0.0
      %1407 = vmatprep.subr.mxu0 0.0
      %1408 = vmatpush2.msra.mxu0 0.0
      %1409 = vmatprep.mubr.f32.mxu0 0.0
      %1410 = vmatmul.mubr.f32.gmra.mxu0 %v1343
      %v1411 = vpop.f32.mrf.mxu0
      %v1412 = vadd.f32 0.0, %v1411
      %v1413 = vpop.f32.mrf.mxu0
      %1414 = vdwg.mxu0
      %v1416 = vrot.slane %v1412, 6
      %v1418 = vadd.f32 %v1101, %v1416
      %v1419 = vxor.u32 %v1418, 2147483648
      %v1420 = vmul.f32 %v1419, 1.442695
      %v1421 = vpow.pop %v1420
      %v1422 = vadd.f32 %v1421, 1.0
      %v1423 = vrcp.pop %v1422
      %v1424 = vmul.f32 1.0, %v1423
      %1425 = vmatprep.subr.mxu0 0.0
      %1426 = vmatpush1.msra.mxu0 0.0
      %1427 = vmatprep.subr.mxu0 0.0
      %1428 = vmatpush1.msra.mxu0 0.0
      %1429 = vmatprep.subr.mxu0 0.0
      %1430 = vmatpush1.msra.mxu0 0.0
      %1431 = vmatprep.subr.mxu0 0.0
      %1432 = vmatpush1.msra.mxu0 0.0
      %1433 = vmatprep.subr.mxu0 0.0
      %1434 = vmatpush1.msra.mxu0 0.0
      %1435 = vmatprep.subr.mxu0 0.0
      %1436 = vmatpush1.msra.mxu0 0.0
      %1437 = vmatprep.subr.mxu0 0.0
      %1438 = vmatpush1.msra.mxu0 0.0
      %1439 = vmatprep.subr.mxu0 0.0
      %1440 = vmatpush1.msra.mxu0 0.0
      %1441 = vmatprep.subr.mxu0 0.0
      %1442 = vmatpush1.msra.mxu0 0.0
      %1443 = vmatprep.subr.mxu0 0.0
      %1444 = vmatpush1.msra.mxu0 0.0
      %1445 = vmatprep.subr.mxu0 0.0
      %1446 = vmatpush1.msra.mxu0 0.0
      %1447 = vmatprep.subr.mxu0 0.0
      %1448 = vmatpush1.msra.mxu0 0.0
      %1449 = vmatprep.subr.mxu0 0.0
      %1450 = vmatpush1.msra.mxu0 %v1079
      %1451 = vmatprep.subr.mxu0 0.0
      %1452 = vmatpush1.msra.mxu0 %v1078
      %1453 = vmatprep.subr.mxu0 0.0
      %1454 = vmatpush1.msra.mxu0 %v1077
      %1455 = vmatprep.subr.mxu0 0.0
      %1456 = vmatpush1.msra.mxu0 %v1076
      %1457 = vmatprep.subr.mxu0 0.0
      %1458 = vmatpush2.msra.mxu0 0.0
      %1459 = vmatprep.subr.mxu0 0.0
      %1460 = vmatpush2.msra.mxu0 0.0
      %1461 = vmatprep.subr.mxu0 0.0
      %1462 = vmatpush2.msra.mxu0 0.0
      %1463 = vmatprep.subr.mxu0 0.0
      %1464 = vmatpush2.msra.mxu0 0.0
      %1465 = vmatprep.subr.mxu0 0.0
      %1466 = vmatpush2.msra.mxu0 0.0
      %1467 = vmatprep.subr.mxu0 0.0
      %1468 = vmatpush2.msra.mxu0 0.0
      %1469 = vmatprep.subr.mxu0 0.0
      %1470 = vmatpush2.msra.mxu0 0.0
      %1471 = vmatprep.subr.mxu0 0.0
      %1472 = vmatpush2.msra.mxu0 0.0
      %1473 = vmatprep.subr.mxu0 0.0
      %1474 = vmatpush2.msra.mxu0 0.0
      %1475 = vmatprep.subr.mxu0 0.0
      %1476 = vmatpush2.msra.mxu0 0.0
      %1477 = vmatprep.subr.mxu0 0.0
      %1478 = vmatpush2.msra.mxu0 0.0
      %1479 = vmatprep.subr.mxu0 0.0
      %1480 = vmatpush2.msra.mxu0 0.0
      %1481 = vmatprep.subr.mxu0 0.0
      %1482 = vmatpush2.msra.mxu0 0.0
      %1483 = vmatprep.subr.mxu0 0.0
      %1484 = vmatpush2.msra.mxu0 0.0
      %1485 = vmatprep.subr.mxu0 0.0
      %1486 = vmatpush2.msra.mxu0 0.0
      %1487 = vmatprep.subr.mxu0 0.0
      %1488 = vmatpush2.msra.mxu0 0.0
      %1489 = vmatprep.mubr.f32.mxu0 0.0
      %1490 = vmatmul.mubr.f32.gmra.mxu0 %v1343
      %v1491 = vpop.f32.mrf.mxu0
      %v1492 = vadd.f32 0.0, %v1491
      %v1493 = vpop.f32.mrf.mxu0
      %1494 = vdwg.mxu0
      %v1496 = vrot.slane %v1492, 6
      %v1498 = vadd.f32 %v1103, %v1496
      %v1499 = vxor.u32 %v1498, 2147483648
      %v1500 = vmul.f32 %v1499, 1.442695
      %v1501 = vpow.pop %v1500
      %v1502 = vadd.f32 %v1501, 1.0
      %v1503 = vrcp.pop %v1502
      %v1504 = vmul.f32 1.0, %v1503
      %1505 = vmatprep.subr.mxu0 0.0
      %1506 = vmatpush1.msra.mxu0 0.0
      %1507 = vmatprep.subr.mxu0 0.0
      %1508 = vmatpush1.msra.mxu0 0.0
      %1509 = vmatprep.subr.mxu0 0.0
      %1510 = vmatpush1.msra.mxu0 0.0
      %1511 = vmatprep.subr.mxu0 0.0
      %1512 = vmatpush1.msra.mxu0 0.0
      %1513 = vmatprep.subr.mxu0 0.0
      %1514 = vmatpush1.msra.mxu0 0.0
      %1515 = vmatprep.subr.mxu0 0.0
      %1516 = vmatpush1.msra.mxu0 0.0
      %1517 = vmatprep.subr.mxu0 0.0
      %1518 = vmatpush1.msra.mxu0 0.0
      %1519 = vmatprep.subr.mxu0 0.0
      %1520 = vmatpush1.msra.mxu0 0.0
      %1521 = vmatprep.subr.mxu0 0.0
      %1522 = vmatpush1.msra.mxu0 0.0
      %1523 = vmatprep.subr.mxu0 0.0
      %1524 = vmatpush1.msra.mxu0 0.0
      %1525 = vmatprep.subr.mxu0 0.0
      %1526 = vmatpush1.msra.mxu0 0.0
      %1527 = vmatprep.subr.mxu0 0.0
      %1528 = vmatpush1.msra.mxu0 0.0
      %1529 = vmatprep.subr.mxu0 0.0
      %1530 = vmatpush1.msra.mxu0 %v1084
      %1531 = vmatprep.subr.mxu0 0.0
      %1532 = vmatpush1.msra.mxu0 %v1083
      %1533 = vmatprep.subr.mxu0 0.0
      %1534 = vmatpush1.msra.mxu0 %v1082
      %1535 = vmatprep.subr.mxu0 0.0
      %1536 = vmatpush1.msra.mxu0 %v1081
      %1537 = vmatprep.subr.mxu0 0.0
      %1538 = vmatpush2.msra.mxu0 0.0
      %1539 = vmatprep.subr.mxu0 0.0
      %1540 = vmatpush2.msra.mxu0 0.0
      %1541 = vmatprep.subr.mxu0 0.0
      %1542 = vmatpush2.msra.mxu0 0.0
      %1543 = vmatprep.subr.mxu0 0.0
      %1544 = vmatpush2.msra.mxu0 0.0
      %1545 = vmatprep.subr.mxu0 0.0
      %1546 = vmatpush2.msra.mxu0 0.0
      %1547 = vmatprep.subr.mxu0 0.0
      %1548 = vmatpush2.msra.mxu0 0.0
      %1549 = vmatprep.subr.mxu0 0.0
      %1550 = vmatpush2.msra.mxu0 0.0
      %1551 = vmatprep.subr.mxu0 0.0
      %1552 = vmatpush2.msra.mxu0 0.0
      %1553 = vmatprep.subr.mxu0 0.0
      %1554 = vmatpush2.msra.mxu0 0.0
      %1555 = vmatprep.subr.mxu0 0.0
      %1556 = vmatpush2.msra.mxu0 0.0
      %1557 = vmatprep.subr.mxu0 0.0
      %1558 = vmatpush2.msra.mxu0 0.0
      %1559 = vmatprep.subr.mxu0 0.0
      %1560 = vmatpush2.msra.mxu0 0.0
      %1561 = vmatprep.subr.mxu0 0.0
      %1562 = vmatpush2.msra.mxu0 0.0
      %1563 = vmatprep.subr.mxu0 0.0
      %1564 = vmatpush2.msra.mxu0 0.0
      %1565 = vmatprep.subr.mxu0 0.0
      %1566 = vmatpush2.msra.mxu0 0.0
      %1567 = vmatprep.subr.mxu0 0.0
      %1568 = vmatpush2.msra.mxu0 0.0
      %1569 = vmatprep.mubr.f32.mxu0 0.0
      %1570 = vmatmul.mubr.f32.gmra.mxu0 %v1343
      %v1571 = vpop.f32.mrf.mxu0
      %v1572 = vadd.f32 %v1090, %v1571
      %v1573 = vpop.f32.mrf.mxu0
      %1574 = vdwg.mxu0
      %v1576 = vrot.slane %v1572, 6
      %v1578 = vmul.f32 %v1424, %v1576
      %v1579 = vadd.f32 %v1105, %v1578
      %v1580 = vtanh.pop %v1579
      %v1581 = vsub.f32 1.0, %v1504
      %v1582 = vmul.f32 %v1581, %v1580
      %v1583 = vrot.slane %v1341, 6
      %v1585 = vmul.f32 %v1504, %v1583
      %v1586 = vadd.f32 %v1582, %v1585
      %v1588 = vrot.slane %v1586, 2
      %v1589 = vsel %vm446, %v1588, 0
      %1591 = vmatprep.subr.mxu0 0.0
      %1592 = vmatpush1.msra.mxu0 0.0
      %1593 = vmatprep.subr.mxu0 0.0
      %1594 = vmatpush1.msra.mxu0 0.0
      %1595 = vmatprep.subr.mxu0 0.0
      %1596 = vmatpush1.msra.mxu0 0.0
      %1597 = vmatprep.subr.mxu0 0.0
      %1598 = vmatpush1.msra.mxu0 0.0
      %1599 = vmatprep.subr.mxu0 0.0
      %1600 = vmatpush1.msra.mxu0 0.0
      %1601 = vmatprep.subr.mxu0 0.0
      %1602 = vmatpush1.msra.mxu0 0.0
      %1603 = vmatprep.subr.mxu0 0.0
      %1604 = vmatpush1.msra.mxu0 0.0
      %1605 = vmatprep.subr.mxu0 0.0
      %1606 = vmatpush1.msra.mxu0 0.0
      %1607 = vmatprep.subr.mxu0 0.0
      %1608 = vmatpush1.msra.mxu0 0.0
      %1609 = vmatprep.subr.mxu0 0.0
      %1610 = vmatpush1.msra.mxu0 0.0
      %1611 = vmatprep.subr.mxu0 0.0
      %1612 = vmatpush1.msra.mxu0 0.0
      %1613 = vmatprep.subr.mxu0 0.0
      %1614 = vmatpush1.msra.mxu0 0.0
      %1615 = vmatprep.subr.mxu0 0.0
      %1616 = vmatpush1.msra.mxu0 %v1074
      %1617 = vmatprep.subr.mxu0 0.0
      %1618 = vmatpush1.msra.mxu0 %v1073
      %1619 = vmatprep.subr.mxu0 0.0
      %1620 = vmatpush1.msra.mxu0 %v1072
      %1621 = vmatprep.subr.mxu0 0.0
      %1622 = vmatpush1.msra.mxu0 %v1071
      %1623 = vmatprep.subr.mxu0 0.0
      %1624 = vmatpush2.msra.mxu0 0.0
      %1625 = vmatprep.subr.mxu0 0.0
      %1626 = vmatpush2.msra.mxu0 0.0
      %1627 = vmatprep.subr.mxu0 0.0
      %1628 = vmatpush2.msra.mxu0 0.0
      %1629 = vmatprep.subr.mxu0 0.0
      %1630 = vmatpush2.msra.mxu0 0.0
      %1631 = vmatprep.subr.mxu0 0.0
      %1632 = vmatpush2.msra.mxu0 0.0
      %1633 = vmatprep.subr.mxu0 0.0
      %1634 = vmatpush2.msra.mxu0 0.0
      %1635 = vmatprep.subr.mxu0 0.0
      %1636 = vmatpush2.msra.mxu0 0.0
      %1637 = vmatprep.subr.mxu0 0.0
      %1638 = vmatpush2.msra.mxu0 0.0
      %1639 = vmatprep.subr.mxu0 0.0
      %1640 = vmatpush2.msra.mxu0 0.0
      %1641 = vmatprep.subr.mxu0 0.0
      %1642 = vmatpush2.msra.mxu0 0.0
      %1643 = vmatprep.subr.mxu0 0.0
      %1644 = vmatpush2.msra.mxu0 0.0
      %1645 = vmatprep.subr.mxu0 0.0
      %1646 = vmatpush2.msra.mxu0 0.0
      %1647 = vmatprep.subr.mxu0 0.0
      %1648 = vmatpush2.msra.mxu0 0.0
      %1649 = vmatprep.subr.mxu0 0.0
      %1650 = vmatpush2.msra.mxu0 0.0
      %1651 = vmatprep.subr.mxu0 0.0
      %1652 = vmatpush2.msra.mxu0 0.0
      %1653 = vmatprep.subr.mxu0 0.0
      %1654 = vmatpush2.msra.mxu0 0.0
      %1655 = vmatprep.mubr.f32.mxu0 0.0
      %1656 = vmatmul.mubr.f32.gmra.mxu0 %v1589
      %v1657 = vpop.f32.mrf.mxu0
      %v1658 = vadd.f32 0.0, %v1657
      %v1659 = vpop.f32.mrf.mxu0
      %1660 = vdwg.mxu0
      %v1662 = vrot.slane %v1658, 4
      %v1664 = vadd.f32 %v1101, %v1662
      %v1665 = vxor.u32 %v1664, 2147483648
      %v1666 = vmul.f32 %v1665, 1.442695
      %v1667 = vpow.pop %v1666
      %v1668 = vadd.f32 %v1667, 1.0
      %v1669 = vrcp.pop %v1668
      %v1670 = vmul.f32 1.0, %v1669
      %1671 = vmatprep.subr.mxu0 0.0
      %1672 = vmatpush1.msra.mxu0 0.0
      %1673 = vmatprep.subr.mxu0 0.0
      %1674 = vmatpush1.msra.mxu0 0.0
      %1675 = vmatprep.subr.mxu0 0.0
      %1676 = vmatpush1.msra.mxu0 0.0
      %1677 = vmatprep.subr.mxu0 0.0
      %1678 = vmatpush1.msra.mxu0 0.0
      %1679 = vmatprep.subr.mxu0 0.0
      %1680 = vmatpush1.msra.mxu0 0.0
      %1681 = vmatprep.subr.mxu0 0.0
      %1682 = vmatpush1.msra.mxu0 0.0
      %1683 = vmatprep.subr.mxu0 0.0
      %1684 = vmatpush1.msra.mxu0 0.0
      %1685 = vmatprep.subr.mxu0 0.0
      %1686 = vmatpush1.msra.mxu0 0.0
      %1687 = vmatprep.subr.mxu0 0.0
      %1688 = vmatpush1.msra.mxu0 0.0
      %1689 = vmatprep.subr.mxu0 0.0
      %1690 = vmatpush1.msra.mxu0 0.0
      %1691 = vmatprep.subr.mxu0 0.0
      %1692 = vmatpush1.msra.mxu0 0.0
      %1693 = vmatprep.subr.mxu0 0.0
      %1694 = vmatpush1.msra.mxu0 0.0
      %1695 = vmatprep.subr.mxu0 0.0
      %1696 = vmatpush1.msra.mxu0 %v1079
      %1697 = vmatprep.subr.mxu0 0.0
      %1698 = vmatpush1.msra.mxu0 %v1078
      %1699 = vmatprep.subr.mxu0 0.0
      %1700 = vmatpush1.msra.mxu0 %v1077
      %1701 = vmatprep.subr.mxu0 0.0
      %1702 = vmatpush1.msra.mxu0 %v1076
      %1703 = vmatprep.subr.mxu0 0.0
      %1704 = vmatpush2.msra.mxu0 0.0
      %1705 = vmatprep.subr.mxu0 0.0
      %1706 = vmatpush2.msra.mxu0 0.0
      %1707 = vmatprep.subr.mxu0 0.0
      %1708 = vmatpush2.msra.mxu0 0.0
      %1709 = vmatprep.subr.mxu0 0.0
      %1710 = vmatpush2.msra.mxu0 0.0
      %1711 = vmatprep.subr.mxu0 0.0
      %1712 = vmatpush2.msra.mxu0 0.0
      %1713 = vmatprep.subr.mxu0 0.0
      %1714 = vmatpush2.msra.mxu0 0.0
      %1715 = vmatprep.subr.mxu0 0.0
      %1716 = vmatpush2.msra.mxu0 0.0
      %1717 = vmatprep.subr.mxu0 0.0
      %1718 = vmatpush2.msra.mxu0 0.0
      %1719 = vmatprep.subr.mxu0 0.0
      %1720 = vmatpush2.msra.mxu0 0.0
      %1721 = vmatprep.subr.mxu0 0.0
      %1722 = vmatpush2.msra.mxu0 0.0
      %1723 = vmatprep.subr.mxu0 0.0
      %1724 = vmatpush2.msra.mxu0 0.0
      %1725 = vmatprep.subr.mxu0 0.0
      %1726 = vmatpush2.msra.mxu0 0.0
      %1727 = vmatprep.subr.mxu0 0.0
      %1728 = vmatpush2.msra.mxu0 0.0
      %1729 = vmatprep.subr.mxu0 0.0
      %1730 = vmatpush2.msra.mxu0 0.0
      %1731 = vmatprep.subr.mxu0 0.0
      %1732 = vmatpush2.msra.mxu0 0.0
      %1733 = vmatprep.subr.mxu0 0.0
      %1734 = vmatpush2.msra.mxu0 0.0
      %1735 = vmatprep.mubr.f32.mxu0 0.0
      %1736 = vmatmul.mubr.f32.gmra.mxu0 %v1589
      %v1737 = vpop.f32.mrf.mxu0
      %v1738 = vadd.f32 0.0, %v1737
      %v1739 = vpop.f32.mrf.mxu0
      %1740 = vdwg.mxu0
      %v1742 = vrot.slane %v1738, 4
      %v1744 = vadd.f32 %v1103, %v1742
      %v1745 = vxor.u32 %v1744, 2147483648
      %v1746 = vmul.f32 %v1745, 1.442695
      %v1747 = vpow.pop %v1746
      %v1748 = vadd.f32 %v1747, 1.0
      %v1749 = vrcp.pop %v1748
      %v1750 = vmul.f32 1.0, %v1749
      %1751 = vmatprep.subr.mxu0 0.0
      %1752 = vmatpush1.msra.mxu0 0.0
      %1753 = vmatprep.subr.mxu0 0.0
      %1754 = vmatpush1.msra.mxu0 0.0
      %1755 = vmatprep.subr.mxu0 0.0
      %1756 = vmatpush1.msra.mxu0 0.0
      %1757 = vmatprep.subr.mxu0 0.0
      %1758 = vmatpush1.msra.mxu0 0.0
      %1759 = vmatprep.subr.mxu0 0.0
      %1760 = vmatpush1.msra.mxu0 0.0
      %1761 = vmatprep.subr.mxu0 0.0
      %1762 = vmatpush1.msra.mxu0 0.0
      %1763 = vmatprep.subr.mxu0 0.0
      %1764 = vmatpush1.msra.mxu0 0.0
      %1765 = vmatprep.subr.mxu0 0.0
      %1766 = vmatpush1.msra.mxu0 0.0
      %1767 = vmatprep.subr.mxu0 0.0
      %1768 = vmatpush1.msra.mxu0 0.0
      %1769 = vmatprep.subr.mxu0 0.0
      %1770 = vmatpush1.msra.mxu0 0.0
      %1771 = vmatprep.subr.mxu0 0.0
      %1772 = vmatpush1.msra.mxu0 0.0
      %1773 = vmatprep.subr.mxu0 0.0
      %1774 = vmatpush1.msra.mxu0 0.0
      %1775 = vmatprep.subr.mxu0 0.0
      %1776 = vmatpush1.msra.mxu0 %v1084
      %1777 = vmatprep.subr.mxu0 0.0
      %1778 = vmatpush1.msra.mxu0 %v1083
      %1779 = vmatprep.subr.mxu0 0.0
      %1780 = vmatpush1.msra.mxu0 %v1082
      %1781 = vmatprep.subr.mxu0 0.0
      %1782 = vmatpush1.msra.mxu0 %v1081
      %1783 = vmatprep.subr.mxu0 0.0
      %1784 = vmatpush2.msra.mxu0 0.0
      %1785 = vmatprep.subr.mxu0 0.0
      %1786 = vmatpush2.msra.mxu0 0.0
      %1787 = vmatprep.subr.mxu0 0.0
      %1788 = vmatpush2.msra.mxu0 0.0
      %1789 = vmatprep.subr.mxu0 0.0
      %1790 = vmatpush2.msra.mxu0 0.0
      %1791 = vmatprep.subr.mxu0 0.0
      %1792 = vmatpush2.msra.mxu0 0.0
      %1793 = vmatprep.subr.mxu0 0.0
      %1794 = vmatpush2.msra.mxu0 0.0
      %1795 = vmatprep.subr.mxu0 0.0
      %1796 = vmatpush2.msra.mxu0 0.0
      %1797 = vmatprep.subr.mxu0 0.0
      %1798 = vmatpush2.msra.mxu0 0.0
      %1799 = vmatprep.subr.mxu0 0.0
      %1800 = vmatpush2.msra.mxu0 0.0
      %1801 = vmatprep.subr.mxu0 0.0
      %1802 = vmatpush2.msra.mxu0 0.0
      %1803 = vmatprep.subr.mxu0 0.0
      %1804 = vmatpush2.msra.mxu0 0.0
      %1805 = vmatprep.subr.mxu0 0.0
      %1806 = vmatpush2.msra.mxu0 0.0
      %1807 = vmatprep.subr.mxu0 0.0
      %1808 = vmatpush2.msra.mxu0 0.0
      %1809 = vmatprep.subr.mxu0 0.0
      %1810 = vmatpush2.msra.mxu0 0.0
      %1811 = vmatprep.subr.mxu0 0.0
      %1812 = vmatpush2.msra.mxu0 0.0
      %1813 = vmatprep.subr.mxu0 0.0
      %1814 = vmatpush2.msra.mxu0 0.0
      %1815 = vmatprep.mubr.f32.mxu0 0.0
      %1816 = vmatmul.mubr.f32.gmra.mxu0 %v1589
      %v1817 = vpop.f32.mrf.mxu0
      %v1818 = vadd.f32 %v1090, %v1817
      %v1819 = vpop.f32.mrf.mxu0
      %1820 = vdwg.mxu0
      %v1822 = vrot.slane %v1818, 4
      %v1824 = vmul.f32 %v1670, %v1822
      %v1825 = vadd.f32 %v1105, %v1824
      %v1826 = vtanh.pop %v1825
      %v1827 = vsub.f32 1.0, %v1750
      %v1828 = vmul.f32 %v1827, %v1826
      %v1829 = vrot.slane %v1586, 6
      %v1831 = vmul.f32 %v1750, %v1829
      %v1832 = vadd.f32 %v1828, %v1831
      %v1834 = vrot.slane %v1832, 4
      %v1835 = vsel %vm446, %v1834, 0
      %1837 = vmatprep.subr.mxu0 0.0
      %1838 = vmatpush1.msra.mxu0 0.0
      %1839 = vmatprep.subr.mxu0 0.0
      %1840 = vmatpush1.msra.mxu0 0.0
      %1841 = vmatprep.subr.mxu0 0.0
      %1842 = vmatpush1.msra.mxu0 0.0
      %1843 = vmatprep.subr.mxu0 0.0
      %1844 = vmatpush1.msra.mxu0 0.0
      %1845 = vmatprep.subr.mxu0 0.0
      %1846 = vmatpush1.msra.mxu0 0.0
      %1847 = vmatprep.subr.mxu0 0.0
      %1848 = vmatpush1.msra.mxu0 0.0
      %1849 = vmatprep.subr.mxu0 0.0
      %1850 = vmatpush1.msra.mxu0 0.0
      %1851 = vmatprep.subr.mxu0 0.0
      %1852 = vmatpush1.msra.mxu0 0.0
      %1853 = vmatprep.subr.mxu0 0.0
      %1854 = vmatpush1.msra.mxu0 0.0
      %1855 = vmatprep.subr.mxu0 0.0
      %1856 = vmatpush1.msra.mxu0 0.0
      %1857 = vmatprep.subr.mxu0 0.0
      %1858 = vmatpush1.msra.mxu0 0.0
      %1859 = vmatprep.subr.mxu0 0.0
      %1860 = vmatpush1.msra.mxu0 0.0
      %1861 = vmatprep.subr.mxu0 0.0
      %1862 = vmatpush1.msra.mxu0 %v1074
      %1863 = vmatprep.subr.mxu0 0.0
      %1864 = vmatpush1.msra.mxu0 %v1073
      %1865 = vmatprep.subr.mxu0 0.0
      %1866 = vmatpush1.msra.mxu0 %v1072
      %1867 = vmatprep.subr.mxu0 0.0
      %1868 = vmatpush1.msra.mxu0 %v1071
      %1869 = vmatprep.subr.mxu0 0.0
      %1870 = vmatpush2.msra.mxu0 0.0
      %1871 = vmatprep.subr.mxu0 0.0
      %1872 = vmatpush2.msra.mxu0 0.0
      %1873 = vmatprep.subr.mxu0 0.0
      %1874 = vmatpush2.msra.mxu0 0.0
      %1875 = vmatprep.subr.mxu0 0.0
      %1876 = vmatpush2.msra.mxu0 0.0
      %1877 = vmatprep.subr.mxu0 0.0
      %1878 = vmatpush2.msra.mxu0 0.0
      %1879 = vmatprep.subr.mxu0 0.0
      %1880 = vmatpush2.msra.mxu0 0.0
      %1881 = vmatprep.subr.mxu0 0.0
      %1882 = vmatpush2.msra.mxu0 0.0
      %1883 = vmatprep.subr.mxu0 0.0
      %1884 = vmatpush2.msra.mxu0 0.0
      %1885 = vmatprep.subr.mxu0 0.0
      %1886 = vmatpush2.msra.mxu0 0.0
      %1887 = vmatprep.subr.mxu0 0.0
      %1888 = vmatpush2.msra.mxu0 0.0
      %1889 = vmatprep.subr.mxu0 0.0
      %1890 = vmatpush2.msra.mxu0 0.0
      %1891 = vmatprep.subr.mxu0 0.0
      %1892 = vmatpush2.msra.mxu0 0.0
      %1893 = vmatprep.subr.mxu0 0.0
      %1894 = vmatpush2.msra.mxu0 0.0
      %1895 = vmatprep.subr.mxu0 0.0
      %1896 = vmatpush2.msra.mxu0 0.0
      %1897 = vmatprep.subr.mxu0 0.0
      %1898 = vmatpush2.msra.mxu0 0.0
      %1899 = vmatprep.subr.mxu0 0.0
      %1900 = vmatpush2.msra.mxu0 0.0
      %1901 = vmatprep.mubr.f32.mxu0 0.0
      %1902 = vmatmul.mubr.f32.gmra.mxu0 %v1835
      %v1903 = vpop.f32.mrf.mxu0
      %v1904 = vadd.f32 0.0, %v1903
      %v1905 = vpop.f32.mrf.mxu0
      %1906 = vdwg.mxu0
      %v1908 = vrot.slane %v1904, 2
      %v1910 = vadd.f32 %v1101, %v1908
      %v1911 = vxor.u32 %v1910, 2147483648
      %v1912 = vmul.f32 %v1911, 1.442695
      %v1913 = vpow.pop %v1912
      %v1914 = vadd.f32 %v1913, 1.0
      %v1915 = vrcp.pop %v1914
      %v1916 = vmul.f32 1.0, %v1915
      %1917 = vmatprep.subr.mxu0 0.0
      %1918 = vmatpush1.msra.mxu0 0.0
      %1919 = vmatprep.subr.mxu0 0.0
      %1920 = vmatpush1.msra.mxu0 0.0
      %1921 = vmatprep.subr.mxu0 0.0
      %1922 = vmatpush1.msra.mxu0 0.0
      %1923 = vmatprep.subr.mxu0 0.0
      %1924 = vmatpush1.msra.mxu0 0.0
      %1925 = vmatprep.subr.mxu0 0.0
      %1926 = vmatpush1.msra.mxu0 0.0
      %1927 = vmatprep.subr.mxu0 0.0
      %1928 = vmatpush1.msra.mxu0 0.0
      %1929 = vmatprep.subr.mxu0 0.0
      %1930 = vmatpush1.msra.mxu0 0.0
      %1931 = vmatprep.subr.mxu0 0.0
      %1932 = vmatpush1.msra.mxu0 0.0
      %1933 = vmatprep.subr.mxu0 0.0
      %1934 = vmatpush1.msra.mxu0 0.0
      %1935 = vmatprep.subr.mxu0 0.0
      %1936 = vmatpush1.msra.mxu0 0.0
      %1937 = vmatprep.subr.mxu0 0.0
      %1938 = vmatpush1.msra.mxu0 0.0
      %1939 = vmatprep.subr.mxu0 0.0
      %1940 = vmatpush1.msra.mxu0 0.0
      %1941 = vmatprep.subr.mxu0 0.0
      %1942 = vmatpush1.msra.mxu0 %v1079
      %1943 = vmatprep.subr.mxu0 0.0
      %1944 = vmatpush1.msra.mxu0 %v1078
      %1945 = vmatprep.subr.mxu0 0.0
      %1946 = vmatpush1.msra.mxu0 %v1077
      %1947 = vmatprep.subr.mxu0 0.0
      %1948 = vmatpush1.msra.mxu0 %v1076
      %1949 = vmatprep.subr.mxu0 0.0
      %1950 = vmatpush2.msra.mxu0 0.0
      %1951 = vmatprep.subr.mxu0 0.0
      %1952 = vmatpush2.msra.mxu0 0.0
      %1953 = vmatprep.subr.mxu0 0.0
      %1954 = vmatpush2.msra.mxu0 0.0
      %1955 = vmatprep.subr.mxu0 0.0
      %1956 = vmatpush2.msra.mxu0 0.0
      %1957 = vmatprep.subr.mxu0 0.0
      %1958 = vmatpush2.msra.mxu0 0.0
      %1959 = vmatprep.subr.mxu0 0.0
      %1960 = vmatpush2.msra.mxu0 0.0
      %1961 = vmatprep.subr.mxu0 0.0
      %1962 = vmatpush2.msra.mxu0 0.0
      %1963 = vmatprep.subr.mxu0 0.0
      %1964 = vmatpush2.msra.mxu0 0.0
      %1965 = vmatprep.subr.mxu0 0.0
      %1966 = vmatpush2.msra.mxu0 0.0
      %1967 = vmatprep.subr.mxu0 0.0
      %1968 = vmatpush2.msra.mxu0 0.0
      %1969 = vmatprep.subr.mxu0 0.0
      %1970 = vmatpush2.msra.mxu0 0.0
      %1971 = vmatprep.subr.mxu0 0.0
      %1972 = vmatpush2.msra.mxu0 0.0
      %1973 = vmatprep.subr.mxu0 0.0
      %1974 = vmatpush2.msra.mxu0 0.0
      %1975 = vmatprep.subr.mxu0 0.0
      %1976 = vmatpush2.msra.mxu0 0.0
      %1977 = vmatprep.subr.mxu0 0.0
      %1978 = vmatpush2.msra.mxu0 0.0
      %1979 = vmatprep.subr.mxu0 0.0
      %1980 = vmatpush2.msra.mxu0 0.0
      %1981 = vmatprep.mubr.f32.mxu0 0.0
      %1982 = vmatmul.mubr.f32.gmra.mxu0 %v1835
      %v1983 = vpop.f32.mrf.mxu0
      %v1984 = vadd.f32 0.0, %v1983
      %v1985 = vpop.f32.mrf.mxu0
      %1986 = vdwg.mxu0
      %v1988 = vrot.slane %v1984, 2
      %v1990 = vadd.f32 %v1103, %v1988
      %v1991 = vxor.u32 %v1990, 2147483648
      %v1992 = vmul.f32 %v1991, 1.442695
      %v1993 = vpow.pop %v1992
      %v1994 = vadd.f32 %v1993, 1.0
      %v1995 = vrcp.pop %v1994
      %v1996 = vmul.f32 1.0, %v1995
      %1997 = vmatprep.subr.mxu0 0.0
      %1998 = vmatpush1.msra.mxu0 0.0
      %1999 = vmatprep.subr.mxu0 0.0
      %2000 = vmatpush1.msra.mxu0 0.0
      %2001 = vmatprep.subr.mxu0 0.0
      %2002 = vmatpush1.msra.mxu0 0.0
      %2003 = vmatprep.subr.mxu0 0.0
      %2004 = vmatpush1.msra.mxu0 0.0
      %2005 = vmatprep.subr.mxu0 0.0
      %2006 = vmatpush1.msra.mxu0 0.0
      %2007 = vmatprep.subr.mxu0 0.0
      %2008 = vmatpush1.msra.mxu0 0.0
      %2009 = vmatprep.subr.mxu0 0.0
      %2010 = vmatpush1.msra.mxu0 0.0
      %2011 = vmatprep.subr.mxu0 0.0
      %2012 = vmatpush1.msra.mxu0 0.0
      %2013 = vmatprep.subr.mxu0 0.0
      %2014 = vmatpush1.msra.mxu0 0.0
      %2015 = vmatprep.subr.mxu0 0.0
      %2016 = vmatpush1.msra.mxu0 0.0
      %2017 = vmatprep.subr.mxu0 0.0
      %2018 = vmatpush1.msra.mxu0 0.0
      %2019 = vmatprep.subr.mxu0 0.0
      %2020 = vmatpush1.msra.mxu0 0.0
      %2021 = vmatprep.subr.mxu0 0.0
      %2022 = vmatpush1.msra.mxu0 %v1084
      %2023 = vmatprep.subr.mxu0 0.0
      %2024 = vmatpush1.msra.mxu0 %v1083
      %2025 = vmatprep.subr.mxu0 0.0
      %2026 = vmatpush1.msra.mxu0 %v1082
      %2027 = vmatprep.subr.mxu0 0.0
      %2028 = vmatpush1.msra.mxu0 %v1081
      %2029 = vmatprep.subr.mxu0 0.0
      %2030 = vmatpush2.msra.mxu0 0.0
      %2031 = vmatprep.subr.mxu0 0.0
      %2032 = vmatpush2.msra.mxu0 0.0
      %2033 = vmatprep.subr.mxu0 0.0
      %2034 = vmatpush2.msra.mxu0 0.0
      %2035 = vmatprep.subr.mxu0 0.0
      %2036 = vmatpush2.msra.mxu0 0.0
      %2037 = vmatprep.subr.mxu0 0.0
      %2038 = vmatpush2.msra.mxu0 0.0
      %2039 = vmatprep.subr.mxu0 0.0
      %2040 = vmatpush2.msra.mxu0 0.0
      %2041 = vmatprep.subr.mxu0 0.0
      %2042 = vmatpush2.msra.mxu0 0.0
      %2043 = vmatprep.subr.mxu0 0.0
      %2044 = vmatpush2.msra.mxu0 0.0
      %2045 = vmatprep.subr.mxu0 0.0
      %2046 = vmatpush2.msra.mxu0 0.0
      %2047 = vmatprep.subr.mxu0 0.0
      %2048 = vmatpush2.msra.mxu0 0.0
      %2049 = vmatprep.subr.mxu0 0.0
      %2050 = vmatpush2.msra.mxu0 0.0
      %2051 = vmatprep.subr.mxu0 0.0
      %2052 = vmatpush2.msra.mxu0 0.0
      %2053 = vmatprep.subr.mxu0 0.0
      %2054 = vmatpush2.msra.mxu0 0.0
      %2055 = vmatprep.subr.mxu0 0.0
      %2056 = vmatpush2.msra.mxu0 0.0
      %2057 = vmatprep.subr.mxu0 0.0
      %2058 = vmatpush2.msra.mxu0 0.0
      %2059 = vmatprep.subr.mxu0 0.0
      %2060 = vmatpush2.msra.mxu0 0.0
      %2061 = vmatprep.mubr.f32.mxu0 0.0
      %2062 = vmatmul.mubr.f32.gmra.mxu0 %v1835
      %v2063 = vpop.f32.mrf.mxu0
      %v2064 = vadd.f32 %v1090, %v2063
      %v2065 = vpop.f32.mrf.mxu0
      %2066 = vdwg.mxu0
      %v2068 = vrot.slane %v2064, 2
      %v2070 = vmul.f32 %v1916, %v2068
      %v2071 = vadd.f32 %v1105, %v2070
      %v2072 = vtanh.pop %v2071
      %v2073 = vsub.f32 1.0, %v1996
      %v2074 = vmul.f32 %v2073, %v2072
      %v2075 = vrot.slane %v1832, 6
      %v2077 = vmul.f32 %v1996, %v2075
      %v2078 = vadd.f32 %v2074, %v2077
    $region54: #{cnnseq2seq_forward.5} parent=1 // loop_footer
      %s1097 = sadd.s32 1, %s1093
    $region55: #{cnnseq2seq_forward.5} parent=1 // loop_footer_branch
      %1092 = sbr.rel target = $region51
    $region56: #{cnnseq2seq_forward.5} parent=1 // loop_exit
      _
    %vm2079 = vcmask 261126
    %2080 = vst.msk [vmem:[#allocation5 - $0x6] sm:$0xc0] %vm2079, %v1098
    %v2081 = vld [vmem:[%s1] sm:$0xff]
    %v2082 = vld [vmem:[%s1 + $0x8] sm:$0xff]
    %v2083 = vld [vmem:[%s6] sm:$0xff]
    %v2084 = vld [vmem:[%s8] sm:$0x1]
    %v2086 = vlaneseq
    %v2087 = vshrl.u32 %v2086, 7
    %v2088 = vsub.s32 0, %v2087
    %v2089 = vrot.slane %v2084, %v2088
    %vm2091 = vcmask 64512
    %v2093 = vsel %vm2091, %v2081, 0
    %v2096 = vsel %vm2091, %v2082, 0
    %2098 = vmatprep.subr.mxu0 0.0
    %2099 = vmatpush1.msra.mxu0 0.0
    %2100 = vmatprep.subr.mxu0 0.0
    %2101 = vmatpush1.msra.mxu0 0.0
    %2102 = vmatprep.subr.mxu0 0.0
    %2103 = vmatpush1.msra.mxu0 0.0
    %2104 = vmatprep.subr.mxu0 0.0
    %2105 = vmatpush1.msra.mxu0 0.0
    %2106 = vmatprep.subr.mxu0 0.0
    %2107 = vmatpush1.msra.mxu0 0.0
    %2108 = vmatprep.subr.mxu0 0.0
    %2109 = vmatpush1.msra.mxu0 0.0
    %2110 = vmatprep.subr.mxu0 0.0
    %2111 = vmatpush1.msra.mxu0 0.0
    %2112 = vmatprep.subr.mxu0 0.0
    %2113 = vmatpush1.msra.mxu0 0.0
    %2114 = vmatprep.subr.mxu0 0.0
    %2115 = vmatpush1.msra.mxu0 0.0
    %2116 = vmatprep.subr.mxu0 0.0
    %2117 = vmatpush1.msra.mxu0 0.0
    %2118 = vmatprep.subr.mxu0 0.0
    %2119 = vmatpush1.msra.mxu0 0.0
    %2120 = vmatprep.subr.mxu0 0.0
    %2121 = vmatpush1.msra.mxu0 0.0
    %2122 = vmatprep.subr.mxu0 0.0
    %2123 = vmatpush1.msra.mxu0 0.0
    %2124 = vmatprep.subr.mxu0 0.0
    %2125 = vmatpush1.msra.mxu0 0.0
    %2126 = vmatprep.subr.mxu0 0.0
    %2127 = vmatpush1.msra.mxu0 0.0
    %2128 = vmatprep.subr.mxu0 0.0
    %2129 = vmatpush1.msra.mxu0 %v2083
    %2130 = vmatprep.subr.mxu0 0.0
    %2131 = vmatpush2.msra.mxu0 0.0
    %2132 = vmatprep.subr.mxu0 0.0
    %2133 = vmatpush2.msra.mxu0 0.0
    %2134 = vmatprep.subr.mxu0 0.0
    %2135 = vmatpush2.msra.mxu0 0.0
    %2136 = vmatprep.subr.mxu0 0.0
    %2137 = vmatpush2.msra.mxu0 0.0
    %2138 = vmatprep.subr.mxu0 0.0
    %2139 = vmatpush2.msra.mxu0 0.0
    %2140 = vmatprep.subr.mxu0 0.0
    %2141 = vmatpush2.msra.mxu0 0.0
    %2142 = vmatprep.subr.mxu0 0.0
    %2143 = vmatpush2.msra.mxu0 0.0
    %2144 = vmatprep.subr.mxu0 0.0
    %2145 = vmatpush2.msra.mxu0 0.0
    %2146 = vmatprep.subr.mxu0 0.0
    %2147 = vmatpush2.msra.mxu0 0.0
    %2148 = vmatprep.subr.mxu0 0.0
    %2149 = vmatpush2.msra.mxu0 0.0
    %2150 = vmatprep.subr.mxu0 0.0
    %2151 = vmatpush2.msra.mxu0 0.0
    %2152 = vmatprep.subr.mxu0 0.0
    %2153 = vmatpush2.msra.mxu0 0.0
    %2154 = vmatprep.subr.mxu0 0.0
    %2155 = vmatpush2.msra.mxu0 0.0
    %2156 = vmatprep.subr.mxu0 0.0
    %2157 = vmatpush2.msra.mxu0 0.0
    %2158 = vmatprep.subr.mxu0 0.0
    %2159 = vmatpush2.msra.mxu0 0.0
    %2160 = vmatprep.subr.mxu0 0.0
    %2161 = vmatpush2.msra.mxu0 0.0
    %2162 = vmatprep.mubr.f32.mxu0 0.0
    %2163 = vmatmul.mubr.f32.gmra.mxu0 %v2093
    %v2164 = vpop.f32.mrf.mxu0
    %v2165 = vadd.f32 %v2089, %v2164
    %v2166 = vpop.f32.mrf.mxu0
    %2167 = vmatprep.mubr.f32.mxu0 0.0
    %2168 = vmatmul.mubr.f32.gmra.mxu0 %v2096
    %v2169 = vpop.f32.mrf.mxu0
    %v2170 = vadd.f32 %v2089, %v2169
    %v2171 = vpop.f32.mrf.mxu0
    %2172 = vdwg.mxu0
    %s2173 = scalar_lea.vmem %s6, 8
    %v2174 = vld [vmem:[%s2173] sm:$0xff]
    %s2175 = scalar_lea.vmem %s8, 1
    %v2176 = vld [vmem:[%s2175] sm:$0x1]
    %v2178 = vlaneseq
    %v2179 = vshrl.u32 %v2178, 7
    %v2180 = vsub.s32 0, %v2179
    %v2181 = vrot.slane %v2176, %v2180
    %2183 = vmatprep.subr.mxu0 0.0
    %2184 = vmatpush1.msra.mxu0 0.0
    %2185 = vmatprep.subr.mxu0 0.0
    %2186 = vmatpush1.msra.mxu0 0.0
    %2187 = vmatprep.subr.mxu0 0.0
    %2188 = vmatpush1.msra.mxu0 0.0
    %2189 = vmatprep.subr.mxu0 0.0
    %2190 = vmatpush1.msra.mxu0 0.0
    %2191 = vmatprep.subr.mxu0 0.0
    %2192 = vmatpush1.msra.mxu0 0.0
    %2193 = vmatprep.subr.mxu0 0.0
    %2194 = vmatpush1.msra.mxu0 0.0
    %2195 = vmatprep.subr.mxu0 0.0
    %2196 = vmatpush1.msra.mxu0 0.0
    %2197 = vmatprep.subr.mxu0 0.0
    %2198 = vmatpush1.msra.mxu0 0.0
    %2199 = vmatprep.subr.mxu0 0.0
    %2200 = vmatpush1.msra.mxu0 0.0
    %2201 = vmatprep.subr.mxu0 0.0
    %2202 = vmatpush1.msra.mxu0 0.0
    %2203 = vmatprep.subr.mxu0 0.0
    %2204 = vmatpush1.msra.mxu0 0.0
    %2205 = vmatprep.subr.mxu0 0.0
    %2206 = vmatpush1.msra.mxu0 0.0
    %2207 = vmatprep.subr.mxu0 0.0
    %2208 = vmatpush1.msra.mxu0 0.0
    %2209 = vmatprep.subr.mxu0 0.0
    %2210 = vmatpush1.msra.mxu0 0.0
    %2211 = vmatprep.subr.mxu0 0.0
    %2212 = vmatpush1.msra.mxu0 0.0
    %2213 = vmatprep.subr.mxu0 0.0
    %2214 = vmatpush1.msra.mxu0 %v2174
    %2215 = vmatprep.subr.mxu0 0.0
    %2216 = vmatpush2.msra.mxu0 0.0
    %2217 = vmatprep.subr.mxu0 0.0
    %2218 = vmatpush2.msra.mxu0 0.0
    %2219 = vmatprep.subr.mxu0 0.0
    %2220 = vmatpush2.msra.mxu0 0.0
    %2221 = vmatprep.subr.mxu0 0.0
    %2222 = vmatpush2.msra.mxu0 0.0
    %2223 = vmatprep.subr.mxu0 0.0
    %2224 = vmatpush2.msra.mxu0 0.0
    %2225 = vmatprep.subr.mxu0 0.0
    %2226 = vmatpush2.msra.mxu0 0.0
    %2227 = vmatprep.subr.mxu0 0.0
    %2228 = vmatpush2.msra.mxu0 0.0
    %2229 = vmatprep.subr.mxu0 0.0
    %2230 = vmatpush2.msra.mxu0 0.0
    %2231 = vmatprep.subr.mxu0 0.0
    %2232 = vmatpush2.msra.mxu0 0.0
    %2233 = vmatprep.subr.mxu0 0.0
    %2234 = vmatpush2.msra.mxu0 0.0
    %2235 = vmatprep.subr.mxu0 0.0
    %2236 = vmatpush2.msra.mxu0 0.0
    %2237 = vmatprep.subr.mxu0 0.0
    %2238 = vmatpush2.msra.mxu0 0.0
    %2239 = vmatprep.subr.mxu0 0.0
    %2240 = vmatpush2.msra.mxu0 0.0
    %2241 = vmatprep.subr.mxu0 0.0
    %2242 = vmatpush2.msra.mxu0 0.0
    %2243 = vmatprep.subr.mxu0 0.0
    %2244 = vmatpush2.msra.mxu0 0.0
    %2245 = vmatprep.subr.mxu0 0.0
    %2246 = vmatpush2.msra.mxu0 0.0
    %2247 = vmatprep.mubr.f32.mxu0 0.0
    %2248 = vmatmul.mubr.f32.gmra.mxu0 %v2093
    %v2249 = vpop.f32.mrf.mxu0
    %v2250 = vadd.f32 %v2181, %v2249
    %v2251 = vpop.f32.mrf.mxu0
    %2252 = vmatprep.mubr.f32.mxu0 0.0
    %2253 = vmatmul.mubr.f32.gmra.mxu0 %v2096
    %v2254 = vpop.f32.mrf.mxu0
    %v2255 = vadd.f32 %v2181, %v2254
    %v2256 = vpop.f32.mrf.mxu0
    %2257 = vdwg.mxu0
    %s2258 = scalar_lea.vmem %s6, 16
    %v2259 = vld [vmem:[%s2258] sm:$0xff]
    %s2260 = scalar_lea.vmem %s8, 2
    %v2261 = vld [vmem:[%s2260] sm:$0x1]
    %v2263 = vlaneseq
    %v2264 = vshrl.u32 %v2263, 7
    %v2265 = vsub.s32 0, %v2264
    %v2266 = vrot.slane %v2261, %v2265
    %2268 = vmatprep.subr.mxu0 0.0
    %2269 = vmatpush1.msra.mxu0 0.0
    %2270 = vmatprep.subr.mxu0 0.0
    %2271 = vmatpush1.msra.mxu0 0.0
    %2272 = vmatprep.subr.mxu0 0.0
    %2273 = vmatpush1.msra.mxu0 0.0
    %2274 = vmatprep.subr.mxu0 0.0
    %2275 = vmatpush1.msra.mxu0 0.0
    %2276 = vmatprep.subr.mxu0 0.0
    %2277 = vmatpush1.msra.mxu0 0.0
    %2278 = vmatprep.subr.mxu0 0.0
    %2279 = vmatpush1.msra.mxu0 0.0
    %2280 = vmatprep.subr.mxu0 0.0
    %2281 = vmatpush1.msra.mxu0 0.0
    %2282 = vmatprep.subr.mxu0 0.0
    %2283 = vmatpush1.msra.mxu0 0.0
    %2284 = vmatprep.subr.mxu0 0.0
    %2285 = vmatpush1.msra.mxu0 0.0
    %2286 = vmatprep.subr.mxu0 0.0
    %2287 = vmatpush1.msra.mxu0 0.0
    %2288 = vmatprep.subr.mxu0 0.0
    %2289 = vmatpush1.msra.mxu0 0.0
    %2290 = vmatprep.subr.mxu0 0.0
    %2291 = vmatpush1.msra.mxu0 0.0
    %2292 = vmatprep.subr.mxu0 0.0
    %2293 = vmatpush1.msra.mxu0 0.0
    %2294 = vmatprep.subr.mxu0 0.0
    %2295 = vmatpush1.msra.mxu0 0.0
    %2296 = vmatprep.subr.mxu0 0.0
    %2297 = vmatpush1.msra.mxu0 0.0
    %2298 = vmatprep.subr.mxu0 0.0
    %2299 = vmatpush1.msra.mxu0 %v2259
    %2300 = vmatprep.subr.mxu0 0.0
    %2301 = vmatpush2.msra.mxu0 0.0
    %2302 = vmatprep.subr.mxu0 0.0
    %2303 = vmatpush2.msra.mxu0 0.0
    %2304 = vmatprep.subr.mxu0 0.0
    %2305 = vmatpush2.msra.mxu0 0.0
    %2306 = vmatprep.subr.mxu0 0.0
    %2307 = vmatpush2.msra.mxu0 0.0
    %2308 = vmatprep.subr.mxu0 0.0
    %2309 = vmatpush2.msra.mxu0 0.0
    %2310 = vmatprep.subr.mxu0 0.0
    %2311 = vmatpush2.msra.mxu0 0.0
    %2312 = vmatprep.subr.mxu0 0.0
    %2313 = vmatpush2.msra.mxu0 0.0
    %2314 = vmatprep.subr.mxu0 0.0
    %2315 = vmatpush2.msra.mxu0 0.0
    %2316 = vmatprep.subr.mxu0 0.0
    %2317 = vmatpush2.msra.mxu0 0.0
    %2318 = vmatprep.subr.mxu0 0.0
    %2319 = vmatpush2.msra.mxu0 0.0
    %2320 = vmatprep.subr.mxu0 0.0
    %2321 = vmatpush2.msra.mxu0 0.0
    %2322 = vmatprep.subr.mxu0 0.0
    %2323 = vmatpush2.msra.mxu0 0.0
    %2324 = vmatprep.subr.mxu0 0.0
    %2325 = vmatpush2.msra.mxu0 0.0
    %2326 = vmatprep.subr.mxu0 0.0
    %2327 = vmatpush2.msra.mxu0 0.0
    %2328 = vmatprep.subr.mxu0 0.0
    %2329 = vmatpush2.msra.mxu0 0.0
    %2330 = vmatprep.subr.mxu0 0.0
    %2331 = vmatpush2.msra.mxu0 0.0
    %2332 = vmatprep.mubr.f32.mxu0 0.0
    %2333 = vmatmul.mubr.f32.gmra.mxu0 %v2093
    %v2334 = vpop.f32.mrf.mxu0
    %v2335 = vadd.f32 %v2266, %v2334
    %v2336 = vpop.f32.mrf.mxu0
    %2337 = vmatprep.mubr.f32.mxu0 0.0
    %2338 = vmatmul.mubr.f32.gmra.mxu0 %v2096
    %v2339 = vpop.f32.mrf.mxu0
    %v2340 = vadd.f32 %v2266, %v2339
    %v2341 = vpop.f32.mrf.mxu0
    %2342 = vdwg.mxu0
    %v2343 = vld [vmem:[%s7] sm:$0xff]
    %v2344 = vld [vmem:[%s7 + $0x8] sm:$0xff]
    %v2345 = vld [vmem:[%s7 + $0x10] sm:$0xff]
    %v2346 = vld [vmem:[%s7 + $0x18] sm:$0xff]
    %s2347 = scalar_lea.vmem %s7, 32
    %v2348 = vld [vmem:[%s2347] sm:$0xff]
    %v2349 = vld [vmem:[%s2347 + $0x8] sm:$0xff]
    %v2350 = vld [vmem:[%s2347 + $0x10] sm:$0xff]
    %v2351 = vld [vmem:[%s2347 + $0x18] sm:$0xff]
    %s2352 = scalar_lea.vmem %s7, 64
    %v2353 = vld [vmem:[%s2352] sm:$0xff]
    %v2354 = vld [vmem:[%s2352 + $0x8] sm:$0xff]
    %v2355 = vld [vmem:[%s2352 + $0x10] sm:$0xff]
    %v2356 = vld [vmem:[%s2352 + $0x18] sm:$0xff]
    %v2357 = vld [vmem:[%s9] sm:$0x1]
    %v2359 = vlaneseq
    %v2360 = vshrl.u32 %v2359, 7
    %v2361 = vsub.s32 0, %v2360
    %v2362 = vrot.slane %v2357, %v2361
    %v2365 = vrot.slane %v1098, 6
    %v2366 = vsel %vm446, %v2365, 0
    %2368 = vmatprep.subr.mxu0 0.0
    %2369 = vmatpush1.msra.mxu0 0.0
    %2370 = vmatprep.subr.mxu0 0.0
    %2371 = vmatpush1.msra.mxu0 0.0
    %2372 = vmatprep.subr.mxu0 0.0
    %2373 = vmatpush1.msra.mxu0 0.0
    %2374 = vmatprep.subr.mxu0 0.0
    %2375 = vmatpush1.msra.mxu0 0.0
    %2376 = vmatprep.subr.mxu0 0.0
    %2377 = vmatpush1.msra.mxu0 0.0
    %2378 = vmatprep.subr.mxu0 0.0
    %2379 = vmatpush1.msra.mxu0 0.0
    %2380 = vmatprep.subr.mxu0 0.0
    %2381 = vmatpush1.msra.mxu0 0.0
    %2382 = vmatprep.subr.mxu0 0.0
    %2383 = vmatpush1.msra.mxu0 0.0
    %2384 = vmatprep.subr.mxu0 0.0
    %2385 = vmatpush1.msra.mxu0 0.0
    %2386 = vmatprep.subr.mxu0 0.0
    %2387 = vmatpush1.msra.mxu0 0.0
    %2388 = vmatprep.subr.mxu0 0.0
    %2389 = vmatpush1.msra.mxu0 0.0
    %2390 = vmatprep.subr.mxu0 0.0
    %2391 = vmatpush1.msra.mxu0 0.0
    %2392 = vmatprep.subr.mxu0 0.0
    %2393 = vmatpush1.msra.mxu0 %v2346
    %2394 = vmatprep.subr.mxu0 0.0
    %2395 = vmatpush1.msra.mxu0 %v2345
    %2396 = vmatprep.subr.mxu0 0.0
    %2397 = vmatpush1.msra.mxu0 %v2344
    %2398 = vmatprep.subr.mxu0 0.0
    %2399 = vmatpush1.msra.mxu0 %v2343
    %2400 = vmatprep.subr.mxu0 0.0
    %2401 = vmatpush2.msra.mxu0 0.0
    %2402 = vmatprep.subr.mxu0 0.0
    %2403 = vmatpush2.msra.mxu0 0.0
    %2404 = vmatprep.subr.mxu0 0.0
    %2405 = vmatpush2.msra.mxu0 0.0
    %2406 = vmatprep.subr.mxu0 0.0
    %2407 = vmatpush2.msra.mxu0 0.0
    %2408 = vmatprep.subr.mxu0 0.0
    %2409 = vmatpush2.msra.mxu0 0.0
    %2410 = vmatprep.subr.mxu0 0.0
    %2411 = vmatpush2.msra.mxu0 0.0
    %2412 = vmatprep.subr.mxu0 0.0
    %2413 = vmatpush2.msra.mxu0 0.0
    %2414 = vmatprep.subr.mxu0 0.0
    %2415 = vmatpush2.msra.mxu0 0.0
    %2416 = vmatprep.subr.mxu0 0.0
    %2417 = vmatpush2.msra.mxu0 0.0
    %2418 = vmatprep.subr.mxu0 0.0
    %2419 = vmatpush2.msra.mxu0 0.0
    %2420 = vmatprep.subr.mxu0 0.0
    %2421 = vmatpush2.msra.mxu0 0.0
    %2422 = vmatprep.subr.mxu0 0.0
    %2423 = vmatpush2.msra.mxu0 0.0
    %2424 = vmatprep.subr.mxu0 0.0
    %2425 = vmatpush2.msra.mxu0 0.0
    %2426 = vmatprep.subr.mxu0 0.0
    %2427 = vmatpush2.msra.mxu0 0.0
    %2428 = vmatprep.subr.mxu0 0.0
    %2429 = vmatpush2.msra.mxu0 0.0
    %2430 = vmatprep.subr.mxu0 0.0
    %2431 = vmatpush2.msra.mxu0 0.0
    %2432 = vmatprep.mubr.f32.mxu0 0.0
    %2433 = vmatmul.mubr.f32.gmra.mxu0 %v2366
    %v2434 = vpop.f32.mrf.mxu0
    %v2435 = vadd.f32 0.0, %v2434
    %v2436 = vpop.f32.mrf.mxu0
    %2437 = vdwg.mxu0
    %v2438 = vadd.f32 %v2165, %v2435
    %v2439 = vxor.u32 %v2438, 2147483648
    %v2440 = vmul.f32 %v2439, 1.442695
    %v2441 = vpow.pop %v2440
    %v2442 = vadd.f32 %v2441, 1.0
    %v2443 = vrcp.pop %v2442
    %v2444 = vmul.f32 1.0, %v2443
    %2445 = vmatprep.subr.mxu0 0.0
    %2446 = vmatpush1.msra.mxu0 0.0
    %2447 = vmatprep.subr.mxu0 0.0
    %2448 = vmatpush1.msra.mxu0 0.0
    %2449 = vmatprep.subr.mxu0 0.0
    %2450 = vmatpush1.msra.mxu0 0.0
    %2451 = vmatprep.subr.mxu0 0.0
    %2452 = vmatpush1.msra.mxu0 0.0
    %2453 = vmatprep.subr.mxu0 0.0
    %2454 = vmatpush1.msra.mxu0 0.0
    %2455 = vmatprep.subr.mxu0 0.0
    %2456 = vmatpush1.msra.mxu0 0.0
    %2457 = vmatprep.subr.mxu0 0.0
    %2458 = vmatpush1.msra.mxu0 0.0
    %2459 = vmatprep.subr.mxu0 0.0
    %2460 = vmatpush1.msra.mxu0 0.0
    %2461 = vmatprep.subr.mxu0 0.0
    %2462 = vmatpush1.msra.mxu0 0.0
    %2463 = vmatprep.subr.mxu0 0.0
    %2464 = vmatpush1.msra.mxu0 0.0
    %2465 = vmatprep.subr.mxu0 0.0
    %2466 = vmatpush1.msra.mxu0 0.0
    %2467 = vmatprep.subr.mxu0 0.0
    %2468 = vmatpush1.msra.mxu0 0.0
    %2469 = vmatprep.subr.mxu0 0.0
    %2470 = vmatpush1.msra.mxu0 %v2351
    %2471 = vmatprep.subr.mxu0 0.0
    %2472 = vmatpush1.msra.mxu0 %v2350
    %2473 = vmatprep.subr.mxu0 0.0
    %2474 = vmatpush1.msra.mxu0 %v2349
    %2475 = vmatprep.subr.mxu0 0.0
    %2476 = vmatpush1.msra.mxu0 %v2348
    %2477 = vmatprep.subr.mxu0 0.0
    %2478 = vmatpush2.msra.mxu0 0.0
    %2479 = vmatprep.subr.mxu0 0.0
    %2480 = vmatpush2.msra.mxu0 0.0
    %2481 = vmatprep.subr.mxu0 0.0
    %2482 = vmatpush2.msra.mxu0 0.0
    %2483 = vmatprep.subr.mxu0 0.0
    %2484 = vmatpush2.msra.mxu0 0.0
    %2485 = vmatprep.subr.mxu0 0.0
    %2486 = vmatpush2.msra.mxu0 0.0
    %2487 = vmatprep.subr.mxu0 0.0
    %2488 = vmatpush2.msra.mxu0 0.0
    %2489 = vmatprep.subr.mxu0 0.0
    %2490 = vmatpush2.msra.mxu0 0.0
    %2491 = vmatprep.subr.mxu0 0.0
    %2492 = vmatpush2.msra.mxu0 0.0
    %2493 = vmatprep.subr.mxu0 0.0
    %2494 = vmatpush2.msra.mxu0 0.0
    %2495 = vmatprep.subr.mxu0 0.0
    %2496 = vmatpush2.msra.mxu0 0.0
    %2497 = vmatprep.subr.mxu0 0.0
    %2498 = vmatpush2.msra.mxu0 0.0
    %2499 = vmatprep.subr.mxu0 0.0
    %2500 = vmatpush2.msra.mxu0 0.0
    %2501 = vmatprep.subr.mxu0 0.0
    %2502 = vmatpush2.msra.mxu0 0.0
    %2503 = vmatprep.subr.mxu0 0.0
    %2504 = vmatpush2.msra.mxu0 0.0
    %2505 = vmatprep.subr.mxu0 0.0
    %2506 = vmatpush2.msra.mxu0 0.0
    %2507 = vmatprep.subr.mxu0 0.0
    %2508 = vmatpush2.msra.mxu0 0.0
    %2509 = vmatprep.mubr.f32.mxu0 0.0
    %2510 = vmatmul.mubr.f32.gmra.mxu0 %v2366
    %v2511 = vpop.f32.mrf.mxu0
    %v2512 = vadd.f32 0.0, %v2511
    %v2513 = vpop.f32.mrf.mxu0
    %2514 = vdwg.mxu0
    %v2515 = vadd.f32 %v2250, %v2512
    %v2516 = vxor.u32 %v2515, 2147483648
    %v2517 = vmul.f32 %v2516, 1.442695
    %v2518 = vpow.pop %v2517
    %v2519 = vadd.f32 %v2518, 1.0
    %v2520 = vrcp.pop %v2519
    %v2521 = vmul.f32 1.0, %v2520
    %2522 = vmatprep.subr.mxu0 0.0
    %2523 = vmatpush1.msra.mxu0 0.0
    %2524 = vmatprep.subr.mxu0 0.0
    %2525 = vmatpush1.msra.mxu0 0.0
    %2526 = vmatprep.subr.mxu0 0.0
    %2527 = vmatpush1.msra.mxu0 0.0
    %2528 = vmatprep.subr.mxu0 0.0
    %2529 = vmatpush1.msra.mxu0 0.0
    %2530 = vmatprep.subr.mxu0 0.0
    %2531 = vmatpush1.msra.mxu0 0.0
    %2532 = vmatprep.subr.mxu0 0.0
    %2533 = vmatpush1.msra.mxu0 0.0
    %2534 = vmatprep.subr.mxu0 0.0
    %2535 = vmatpush1.msra.mxu0 0.0
    %2536 = vmatprep.subr.mxu0 0.0
    %2537 = vmatpush1.msra.mxu0 0.0
    %2538 = vmatprep.subr.mxu0 0.0
    %2539 = vmatpush1.msra.mxu0 0.0
    %2540 = vmatprep.subr.mxu0 0.0
    %2541 = vmatpush1.msra.mxu0 0.0
    %2542 = vmatprep.subr.mxu0 0.0
    %2543 = vmatpush1.msra.mxu0 0.0
    %2544 = vmatprep.subr.mxu0 0.0
    %2545 = vmatpush1.msra.mxu0 0.0
    %2546 = vmatprep.subr.mxu0 0.0
    %2547 = vmatpush1.msra.mxu0 %v2356
    %2548 = vmatprep.subr.mxu0 0.0
    %2549 = vmatpush1.msra.mxu0 %v2355
    %2550 = vmatprep.subr.mxu0 0.0
    %2551 = vmatpush1.msra.mxu0 %v2354
    %2552 = vmatprep.subr.mxu0 0.0
    %2553 = vmatpush1.msra.mxu0 %v2353
    %2554 = vmatprep.subr.mxu0 0.0
    %2555 = vmatpush2.msra.mxu0 0.0
    %2556 = vmatprep.subr.mxu0 0.0
    %2557 = vmatpush2.msra.mxu0 0.0
    %2558 = vmatprep.subr.mxu0 0.0
    %2559 = vmatpush2.msra.mxu0 0.0
    %2560 = vmatprep.subr.mxu0 0.0
    %2561 = vmatpush2.msra.mxu0 0.0
    %2562 = vmatprep.subr.mxu0 0.0
    %2563 = vmatpush2.msra.mxu0 0.0
    %2564 = vmatprep.subr.mxu0 0.0
    %2565 = vmatpush2.msra.mxu0 0.0
    %2566 = vmatprep.subr.mxu0 0.0
    %2567 = vmatpush2.msra.mxu0 0.0
    %2568 = vmatprep.subr.mxu0 0.0
    %2569 = vmatpush2.msra.mxu0 0.0
    %2570 = vmatprep.subr.mxu0 0.0
    %2571 = vmatpush2.msra.mxu0 0.0
    %2572 = vmatprep.subr.mxu0 0.0
    %2573 = vmatpush2.msra.mxu0 0.0
    %2574 = vmatprep.subr.mxu0 0.0
    %2575 = vmatpush2.msra.mxu0 0.0
    %2576 = vmatprep.subr.mxu0 0.0
    %2577 = vmatpush2.msra.mxu0 0.0
    %2578 = vmatprep.subr.mxu0 0.0
    %2579 = vmatpush2.msra.mxu0 0.0
    %2580 = vmatprep.subr.mxu0 0.0
    %2581 = vmatpush2.msra.mxu0 0.0
    %2582 = vmatprep.subr.mxu0 0.0
    %2583 = vmatpush2.msra.mxu0 0.0
    %2584 = vmatprep.subr.mxu0 0.0
    %2585 = vmatpush2.msra.mxu0 0.0
    %2586 = vmatprep.mubr.f32.mxu0 0.0
    %2587 = vmatmul.mubr.f32.gmra.mxu0 %v2366
    %v2588 = vpop.f32.mrf.mxu0
    %v2589 = vadd.f32 %v2362, %v2588
    %v2590 = vpop.f32.mrf.mxu0
    %2591 = vdwg.mxu0
    %v2592 = vmul.f32 %v2444, %v2589
    %v2593 = vadd.f32 %v2335, %v2592
    %v2594 = vtanh.pop %v2593
    %v2595 = vsub.f32 1.0, %v2521
    %v2596 = vmul.f32 %v2595, %v2594
    %v2598 = vmul.f32 %v2521, %v2365
    %v2599 = vadd.f32 %v2596, %v2598
    %v2601 = vsel %vm446, %v2599, 0
    %2603 = vmatprep.subr.mxu0 0.0
    %2604 = vmatpush1.msra.mxu0 0.0
    %2605 = vmatprep.subr.mxu0 0.0
    %2606 = vmatpush1.msra.mxu0 0.0
    %2607 = vmatprep.subr.mxu0 0.0
    %2608 = vmatpush1.msra.mxu0 0.0
    %2609 = vmatprep.subr.mxu0 0.0
    %2610 = vmatpush1.msra.mxu0 0.0
    %2611 = vmatprep.subr.mxu0 0.0
    %2612 = vmatpush1.msra.mxu0 0.0
    %2613 = vmatprep.subr.mxu0 0.0
    %2614 = vmatpush1.msra.mxu0 0.0
    %2615 = vmatprep.subr.mxu0 0.0
    %2616 = vmatpush1.msra.mxu0 0.0
    %2617 = vmatprep.subr.mxu0 0.0
    %2618 = vmatpush1.msra.mxu0 0.0
    %2619 = vmatprep.subr.mxu0 0.0
    %2620 = vmatpush1.msra.mxu0 0.0
    %2621 = vmatprep.subr.mxu0 0.0
    %2622 = vmatpush1.msra.mxu0 0.0
    %2623 = vmatprep.subr.mxu0 0.0
    %2624 = vmatpush1.msra.mxu0 0.0
    %2625 = vmatprep.subr.mxu0 0.0
    %2626 = vmatpush1.msra.mxu0 0.0
    %2627 = vmatprep.subr.mxu0 0.0
    %2628 = vmatpush1.msra.mxu0 %v2346
    %2629 = vmatprep.subr.mxu0 0.0
    %2630 = vmatpush1.msra.mxu0 %v2345
    %2631 = vmatprep.subr.mxu0 0.0
    %2632 = vmatpush1.msra.mxu0 %v2344
    %2633 = vmatprep.subr.mxu0 0.0
    %2634 = vmatpush1.msra.mxu0 %v2343
    %2635 = vmatprep.subr.mxu0 0.0
    %2636 = vmatpush2.msra.mxu0 0.0
    %2637 = vmatprep.subr.mxu0 0.0
    %2638 = vmatpush2.msra.mxu0 0.0
    %2639 = vmatprep.subr.mxu0 0.0
    %2640 = vmatpush2.msra.mxu0 0.0
    %2641 = vmatprep.subr.mxu0 0.0
    %2642 = vmatpush2.msra.mxu0 0.0
    %2643 = vmatprep.subr.mxu0 0.0
    %2644 = vmatpush2.msra.mxu0 0.0
    %2645 = vmatprep.subr.mxu0 0.0
    %2646 = vmatpush2.msra.mxu0 0.0
    %2647 = vmatprep.subr.mxu0 0.0
    %2648 = vmatpush2.msra.mxu0 0.0
    %2649 = vmatprep.subr.mxu0 0.0
    %2650 = vmatpush2.msra.mxu0 0.0
    %2651 = vmatprep.subr.mxu0 0.0
    %2652 = vmatpush2.msra.mxu0 0.0
    %2653 = vmatprep.subr.mxu0 0.0
    %2654 = vmatpush2.msra.mxu0 0.0
    %2655 = vmatprep.subr.mxu0 0.0
    %2656 = vmatpush2.msra.mxu0 0.0
    %2657 = vmatprep.subr.mxu0 0.0
    %2658 = vmatpush2.msra.mxu0 0.0
    %2659 = vmatprep.subr.mxu0 0.0
    %2660 = vmatpush2.msra.mxu0 0.0
    %2661 = vmatprep.subr.mxu0 0.0
    %2662 = vmatpush2.msra.mxu0 0.0
    %2663 = vmatprep.subr.mxu0 0.0
    %2664 = vmatpush2.msra.mxu0 0.0
    %2665 = vmatprep.subr.mxu0 0.0
    %2666 = vmatpush2.msra.mxu0 0.0
    %2667 = vmatprep.mubr.f32.mxu0 0.0
    %2668 = vmatmul.mubr.f32.gmra.mxu0 %v2601
    %v2669 = vpop.f32.mrf.mxu0
    %v2670 = vadd.f32 0.0, %v2669
    %v2671 = vpop.f32.mrf.mxu0
    %2672 = vdwg.mxu0
    %v2674 = vrot.slane %v2670, 6
    %v2676 = vadd.f32 %v2165, %v2674
    %v2677 = vxor.u32 %v2676, 2147483648
    %v2678 = vmul.f32 %v2677, 1.442695
    %v2679 = vpow.pop %v2678
    %v2680 = vadd.f32 %v2679, 1.0
    %v2681 = vrcp.pop %v2680
    %v2682 = vmul.f32 1.0, %v2681
    %2683 = vmatprep.subr.mxu0 0.0
    %2684 = vmatpush1.msra.mxu0 0.0
    %2685 = vmatprep.subr.mxu0 0.0
    %2686 = vmatpush1.msra.mxu0 0.0
    %2687 = vmatprep.subr.mxu0 0.0
    %2688 = vmatpush1.msra.mxu0 0.0
    %2689 = vmatprep.subr.mxu0 0.0
    %2690 = vmatpush1.msra.mxu0 0.0
    %2691 = vmatprep.subr.mxu0 0.0
    %2692 = vmatpush1.msra.mxu0 0.0
    %2693 = vmatprep.subr.mxu0 0.0
    %2694 = vmatpush1.msra.mxu0 0.0
    %2695 = vmatprep.subr.mxu0 0.0
    %2696 = vmatpush1.msra.mxu0 0.0
    %2697 = vmatprep.subr.mxu0 0.0
    %2698 = vmatpush1.msra.mxu0 0.0
    %2699 = vmatprep.subr.mxu0 0.0
    %2700 = vmatpush1.msra.mxu0 0.0
    %2701 = vmatprep.subr.mxu0 0.0
    %2702 = vmatpush1.msra.mxu0 0.0
    %2703 = vmatprep.subr.mxu0 0.0
    %2704 = vmatpush1.msra.mxu0 0.0
    %2705 = vmatprep.subr.mxu0 0.0
    %2706 = vmatpush1.msra.mxu0 0.0
    %2707 = vmatprep.subr.mxu0 0.0
    %2708 = vmatpush1.msra.mxu0 %v2351
    %2709 = vmatprep.subr.mxu0 0.0
    %2710 = vmatpush1.msra.mxu0 %v2350
    %2711 = vmatprep.subr.mxu0 0.0
    %2712 = vmatpush1.msra.mxu0 %v2349
    %2713 = vmatprep.subr.mxu0 0.0
    %2714 = vmatpush1.msra.mxu0 %v2348
    %2715 = vmatprep.subr.mxu0 0.0
    %2716 = vmatpush2.msra.mxu0 0.0
    %2717 = vmatprep.subr.mxu0 0.0
    %2718 = vmatpush2.msra.mxu0 0.0
    %2719 = vmatprep.subr.mxu0 0.0
    %2720 = vmatpush2.msra.mxu0 0.0
    %2721 = vmatprep.subr.mxu0 0.0
    %2722 = vmatpush2.msra.mxu0 0.0
    %2723 = vmatprep.subr.mxu0 0.0
    %2724 = vmatpush2.msra.mxu0 0.0
    %2725 = vmatprep.subr.mxu0 0.0
    %2726 = vmatpush2.msra.mxu0 0.0
    %2727 = vmatprep.subr.mxu0 0.0
    %2728 = vmatpush2.msra.mxu0 0.0
    %2729 = vmatprep.subr.mxu0 0.0
    %2730 = vmatpush2.msra.mxu0 0.0
    %2731 = vmatprep.subr.mxu0 0.0
    %2732 = vmatpush2.msra.mxu0 0.0
    %2733 = vmatprep.subr.mxu0 0.0
    %2734 = vmatpush2.msra.mxu0 0.0
    %2735 = vmatprep.subr.mxu0 0.0
    %2736 = vmatpush2.msra.mxu0 0.0
    %2737 = vmatprep.subr.mxu0 0.0
    %2738 = vmatpush2.msra.mxu0 0.0
    %2739 = vmatprep.subr.mxu0 0.0
    %2740 = vmatpush2.msra.mxu0 0.0
    %2741 = vmatprep.subr.mxu0 0.0
    %2742 = vmatpush2.msra.mxu0 0.0
    %2743 = vmatprep.subr.mxu0 0.0
    %2744 = vmatpush2.msra.mxu0 0.0
    %2745 = vmatprep.subr.mxu0 0.0
    %2746 = vmatpush2.msra.mxu0 0.0
    %2747 = vmatprep.mubr.f32.mxu0 0.0
    %2748 = vmatmul.mubr.f32.gmra.mxu0 %v2601
    %v2749 = vpop.f32.mrf.mxu0
    %v2750 = vadd.f32 0.0, %v2749
    %v2751 = vpop.f32.mrf.mxu0
    %2752 = vdwg.mxu0
    %v2754 = vrot.slane %v2750, 6
    %v2756 = vadd.f32 %v2250, %v2754
    %v2757 = vxor.u32 %v2756, 2147483648
    %v2758 = vmul.f32 %v2757, 1.442695
    %v2759 = vpow.pop %v2758
    %v2760 = vadd.f32 %v2759, 1.0
    %v2761 = vrcp.pop %v2760
    %v2762 = vmul.f32 1.0, %v2761
    %2763 = vmatprep.subr.mxu0 0.0
    %2764 = vmatpush1.msra.mxu0 0.0
    %2765 = vmatprep.subr.mxu0 0.0
    %2766 = vmatpush1.msra.mxu0 0.0
    %2767 = vmatprep.subr.mxu0 0.0
    %2768 = vmatpush1.msra.mxu0 0.0
    %2769 = vmatprep.subr.mxu0 0.0
    %2770 = vmatpush1.msra.mxu0 0.0
    %2771 = vmatprep.subr.mxu0 0.0
    %2772 = vmatpush1.msra.mxu0 0.0
    %2773 = vmatprep.subr.mxu0 0.0
    %2774 = vmatpush1.msra.mxu0 0.0
    %2775 = vmatprep.subr.mxu0 0.0
    %2776 = vmatpush1.msra.mxu0 0.0
    %2777 = vmatprep.subr.mxu0 0.0
    %2778 = vmatpush1.msra.mxu0 0.0
    %2779 = vmatprep.subr.mxu0 0.0
    %2780 = vmatpush1.msra.mxu0 0.0
    %2781 = vmatprep.subr.mxu0 0.0
    %2782 = vmatpush1.msra.mxu0 0.0
    %2783 = vmatprep.subr.mxu0 0.0
    %2784 = vmatpush1.msra.mxu0 0.0
    %2785 = vmatprep.subr.mxu0 0.0
    %2786 = vmatpush1.msra.mxu0 0.0
    %2787 = vmatprep.subr.mxu0 0.0
    %2788 = vmatpush1.msra.mxu0 %v2356
    %2789 = vmatprep.subr.mxu0 0.0
    %2790 = vmatpush1.msra.mxu0 %v2355
    %2791 = vmatprep.subr.mxu0 0.0
    %2792 = vmatpush1.msra.mxu0 %v2354
    %2793 = vmatprep.subr.mxu0 0.0
    %2794 = vmatpush1.msra.mxu0 %v2353
    %2795 = vmatprep.subr.mxu0 0.0
    %2796 = vmatpush2.msra.mxu0 0.0
    %2797 = vmatprep.subr.mxu0 0.0
    %2798 = vmatpush2.msra.mxu0 0.0
    %2799 = vmatprep.subr.mxu0 0.0
    %2800 = vmatpush2.msra.mxu0 0.0
    %2801 = vmatprep.subr.mxu0 0.0
    %2802 = vmatpush2.msra.mxu0 0.0
    %2803 = vmatprep.subr.mxu0 0.0
    %2804 = vmatpush2.msra.mxu0 0.0
    %2805 = vmatprep.subr.mxu0 0.0
    %2806 = vmatpush2.msra.mxu0 0.0
    %2807 = vmatprep.subr.mxu0 0.0
    %2808 = vmatpush2.msra.mxu0 0.0
    %2809 = vmatprep.subr.mxu0 0.0
    %2810 = vmatpush2.msra.mxu0 0.0
    %2811 = vmatprep.subr.mxu0 0.0
    %2812 = vmatpush2.msra.mxu0 0.0
    %2813 = vmatprep.subr.mxu0 0.0
    %2814 = vmatpush2.msra.mxu0 0.0
    %2815 = vmatprep.subr.mxu0 0.0
    %2816 = vmatpush2.msra.mxu0 0.0
    %2817 = vmatprep.subr.mxu0 0.0
    %2818 = vmatpush2.msra.mxu0 0.0
    %2819 = vmatprep.subr.mxu0 0.0
    %2820 = vmatpush2.msra.mxu0 0.0
    %2821 = vmatprep.subr.mxu0 0.0
    %2822 = vmatpush2.msra.mxu0 0.0
    %2823 = vmatprep.subr.mxu0 0.0
    %2824 = vmatpush2.msra.mxu0 0.0
    %2825 = vmatprep.subr.mxu0 0.0
    %2826 = vmatpush2.msra.mxu0 0.0
    %2827 = vmatprep.mubr.f32.mxu0 0.0
    %2828 = vmatmul.mubr.f32.gmra.mxu0 %v2601
    %v2829 = vpop.f32.mrf.mxu0
    %v2830 = vadd.f32 %v2362, %v2829
    %v2831 = vpop.f32.mrf.mxu0
    %2832 = vdwg.mxu0
    %v2834 = vrot.slane %v2830, 6
    %v2836 = vmul.f32 %v2682, %v2834
    %v2837 = vadd.f32 %v2335, %v2836
    %v2838 = vtanh.pop %v2837
    %v2839 = vsub.f32 1.0, %v2762
    %v2840 = vmul.f32 %v2839, %v2838
    %v2841 = vrot.slane %v2599, 6
    %v2843 = vmul.f32 %v2762, %v2841
    %v2844 = vadd.f32 %v2840, %v2843
    %v2846 = vrot.slane %v2844, 2
    %v2847 = vsel %vm446, %v2846, 0
    %2849 = vmatprep.subr.mxu0 0.0
    %2850 = vmatpush1.msra.mxu0 0.0
    %2851 = vmatprep.subr.mxu0 0.0
    %2852 = vmatpush1.msra.mxu0 0.0
    %2853 = vmatprep.subr.mxu0 0.0
    %2854 = vmatpush1.msra.mxu0 0.0
    %2855 = vmatprep.subr.mxu0 0.0
    %2856 = vmatpush1.msra.mxu0 0.0
    %2857 = vmatprep.subr.mxu0 0.0
    %2858 = vmatpush1.msra.mxu0 0.0
    %2859 = vmatprep.subr.mxu0 0.0
    %2860 = vmatpush1.msra.mxu0 0.0
    %2861 = vmatprep.subr.mxu0 0.0
    %2862 = vmatpush1.msra.mxu0 0.0
    %2863 = vmatprep.subr.mxu0 0.0
    %2864 = vmatpush1.msra.mxu0 0.0
    %2865 = vmatprep.subr.mxu0 0.0
    %2866 = vmatpush1.msra.mxu0 0.0
    %2867 = vmatprep.subr.mxu0 0.0
    %2868 = vmatpush1.msra.mxu0 0.0
    %2869 = vmatprep.subr.mxu0 0.0
    %2870 = vmatpush1.msra.mxu0 0.0
    %2871 = vmatprep.subr.mxu0 0.0
    %2872 = vmatpush1.msra.mxu0 0.0
    %2873 = vmatprep.subr.mxu0 0.0
    %2874 = vmatpush1.msra.mxu0 %v2346
    %2875 = vmatprep.subr.mxu0 0.0
    %2876 = vmatpush1.msra.mxu0 %v2345
    %2877 = vmatprep.subr.mxu0 0.0
    %2878 = vmatpush1.msra.mxu0 %v2344
    %2879 = vmatprep.subr.mxu0 0.0
    %2880 = vmatpush1.msra.mxu0 %v2343
    %2881 = vmatprep.subr.mxu0 0.0
    %2882 = vmatpush2.msra.mxu0 0.0
    %2883 = vmatprep.subr.mxu0 0.0
    %2884 = vmatpush2.msra.mxu0 0.0
    %2885 = vmatprep.subr.mxu0 0.0
    %2886 = vmatpush2.msra.mxu0 0.0
    %2887 = vmatprep.subr.mxu0 0.0
    %2888 = vmatpush2.msra.mxu0 0.0
    %2889 = vmatprep.subr.mxu0 0.0
    %2890 = vmatpush2.msra.mxu0 0.0
    %2891 = vmatprep.subr.mxu0 0.0
    %2892 = vmatpush2.msra.mxu0 0.0
    %2893 = vmatprep.subr.mxu0 0.0
    %2894 = vmatpush2.msra.mxu0 0.0
    %2895 = vmatprep.subr.mxu0 0.0
    %2896 = vmatpush2.msra.mxu0 0.0
    %2897 = vmatprep.subr.mxu0 0.0
    %2898 = vmatpush2.msra.mxu0 0.0
    %2899 = vmatprep.subr.mxu0 0.0
    %2900 = vmatpush2.msra.mxu0 0.0
    %2901 = vmatprep.subr.mxu0 0.0
    %2902 = vmatpush2.msra.mxu0 0.0
    %2903 = vmatprep.subr.mxu0 0.0
    %2904 = vmatpush2.msra.mxu0 0.0
    %2905 = vmatprep.subr.mxu0 0.0
    %2906 = vmatpush2.msra.mxu0 0.0
    %2907 = vmatprep.subr.mxu0 0.0
    %2908 = vmatpush2.msra.mxu0 0.0
    %2909 = vmatprep.subr.mxu0 0.0
    %2910 = vmatpush2.msra.mxu0 0.0
    %2911 = vmatprep.subr.mxu0 0.0
    %2912 = vmatpush2.msra.mxu0 0.0
    %2913 = vmatprep.mubr.f32.mxu0 0.0
    %2914 = vmatmul.mubr.f32.gmra.mxu0 %v2847
    %v2915 = vpop.f32.mrf.mxu0
    %v2916 = vadd.f32 0.0, %v2915
    %v2917 = vpop.f32.mrf.mxu0
    %2918 = vdwg.mxu0
    %v2920 = vrot.slane %v2916, 4
    %v2922 = vadd.f32 %v2165, %v2920
    %v2923 = vxor.u32 %v2922, 2147483648
    %v2924 = vmul.f32 %v2923, 1.442695
    %v2925 = vpow.pop %v2924
    %v2926 = vadd.f32 %v2925, 1.0
    %v2927 = vrcp.pop %v2926
    %v2928 = vmul.f32 1.0, %v2927
    %2929 = vmatprep.subr.mxu0 0.0
    %2930 = vmatpush1.msra.mxu0 0.0
    %2931 = vmatprep.subr.mxu0 0.0
    %2932 = vmatpush1.msra.mxu0 0.0
    %2933 = vmatprep.subr.mxu0 0.0
    %2934 = vmatpush1.msra.mxu0 0.0
    %2935 = vmatprep.subr.mxu0 0.0
    %2936 = vmatpush1.msra.mxu0 0.0
    %2937 = vmatprep.subr.mxu0 0.0
    %2938 = vmatpush1.msra.mxu0 0.0
    %2939 = vmatprep.subr.mxu0 0.0
    %2940 = vmatpush1.msra.mxu0 0.0
    %2941 = vmatprep.subr.mxu0 0.0
    %2942 = vmatpush1.msra.mxu0 0.0
    %2943 = vmatprep.subr.mxu0 0.0
    %2944 = vmatpush1.msra.mxu0 0.0
    %2945 = vmatprep.subr.mxu0 0.0
    %2946 = vmatpush1.msra.mxu0 0.0
    %2947 = vmatprep.subr.mxu0 0.0
    %2948 = vmatpush1.msra.mxu0 0.0
    %2949 = vmatprep.subr.mxu0 0.0
    %2950 = vmatpush1.msra.mxu0 0.0
    %2951 = vmatprep.subr.mxu0 0.0
    %2952 = vmatpush1.msra.mxu0 0.0
    %2953 = vmatprep.subr.mxu0 0.0
    %2954 = vmatpush1.msra.mxu0 %v2351
    %2955 = vmatprep.subr.mxu0 0.0
    %2956 = vmatpush1.msra.mxu0 %v2350
    %2957 = vmatprep.subr.mxu0 0.0
    %2958 = vmatpush1.msra.mxu0 %v2349
    %2959 = vmatprep.subr.mxu0 0.0
    %2960 = vmatpush1.msra.mxu0 %v2348
    %2961 = vmatprep.subr.mxu0 0.0
    %2962 = vmatpush2.msra.mxu0 0.0
    %2963 = vmatprep.subr.mxu0 0.0
    %2964 = vmatpush2.msra.mxu0 0.0
    %2965 = vmatprep.subr.mxu0 0.0
    %2966 = vmatpush2.msra.mxu0 0.0
    %2967 = vmatprep.subr.mxu0 0.0
    %2968 = vmatpush2.msra.mxu0 0.0
    %2969 = vmatprep.subr.mxu0 0.0
    %2970 = vmatpush2.msra.mxu0 0.0
    %2971 = vmatprep.subr.mxu0 0.0
    %2972 = vmatpush2.msra.mxu0 0.0
    %2973 = vmatprep.subr.mxu0 0.0
    %2974 = vmatpush2.msra.mxu0 0.0
    %2975 = vmatprep.subr.mxu0 0.0
    %2976 = vmatpush2.msra.mxu0 0.0
    %2977 = vmatprep.subr.mxu0 0.0
    %2978 = vmatpush2.msra.mxu0 0.0
    %2979 = vmatprep.subr.mxu0 0.0
    %2980 = vmatpush2.msra.mxu0 0.0
    %2981 = vmatprep.subr.mxu0 0.0
    %2982 = vmatpush2.msra.mxu0 0.0
    %2983 = vmatprep.subr.mxu0 0.0
    %2984 = vmatpush2.msra.mxu0 0.0
    %2985 = vmatprep.subr.mxu0 0.0
    %2986 = vmatpush2.msra.mxu0 0.0
    %2987 = vmatprep.subr.mxu0 0.0
    %2988 = vmatpush2.msra.mxu0 0.0
    %2989 = vmatprep.subr.mxu0 0.0
    %2990 = vmatpush2.msra.mxu0 0.0
    %2991 = vmatprep.subr.mxu0 0.0
    %2992 = vmatpush2.msra.mxu0 0.0
    %2993 = vmatprep.mubr.f32.mxu0 0.0
    %2994 = vmatmul.mubr.f32.gmra.mxu0 %v2847
    %v2995 = vpop.f32.mrf.mxu0
    %v2996 = vadd.f32 0.0, %v2995
    %v2997 = vpop.f32.mrf.mxu0
    %2998 = vdwg.mxu0
    %v3000 = vrot.slane %v2996, 4
    %v3002 = vadd.f32 %v2250, %v3000
    %v3003 = vxor.u32 %v3002, 2147483648
    %v3004 = vmul.f32 %v3003, 1.442695
    %v3005 = vpow.pop %v3004
    %v3006 = vadd.f32 %v3005, 1.0
    %v3007 = vrcp.pop %v3006
    %v3008 = vmul.f32 1.0, %v3007
    %3009 = vmatprep.subr.mxu0 0.0
    %3010 = vmatpush1.msra.mxu0 0.0
    %3011 = vmatprep.subr.mxu0 0.0
    %3012 = vmatpush1.msra.mxu0 0.0
    %3013 = vmatprep.subr.mxu0 0.0
    %3014 = vmatpush1.msra.mxu0 0.0
    %3015 = vmatprep.subr.mxu0 0.0
    %3016 = vmatpush1.msra.mxu0 0.0
    %3017 = vmatprep.subr.mxu0 0.0
    %3018 = vmatpush1.msra.mxu0 0.0
    %3019 = vmatprep.subr.mxu0 0.0
    %3020 = vmatpush1.msra.mxu0 0.0
    %3021 = vmatprep.subr.mxu0 0.0
    %3022 = vmatpush1.msra.mxu0 0.0
    %3023 = vmatprep.subr.mxu0 0.0
    %3024 = vmatpush1.msra.mxu0 0.0
    %3025 = vmatprep.subr.mxu0 0.0
    %3026 = vmatpush1.msra.mxu0 0.0
    %3027 = vmatprep.subr.mxu0 0.0
    %3028 = vmatpush1.msra.mxu0 0.0
    %3029 = vmatprep.subr.mxu0 0.0
    %3030 = vmatpush1.msra.mxu0 0.0
    %3031 = vmatprep.subr.mxu0 0.0
    %3032 = vmatpush1.msra.mxu0 0.0
    %3033 = vmatprep.subr.mxu0 0.0
    %3034 = vmatpush1.msra.mxu0 %v2356
    %3035 = vmatprep.subr.mxu0 0.0
    %3036 = vmatpush1.msra.mxu0 %v2355
    %3037 = vmatprep.subr.mxu0 0.0
    %3038 = vmatpush1.msra.mxu0 %v2354
    %3039 = vmatprep.subr.mxu0 0.0
    %3040 = vmatpush1.msra.mxu0 %v2353
    %3041 = vmatprep.subr.mxu0 0.0
    %3042 = vmatpush2.msra.mxu0 0.0
    %3043 = vmatprep.subr.mxu0 0.0
    %3044 = vmatpush2.msra.mxu0 0.0
    %3045 = vmatprep.subr.mxu0 0.0
    %3046 = vmatpush2.msra.mxu0 0.0
    %3047 = vmatprep.subr.mxu0 0.0
    %3048 = vmatpush2.msra.mxu0 0.0
    %3049 = vmatprep.subr.mxu0 0.0
    %3050 = vmatpush2.msra.mxu0 0.0
    %3051 = vmatprep.subr.mxu0 0.0
    %3052 = vmatpush2.msra.mxu0 0.0
    %3053 = vmatprep.subr.mxu0 0.0
    %3054 = vmatpush2.msra.mxu0 0.0
    %3055 = vmatprep.subr.mxu0 0.0
    %3056 = vmatpush2.msra.mxu0 0.0
    %3057 = vmatprep.subr.mxu0 0.0
    %3058 = vmatpush2.msra.mxu0 0.0
    %3059 = vmatprep.subr.mxu0 0.0
    %3060 = vmatpush2.msra.mxu0 0.0
    %3061 = vmatprep.subr.mxu0 0.0
    %3062 = vmatpush2.msra.mxu0 0.0
    %3063 = vmatprep.subr.mxu0 0.0
    %3064 = vmatpush2.msra.mxu0 0.0
    %3065 = vmatprep.subr.mxu0 0.0
    %3066 = vmatpush2.msra.mxu0 0.0
    %3067 = vmatprep.subr.mxu0 0.0
    %3068 = vmatpush2.msra.mxu0 0.0
    %3069 = vmatprep.subr.mxu0 0.0
    %3070 = vmatpush2.msra.mxu0 0.0
    %3071 = vmatprep.subr.mxu0 0.0
    %3072 = vmatpush2.msra.mxu0 0.0
    %3073 = vmatprep.mubr.f32.mxu0 0.0
    %3074 = vmatmul.mubr.f32.gmra.mxu0 %v2847
    %v3075 = vpop.f32.mrf.mxu0
    %v3076 = vadd.f32 %v2362, %v3075
    %v3077 = vpop.f32.mrf.mxu0
    %3078 = vdwg.mxu0
    %v3080 = vrot.slane %v3076, 4
    %v3082 = vmul.f32 %v2928, %v3080
    %v3083 = vadd.f32 %v2335, %v3082
    %v3084 = vtanh.pop %v3083
    %v3085 = vsub.f32 1.0, %v3008
    %v3086 = vmul.f32 %v3085, %v3084
    %v3087 = vrot.slane %v2844, 6
    %v3089 = vmul.f32 %v3008, %v3087
    %v3090 = vadd.f32 %v3086, %v3089
    %v3092 = vrot.slane %v3090, 4
    %v3093 = vsel %vm446, %v3092, 0
    %3095 = vmatprep.subr.mxu0 0.0
    %3096 = vmatpush1.msra.mxu0 0.0
    %3097 = vmatprep.subr.mxu0 0.0
    %3098 = vmatpush1.msra.mxu0 0.0
    %3099 = vmatprep.subr.mxu0 0.0
    %3100 = vmatpush1.msra.mxu0 0.0
    %3101 = vmatprep.subr.mxu0 0.0
    %3102 = vmatpush1.msra.mxu0 0.0
    %3103 = vmatprep.subr.mxu0 0.0
    %3104 = vmatpush1.msra.mxu0 0.0
    %3105 = vmatprep.subr.mxu0 0.0
    %3106 = vmatpush1.msra.mxu0 0.0
    %3107 = vmatprep.subr.mxu0 0.0
    %3108 = vmatpush1.msra.mxu0 0.0
    %3109 = vmatprep.subr.mxu0 0.0
    %3110 = vmatpush1.msra.mxu0 0.0
    %3111 = vmatprep.subr.mxu0 0.0
    %3112 = vmatpush1.msra.mxu0 0.0
    %3113 = vmatprep.subr.mxu0 0.0
    %3114 = vmatpush1.msra.mxu0 0.0
    %3115 = vmatprep.subr.mxu0 0.0
    %3116 = vmatpush1.msra.mxu0 0.0
    %3117 = vmatprep.subr.mxu0 0.0
    %3118 = vmatpush1.msra.mxu0 0.0
    %3119 = vmatprep.subr.mxu0 0.0
    %3120 = vmatpush1.msra.mxu0 %v2346
    %3121 = vmatprep.subr.mxu0 0.0
    %3122 = vmatpush1.msra.mxu0 %v2345
    %3123 = vmatprep.subr.mxu0 0.0
    %3124 = vmatpush1.msra.mxu0 %v2344
    %3125 = vmatprep.subr.mxu0 0.0
    %3126 = vmatpush1.msra.mxu0 %v2343
    %3127 = vmatprep.subr.mxu0 0.0
    %3128 = vmatpush2.msra.mxu0 0.0
    %3129 = vmatprep.subr.mxu0 0.0
    %3130 = vmatpush2.msra.mxu0 0.0
    %3131 = vmatprep.subr.mxu0 0.0
    %3132 = vmatpush2.msra.mxu0 0.0
    %3133 = vmatprep.subr.mxu0 0.0
    %3134 = vmatpush2.msra.mxu0 0.0
    %3135 = vmatprep.subr.mxu0 0.0
    %3136 = vmatpush2.msra.mxu0 0.0
    %3137 = vmatprep.subr.mxu0 0.0
    %3138 = vmatpush2.msra.mxu0 0.0
    %3139 = vmatprep.subr.mxu0 0.0
    %3140 = vmatpush2.msra.mxu0 0.0
    %3141 = vmatprep.subr.mxu0 0.0
    %3142 = vmatpush2.msra.mxu0 0.0
    %3143 = vmatprep.subr.mxu0 0.0
    %3144 = vmatpush2.msra.mxu0 0.0
    %3145 = vmatprep.subr.mxu0 0.0
    %3146 = vmatpush2.msra.mxu0 0.0
    %3147 = vmatprep.subr.mxu0 0.0
    %3148 = vmatpush2.msra.mxu0 0.0
    %3149 = vmatprep.subr.mxu0 0.0
    %3150 = vmatpush2.msra.mxu0 0.0
    %3151 = vmatprep.subr.mxu0 0.0
    %3152 = vmatpush2.msra.mxu0 0.0
    %3153 = vmatprep.subr.mxu0 0.0
    %3154 = vmatpush2.msra.mxu0 0.0
    %3155 = vmatprep.subr.mxu0 0.0
    %3156 = vmatpush2.msra.mxu0 0.0
    %3157 = vmatprep.subr.mxu0 0.0
    %3158 = vmatpush2.msra.mxu0 0.0
    %3159 = vmatprep.mubr.f32.mxu0 0.0
    %3160 = vmatmul.mubr.f32.gmra.mxu0 %v3093
    %v3161 = vpop.f32.mrf.mxu0
    %v3162 = vadd.f32 0.0, %v3161
    %v3163 = vpop.f32.mrf.mxu0
    %3164 = vdwg.mxu0
    %v3166 = vrot.slane %v3162, 2
    %v3168 = vadd.f32 %v2165, %v3166
    %v3169 = vxor.u32 %v3168, 2147483648
    %v3170 = vmul.f32 %v3169, 1.442695
    %v3171 = vpow.pop %v3170
    %v3172 = vadd.f32 %v3171, 1.0
    %v3173 = vrcp.pop %v3172
    %v3174 = vmul.f32 1.0, %v3173
    %3175 = vmatprep.subr.mxu0 0.0
    %3176 = vmatpush1.msra.mxu0 0.0
    %3177 = vmatprep.subr.mxu0 0.0
    %3178 = vmatpush1.msra.mxu0 0.0
    %3179 = vmatprep.subr.mxu0 0.0
    %3180 = vmatpush1.msra.mxu0 0.0
    %3181 = vmatprep.subr.mxu0 0.0
    %3182 = vmatpush1.msra.mxu0 0.0
    %3183 = vmatprep.subr.mxu0 0.0
    %3184 = vmatpush1.msra.mxu0 0.0
    %3185 = vmatprep.subr.mxu0 0.0
    %3186 = vmatpush1.msra.mxu0 0.0
    %3187 = vmatprep.subr.mxu0 0.0
    %3188 = vmatpush1.msra.mxu0 0.0
    %3189 = vmatprep.subr.mxu0 0.0
    %3190 = vmatpush1.msra.mxu0 0.0
    %3191 = vmatprep.subr.mxu0 0.0
    %3192 = vmatpush1.msra.mxu0 0.0
    %3193 = vmatprep.subr.mxu0 0.0
    %3194 = vmatpush1.msra.mxu0 0.0
    %3195 = vmatprep.subr.mxu0 0.0
    %3196 = vmatpush1.msra.mxu0 0.0
    %3197 = vmatprep.subr.mxu0 0.0
    %3198 = vmatpush1.msra.mxu0 0.0
    %3199 = vmatprep.subr.mxu0 0.0
    %3200 = vmatpush1.msra.mxu0 %v2351
    %3201 = vmatprep.subr.mxu0 0.0
    %3202 = vmatpush1.msra.mxu0 %v2350
    %3203 = vmatprep.subr.mxu0 0.0
    %3204 = vmatpush1.msra.mxu0 %v2349
    %3205 = vmatprep.subr.mxu0 0.0
    %3206 = vmatpush1.msra.mxu0 %v2348
    %3207 = vmatprep.subr.mxu0 0.0
    %3208 = vmatpush2.msra.mxu0 0.0
    %3209 = vmatprep.subr.mxu0 0.0
    %3210 = vmatpush2.msra.mxu0 0.0
    %3211 = vmatprep.subr.mxu0 0.0
    %3212 = vmatpush2.msra.mxu0 0.0
    %3213 = vmatprep.subr.mxu0 0.0
    %3214 = vmatpush2.msra.mxu0 0.0
    %3215 = vmatprep.subr.mxu0 0.0
    %3216 = vmatpush2.msra.mxu0 0.0
    %3217 = vmatprep.subr.mxu0 0.0
    %3218 = vmatpush2.msra.mxu0 0.0
    %3219 = vmatprep.subr.mxu0 0.0
    %3220 = vmatpush2.msra.mxu0 0.0
    %3221 = vmatprep.subr.mxu0 0.0
    %3222 = vmatpush2.msra.mxu0 0.0
    %3223 = vmatprep.subr.mxu0 0.0
    %3224 = vmatpush2.msra.mxu0 0.0
    %3225 = vmatprep.subr.mxu0 0.0
    %3226 = vmatpush2.msra.mxu0 0.0
    %3227 = vmatprep.subr.mxu0 0.0
    %3228 = vmatpush2.msra.mxu0 0.0
    %3229 = vmatprep.subr.mxu0 0.0
    %3230 = vmatpush2.msra.mxu0 0.0
    %3231 = vmatprep.subr.mxu0 0.0
    %3232 = vmatpush2.msra.mxu0 0.0
    %3233 = vmatprep.subr.mxu0 0.0
    %3234 = vmatpush2.msra.mxu0 0.0
    %3235 = vmatprep.subr.mxu0 0.0
    %3236 = vmatpush2.msra.mxu0 0.0
    %3237 = vmatprep.subr.mxu0 0.0
    %3238 = vmatpush2.msra.mxu0 0.0
    %3239 = vmatprep.mubr.f32.mxu0 0.0
    %3240 = vmatmul.mubr.f32.gmra.mxu0 %v3093
    %v3241 = vpop.f32.mrf.mxu0
    %v3242 = vadd.f32 0.0, %v3241
    %v3243 = vpop.f32.mrf.mxu0
    %3244 = vdwg.mxu0
    %v3246 = vrot.slane %v3242, 2
    %v3248 = vadd.f32 %v2250, %v3246
    %v3249 = vxor.u32 %v3248, 2147483648
    %v3250 = vmul.f32 %v3249, 1.442695
    %v3251 = vpow.pop %v3250
    %v3252 = vadd.f32 %v3251, 1.0
    %v3253 = vrcp.pop %v3252
    %v3254 = vmul.f32 1.0, %v3253
    %3255 = vmatprep.subr.mxu0 0.0
    %3256 = vmatpush1.msra.mxu0 0.0
    %3257 = vmatprep.subr.mxu0 0.0
    %3258 = vmatpush1.msra.mxu0 0.0
    %3259 = vmatprep.subr.mxu0 0.0
    %3260 = vmatpush1.msra.mxu0 0.0
    %3261 = vmatprep.subr.mxu0 0.0
    %3262 = vmatpush1.msra.mxu0 0.0
    %3263 = vmatprep.subr.mxu0 0.0
    %3264 = vmatpush1.msra.mxu0 0.0
    %3265 = vmatprep.subr.mxu0 0.0
    %3266 = vmatpush1.msra.mxu0 0.0
    %3267 = vmatprep.subr.mxu0 0.0
    %3268 = vmatpush1.msra.mxu0 0.0
    %3269 = vmatprep.subr.mxu0 0.0
    %3270 = vmatpush1.msra.mxu0 0.0
    %3271 = vmatprep.subr.mxu0 0.0
    %3272 = vmatpush1.msra.mxu0 0.0
    %3273 = vmatprep.subr.mxu0 0.0
    %3274 = vmatpush1.msra.mxu0 0.0
    %3275 = vmatprep.subr.mxu0 0.0
    %3276 = vmatpush1.msra.mxu0 0.0
    %3277 = vmatprep.subr.mxu0 0.0
    %3278 = vmatpush1.msra.mxu0 0.0
    %3279 = vmatprep.subr.mxu0 0.0
    %3280 = vmatpush1.msra.mxu0 %v2356
    %3281 = vmatprep.subr.mxu0 0.0
    %3282 = vmatpush1.msra.mxu0 %v2355
    %3283 = vmatprep.subr.mxu0 0.0
    %3284 = vmatpush1.msra.mxu0 %v2354
    %3285 = vmatprep.subr.mxu0 0.0
    %3286 = vmatpush1.msra.mxu0 %v2353
    %3287 = vmatprep.subr.mxu0 0.0
    %3288 = vmatpush2.msra.mxu0 0.0
    %3289 = vmatprep.subr.mxu0 0.0
    %3290 = vmatpush2.msra.mxu0 0.0
    %3291 = vmatprep.subr.mxu0 0.0
    %3292 = vmatpush2.msra.mxu0 0.0
    %3293 = vmatprep.subr.mxu0 0.0
    %3294 = vmatpush2.msra.mxu0 0.0
    %3295 = vmatprep.subr.mxu0 0.0
    %3296 = vmatpush2.msra.mxu0 0.0
    %3297 = vmatprep.subr.mxu0 0.0
    %3298 = vmatpush2.msra.mxu0 0.0
    %3299 = vmatprep.subr.mxu0 0.0
    %3300 = vmatpush2.msra.mxu0 0.0
    %3301 = vmatprep.subr.mxu0 0.0
    %3302 = vmatpush2.msra.mxu0 0.0
    %3303 = vmatprep.subr.mxu0 0.0
    %3304 = vmatpush2.msra.mxu0 0.0
    %3305 = vmatprep.subr.mxu0 0.0
    %3306 = vmatpush2.msra.mxu0 0.0
    %3307 = vmatprep.subr.mxu0 0.0
    %3308 = vmatpush2.msra.mxu0 0.0
    %3309 = vmatprep.subr.mxu0 0.0
    %3310 = vmatpush2.msra.mxu0 0.0
    %3311 = vmatprep.subr.mxu0 0.0
    %3312 = vmatpush2.msra.mxu0 0.0
    %3313 = vmatprep.subr.mxu0 0.0
    %3314 = vmatpush2.msra.mxu0 0.0
    %3315 = vmatprep.subr.mxu0 0.0
    %3316 = vmatpush2.msra.mxu0 0.0
    %3317 = vmatprep.subr.mxu0 0.0
    %3318 = vmatpush2.msra.mxu0 0.0
    %3319 = vmatprep.mubr.f32.mxu0 0.0
    %3320 = vmatmul.mubr.f32.gmra.mxu0 %v3093
    %v3321 = vpop.f32.mrf.mxu0
    %v3322 = vadd.f32 %v2362, %v3321
    %v3323 = vpop.f32.mrf.mxu0
    %3324 = vdwg.mxu0
    %v3326 = vrot.slane %v3322, 2
    %v3328 = vmul.f32 %v3174, %v3326
    %v3329 = vadd.f32 %v2335, %v3328
    %v3330 = vtanh.pop %v3329
    %v3331 = vsub.f32 1.0, %v3254
    %v3332 = vmul.f32 %v3331, %v3330
    %v3333 = vrot.slane %v3090, 6
    %v3335 = vmul.f32 %v3254, %v3333
    %v3336 = vadd.f32 %v3332, %v3335
    %v3338 = vrot.slane %v3336, 6
    %v3339 = vsel %vm446, %v3338, 0
    %3341 = vmatprep.subr.mxu0 0.0
    %3342 = vmatpush1.msra.mxu0 0.0
    %3343 = vmatprep.subr.mxu0 0.0
    %3344 = vmatpush1.msra.mxu0 0.0
    %3345 = vmatprep.subr.mxu0 0.0
    %3346 = vmatpush1.msra.mxu0 0.0
    %3347 = vmatprep.subr.mxu0 0.0
    %3348 = vmatpush1.msra.mxu0 0.0
    %3349 = vmatprep.subr.mxu0 0.0
    %3350 = vmatpush1.msra.mxu0 0.0
    %3351 = vmatprep.subr.mxu0 0.0
    %3352 = vmatpush1.msra.mxu0 0.0
    %3353 = vmatprep.subr.mxu0 0.0
    %3354 = vmatpush1.msra.mxu0 0.0
    %3355 = vmatprep.subr.mxu0 0.0
    %3356 = vmatpush1.msra.mxu0 0.0
    %3357 = vmatprep.subr.mxu0 0.0
    %3358 = vmatpush1.msra.mxu0 0.0
    %3359 = vmatprep.subr.mxu0 0.0
    %3360 = vmatpush1.msra.mxu0 0.0
    %3361 = vmatprep.subr.mxu0 0.0
    %3362 = vmatpush1.msra.mxu0 0.0
    %3363 = vmatprep.subr.mxu0 0.0
    %3364 = vmatpush1.msra.mxu0 0.0
    %3365 = vmatprep.subr.mxu0 0.0
    %3366 = vmatpush1.msra.mxu0 %v2346
    %3367 = vmatprep.subr.mxu0 0.0
    %3368 = vmatpush1.msra.mxu0 %v2345
    %3369 = vmatprep.subr.mxu0 0.0
    %3370 = vmatpush1.msra.mxu0 %v2344
    %3371 = vmatprep.subr.mxu0 0.0
    %3372 = vmatpush1.msra.mxu0 %v2343
    %3373 = vmatprep.subr.mxu0 0.0
    %3374 = vmatpush2.msra.mxu0 0.0
    %3375 = vmatprep.subr.mxu0 0.0
    %3376 = vmatpush2.msra.mxu0 0.0
    %3377 = vmatprep.subr.mxu0 0.0
    %3378 = vmatpush2.msra.mxu0 0.0
    %3379 = vmatprep.subr.mxu0 0.0
    %3380 = vmatpush2.msra.mxu0 0.0
    %3381 = vmatprep.subr.mxu0 0.0
    %3382 = vmatpush2.msra.mxu0 0.0
    %3383 = vmatprep.subr.mxu0 0.0
    %3384 = vmatpush2.msra.mxu0 0.0
    %3385 = vmatprep.subr.mxu0 0.0
    %3386 = vmatpush2.msra.mxu0 0.0
    %3387 = vmatprep.subr.mxu0 0.0
    %3388 = vmatpush2.msra.mxu0 0.0
    %3389 = vmatprep.subr.mxu0 0.0
    %3390 = vmatpush2.msra.mxu0 0.0
    %3391 = vmatprep.subr.mxu0 0.0
    %3392 = vmatpush2.msra.mxu0 0.0
    %3393 = vmatprep.subr.mxu0 0.0
    %3394 = vmatpush2.msra.mxu0 0.0
    %3395 = vmatprep.subr.mxu0 0.0
    %3396 = vmatpush2.msra.mxu0 0.0
    %3397 = vmatprep.subr.mxu0 0.0
    %3398 = vmatpush2.msra.mxu0 0.0
    %3399 = vmatprep.subr.mxu0 0.0
    %3400 = vmatpush2.msra.mxu0 0.0
    %3401 = vmatprep.subr.mxu0 0.0
    %3402 = vmatpush2.msra.mxu0 0.0
    %3403 = vmatprep.subr.mxu0 0.0
    %3404 = vmatpush2.msra.mxu0 0.0
    %3405 = vmatprep.mubr.f32.mxu0 0.0
    %3406 = vmatmul.mubr.f32.gmra.mxu0 %v3339
    %v3407 = vpop.f32.mrf.mxu0
    %v3408 = vadd.f32 0.0, %v3407
    %v3409 = vpop.f32.mrf.mxu0
    %3410 = vdwg.mxu0
    %v3411 = vadd.f32 %v2170, %v3408
    %v3412 = vxor.u32 %v3411, 2147483648
    %v3413 = vmul.f32 %v3412, 1.442695
    %v3414 = vpow.pop %v3413
    %v3415 = vadd.f32 %v3414, 1.0
    %v3416 = vrcp.pop %v3415
    %v3417 = vmul.f32 1.0, %v3416
    %3418 = vmatprep.subr.mxu0 0.0
    %3419 = vmatpush1.msra.mxu0 0.0
    %3420 = vmatprep.subr.mxu0 0.0
    %3421 = vmatpush1.msra.mxu0 0.0
    %3422 = vmatprep.subr.mxu0 0.0
    %3423 = vmatpush1.msra.mxu0 0.0
    %3424 = vmatprep.subr.mxu0 0.0
    %3425 = vmatpush1.msra.mxu0 0.0
    %3426 = vmatprep.subr.mxu0 0.0
    %3427 = vmatpush1.msra.mxu0 0.0
    %3428 = vmatprep.subr.mxu0 0.0
    %3429 = vmatpush1.msra.mxu0 0.0
    %3430 = vmatprep.subr.mxu0 0.0
    %3431 = vmatpush1.msra.mxu0 0.0
    %3432 = vmatprep.subr.mxu0 0.0
    %3433 = vmatpush1.msra.mxu0 0.0
    %3434 = vmatprep.subr.mxu0 0.0
    %3435 = vmatpush1.msra.mxu0 0.0
    %3436 = vmatprep.subr.mxu0 0.0
    %3437 = vmatpush1.msra.mxu0 0.0
    %3438 = vmatprep.subr.mxu0 0.0
    %3439 = vmatpush1.msra.mxu0 0.0
    %3440 = vmatprep.subr.mxu0 0.0
    %3441 = vmatpush1.msra.mxu0 0.0
    %3442 = vmatprep.subr.mxu0 0.0
    %3443 = vmatpush1.msra.mxu0 %v2351
    %3444 = vmatprep.subr.mxu0 0.0
    %3445 = vmatpush1.msra.mxu0 %v2350
    %3446 = vmatprep.subr.mxu0 0.0
    %3447 = vmatpush1.msra.mxu0 %v2349
    %3448 = vmatprep.subr.mxu0 0.0
    %3449 = vmatpush1.msra.mxu0 %v2348
    %3450 = vmatprep.subr.mxu0 0.0
    %3451 = vmatpush2.msra.mxu0 0.0
    %3452 = vmatprep.subr.mxu0 0.0
    %3453 = vmatpush2.msra.mxu0 0.0
    %3454 = vmatprep.subr.mxu0 0.0
    %3455 = vmatpush2.msra.mxu0 0.0
    %3456 = vmatprep.subr.mxu0 0.0
    %3457 = vmatpush2.msra.mxu0 0.0
    %3458 = vmatprep.subr.mxu0 0.0
    %3459 = vmatpush2.msra.mxu0 0.0
    %3460 = vmatprep.subr.mxu0 0.0
    %3461 = vmatpush2.msra.mxu0 0.0
    %3462 = vmatprep.subr.mxu0 0.0
    %3463 = vmatpush2.msra.mxu0 0.0
    %3464 = vmatprep.subr.mxu0 0.0
    %3465 = vmatpush2.msra.mxu0 0.0
    %3466 = vmatprep.subr.mxu0 0.0
    %3467 = vmatpush2.msra.mxu0 0.0
    %3468 = vmatprep.subr.mxu0 0.0
    %3469 = vmatpush2.msra.mxu0 0.0
    %3470 = vmatprep.subr.mxu0 0.0
    %3471 = vmatpush2.msra.mxu0 0.0
    %3472 = vmatprep.subr.mxu0 0.0
    %3473 = vmatpush2.msra.mxu0 0.0
    %3474 = vmatprep.subr.mxu0 0.0
    %3475 = vmatpush2.msra.mxu0 0.0
    %3476 = vmatprep.subr.mxu0 0.0
    %3477 = vmatpush2.msra.mxu0 0.0
    %3478 = vmatprep.subr.mxu0 0.0
    %3479 = vmatpush2.msra.mxu0 0.0
    %3480 = vmatprep.subr.mxu0 0.0
    %3481 = vmatpush2.msra.mxu0 0.0
    %3482 = vmatprep.mubr.f32.mxu0 0.0
    %3483 = vmatmul.mubr.f32.gmra.mxu0 %v3339
    %v3484 = vpop.f32.mrf.mxu0
    %v3485 = vadd.f32 0.0, %v3484
    %v3486 = vpop.f32.mrf.mxu0
    %3487 = vdwg.mxu0
    %v3488 = vadd.f32 %v2255, %v3485
    %v3489 = vxor.u32 %v3488, 2147483648
    %v3490 = vmul.f32 %v3489, 1.442695
    %v3491 = vpow.pop %v3490
    %v3492 = vadd.f32 %v3491, 1.0
    %v3493 = vrcp.pop %v3492
    %v3494 = vmul.f32 1.0, %v3493
    %3495 = vmatprep.subr.mxu0 0.0
    %3496 = vmatpush1.msra.mxu0 0.0
    %3497 = vmatprep.subr.mxu0 0.0
    %3498 = vmatpush1.msra.mxu0 0.0
    %3499 = vmatprep.subr.mxu0 0.0
    %3500 = vmatpush1.msra.mxu0 0.0
    %3501 = vmatprep.subr.mxu0 0.0
    %3502 = vmatpush1.msra.mxu0 0.0
    %3503 = vmatprep.subr.mxu0 0.0
    %3504 = vmatpush1.msra.mxu0 0.0
    %3505 = vmatprep.subr.mxu0 0.0
    %3506 = vmatpush1.msra.mxu0 0.0
    %3507 = vmatprep.subr.mxu0 0.0
    %3508 = vmatpush1.msra.mxu0 0.0
    %3509 = vmatprep.subr.mxu0 0.0
    %3510 = vmatpush1.msra.mxu0 0.0
    %3511 = vmatprep.subr.mxu0 0.0
    %3512 = vmatpush1.msra.mxu0 0.0
    %3513 = vmatprep.subr.mxu0 0.0
    %3514 = vmatpush1.msra.mxu0 0.0
    %3515 = vmatprep.subr.mxu0 0.0
    %3516 = vmatpush1.msra.mxu0 0.0
    %3517 = vmatprep.subr.mxu0 0.0
    %3518 = vmatpush1.msra.mxu0 0.0
    %3519 = vmatprep.subr.mxu0 0.0
    %3520 = vmatpush1.msra.mxu0 %v2356
    %3521 = vmatprep.subr.mxu0 0.0
    %3522 = vmatpush1.msra.mxu0 %v2355
    %3523 = vmatprep.subr.mxu0 0.0
    %3524 = vmatpush1.msra.mxu0 %v2354
    %3525 = vmatprep.subr.mxu0 0.0
    %3526 = vmatpush1.msra.mxu0 %v2353
    %3527 = vmatprep.subr.mxu0 0.0
    %3528 = vmatpush2.msra.mxu0 0.0
    %3529 = vmatprep.subr.mxu0 0.0
    %3530 = vmatpush2.msra.mxu0 0.0
    %3531 = vmatprep.subr.mxu0 0.0
    %3532 = vmatpush2.msra.mxu0 0.0
    %3533 = vmatprep.subr.mxu0 0.0
    %3534 = vmatpush2.msra.mxu0 0.0
    %3535 = vmatprep.subr.mxu0 0.0
    %3536 = vmatpush2.msra.mxu0 0.0
    %3537 = vmatprep.subr.mxu0 0.0
    %3538 = vmatpush2.msra.mxu0 0.0
    %3539 = vmatprep.subr.mxu0 0.0
    %3540 = vmatpush2.msra.mxu0 0.0
    %3541 = vmatprep.subr.mxu0 0.0
    %3542 = vmatpush2.msra.mxu0 0.0
    %3543 = vmatprep.subr.mxu0 0.0
    %3544 = vmatpush2.msra.mxu0 0.0
    %3545 = vmatprep.subr.mxu0 0.0
    %3546 = vmatpush2.msra.mxu0 0.0
    %3547 = vmatprep.subr.mxu0 0.0
    %3548 = vmatpush2.msra.mxu0 0.0
    %3549 = vmatprep.subr.mxu0 0.0
    %3550 = vmatpush2.msra.mxu0 0.0
    %3551 = vmatprep.subr.mxu0 0.0
    %3552 = vmatpush2.msra.mxu0 0.0
    %3553 = vmatprep.subr.mxu0 0.0
    %3554 = vmatpush2.msra.mxu0 0.0
    %3555 = vmatprep.subr.mxu0 0.0
    %3556 = vmatpush2.msra.mxu0 0.0
    %3557 = vmatprep.subr.mxu0 0.0
    %3558 = vmatpush2.msra.mxu0 0.0
    %3559 = vmatprep.mubr.f32.mxu0 0.0
    %3560 = vmatmul.mubr.f32.gmra.mxu0 %v3339
    %v3561 = vpop.f32.mrf.mxu0
    %v3562 = vadd.f32 %v2362, %v3561
    %v3563 = vpop.f32.mrf.mxu0
    %3564 = vdwg.mxu0
    %v3565 = vmul.f32 %v3417, %v3562
    %v3566 = vadd.f32 %v2340, %v3565
    %v3567 = vtanh.pop %v3566
    %v3568 = vsub.f32 1.0, %v3494
    %v3569 = vmul.f32 %v3568, %v3567
    %v3571 = vmul.f32 %v3494, %v3338
    %v3572 = vadd.f32 %v3569, %v3571
    %v3574 = vsel %vm446, %v3572, 0
    %3576 = vmatprep.subr.mxu0 0.0
    %3577 = vmatpush1.msra.mxu0 0.0
    %3578 = vmatprep.subr.mxu0 0.0
    %3579 = vmatpush1.msra.mxu0 0.0
    %3580 = vmatprep.subr.mxu0 0.0
    %3581 = vmatpush1.msra.mxu0 0.0
    %3582 = vmatprep.subr.mxu0 0.0
    %3583 = vmatpush1.msra.mxu0 0.0
    %3584 = vmatprep.subr.mxu0 0.0
    %3585 = vmatpush1.msra.mxu0 0.0
    %3586 = vmatprep.subr.mxu0 0.0
    %3587 = vmatpush1.msra.mxu0 0.0
    %3588 = vmatprep.subr.mxu0 0.0
    %3589 = vmatpush1.msra.mxu0 0.0
    %3590 = vmatprep.subr.mxu0 0.0
    %3591 = vmatpush1.msra.mxu0 0.0
    %3592 = vmatprep.subr.mxu0 0.0
    %3593 = vmatpush1.msra.mxu0 0.0
    %3594 = vmatprep.subr.mxu0 0.0
    %3595 = vmatpush1.msra.mxu0 0.0
    %3596 = vmatprep.subr.mxu0 0.0
    %3597 = vmatpush1.msra.mxu0 0.0
    %3598 = vmatprep.subr.mxu0 0.0
    %3599 = vmatpush1.msra.mxu0 0.0
    %3600 = vmatprep.subr.mxu0 0.0
    %3601 = vmatpush1.msra.mxu0 %v2346
    %3602 = vmatprep.subr.mxu0 0.0
    %3603 = vmatpush1.msra.mxu0 %v2345
    %3604 = vmatprep.subr.mxu0 0.0
    %3605 = vmatpush1.msra.mxu0 %v2344
    %3606 = vmatprep.subr.mxu0 0.0
    %3607 = vmatpush1.msra.mxu0 %v2343
    %3608 = vmatprep.subr.mxu0 0.0
    %3609 = vmatpush2.msra.mxu0 0.0
    %3610 = vmatprep.subr.mxu0 0.0
    %3611 = vmatpush2.msra.mxu0 0.0
    %3612 = vmatprep.subr.mxu0 0.0
    %3613 = vmatpush2.msra.mxu0 0.0
    %3614 = vmatprep.subr.mxu0 0.0
    %3615 = vmatpush2.msra.mxu0 0.0
    %3616 = vmatprep.subr.mxu0 0.0
    %3617 = vmatpush2.msra.mxu0 0.0
    %3618 = vmatprep.subr.mxu0 0.0
    %3619 = vmatpush2.msra.mxu0 0.0
    %3620 = vmatprep.subr.mxu0 0.0
    %3621 = vmatpush2.msra.mxu0 0.0
    %3622 = vmatprep.subr.mxu0 0.0
    %3623 = vmatpush2.msra.mxu0 0.0
    %3624 = vmatprep.subr.mxu0 0.0
    %3625 = vmatpush2.msra.mxu0 0.0
    %3626 = vmatprep.subr.mxu0 0.0
    %3627 = vmatpush2.msra.mxu0 0.0
    %3628 = vmatprep.subr.mxu0 0.0
    %3629 = vmatpush2.msra.mxu0 0.0
    %3630 = vmatprep.subr.mxu0 0.0
    %3631 = vmatpush2.msra.mxu0 0.0
    %3632 = vmatprep.subr.mxu0 0.0
    %3633 = vmatpush2.msra.mxu0 0.0
    %3634 = vmatprep.subr.mxu0 0.0
    %3635 = vmatpush2.msra.mxu0 0.0
    %3636 = vmatprep.subr.mxu0 0.0
    %3637 = vmatpush2.msra.mxu0 0.0
    %3638 = vmatprep.subr.mxu0 0.0
    %3639 = vmatpush2.msra.mxu0 0.0
    %3640 = vmatprep.mubr.f32.mxu0 0.0
    %3641 = vmatmul.mubr.f32.gmra.mxu0 %v3574
    %v3642 = vpop.f32.mrf.mxu0
    %v3643 = vadd.f32 0.0, %v3642
    %v3644 = vpop.f32.mrf.mxu0
    %3645 = vdwg.mxu0
    %v3647 = vrot.slane %v3643, 6
    %v3649 = vadd.f32 %v2170, %v3647
    %v3650 = vxor.u32 %v3649, 2147483648
    %v3651 = vmul.f32 %v3650, 1.442695
    %v3652 = vpow.pop %v3651
    %v3653 = vadd.f32 %v3652, 1.0
    %v3654 = vrcp.pop %v3653
    %v3655 = vmul.f32 1.0, %v3654
    %3656 = vmatprep.subr.mxu0 0.0
    %3657 = vmatpush1.msra.mxu0 0.0
    %3658 = vmatprep.subr.mxu0 0.0
    %3659 = vmatpush1.msra.mxu0 0.0
    %3660 = vmatprep.subr.mxu0 0.0
    %3661 = vmatpush1.msra.mxu0 0.0
    %3662 = vmatprep.subr.mxu0 0.0
    %3663 = vmatpush1.msra.mxu0 0.0
    %3664 = vmatprep.subr.mxu0 0.0
    %3665 = vmatpush1.msra.mxu0 0.0
    %3666 = vmatprep.subr.mxu0 0.0
    %3667 = vmatpush1.msra.mxu0 0.0
    %3668 = vmatprep.subr.mxu0 0.0
    %3669 = vmatpush1.msra.mxu0 0.0
    %3670 = vmatprep.subr.mxu0 0.0
    %3671 = vmatpush1.msra.mxu0 0.0
    %3672 = vmatprep.subr.mxu0 0.0
    %3673 = vmatpush1.msra.mxu0 0.0
    %3674 = vmatprep.subr.mxu0 0.0
    %3675 = vmatpush1.msra.mxu0 0.0
    %3676 = vmatprep.subr.mxu0 0.0
    %3677 = vmatpush1.msra.mxu0 0.0
    %3678 = vmatprep.subr.mxu0 0.0
    %3679 = vmatpush1.msra.mxu0 0.0
    %3680 = vmatprep.subr.mxu0 0.0
    %3681 = vmatpush1.msra.mxu0 %v2351
    %3682 = vmatprep.subr.mxu0 0.0
    %3683 = vmatpush1.msra.mxu0 %v2350
    %3684 = vmatprep.subr.mxu0 0.0
    %3685 = vmatpush1.msra.mxu0 %v2349
    %3686 = vmatprep.subr.mxu0 0.0
    %3687 = vmatpush1.msra.mxu0 %v2348
    %3688 = vmatprep.subr.mxu0 0.0
    %3689 = vmatpush2.msra.mxu0 0.0
    %3690 = vmatprep.subr.mxu0 0.0
    %3691 = vmatpush2.msra.mxu0 0.0
    %3692 = vmatprep.subr.mxu0 0.0
    %3693 = vmatpush2.msra.mxu0 0.0
    %3694 = vmatprep.subr.mxu0 0.0
    %3695 = vmatpush2.msra.mxu0 0.0
    %3696 = vmatprep.subr.mxu0 0.0
    %3697 = vmatpush2.msra.mxu0 0.0
    %3698 = vmatprep.subr.mxu0 0.0
    %3699 = vmatpush2.msra.mxu0 0.0
    %3700 = vmatprep.subr.mxu0 0.0
    %3701 = vmatpush2.msra.mxu0 0.0
    %3702 = vmatprep.subr.mxu0 0.0
    %3703 = vmatpush2.msra.mxu0 0.0
    %3704 = vmatprep.subr.mxu0 0.0
    %3705 = vmatpush2.msra.mxu0 0.0
    %3706 = vmatprep.subr.mxu0 0.0
    %3707 = vmatpush2.msra.mxu0 0.0
    %3708 = vmatprep.subr.mxu0 0.0
    %3709 = vmatpush2.msra.mxu0 0.0
    %3710 = vmatprep.subr.mxu0 0.0
    %3711 = vmatpush2.msra.mxu0 0.0
    %3712 = vmatprep.subr.mxu0 0.0
    %3713 = vmatpush2.msra.mxu0 0.0
    %3714 = vmatprep.subr.mxu0 0.0
    %3715 = vmatpush2.msra.mxu0 0.0
    %3716 = vmatprep.subr.mxu0 0.0
    %3717 = vmatpush2.msra.mxu0 0.0
    %3718 = vmatprep.subr.mxu0 0.0
    %3719 = vmatpush2.msra.mxu0 0.0
    %3720 = vmatprep.mubr.f32.mxu0 0.0
    %3721 = vmatmul.mubr.f32.gmra.mxu0 %v3574
    %v3722 = vpop.f32.mrf.mxu0
    %v3723 = vadd.f32 0.0, %v3722
    %v3724 = vpop.f32.mrf.mxu0
    %3725 = vdwg.mxu0
    %v3727 = vrot.slane %v3723, 6
    %v3729 = vadd.f32 %v2255, %v3727
    %v3730 = vxor.u32 %v3729, 2147483648
    %v3731 = vmul.f32 %v3730, 1.442695
    %v3732 = vpow.pop %v3731
    %v3733 = vadd.f32 %v3732, 1.0
    %v3734 = vrcp.pop %v3733
    %v3735 = vmul.f32 1.0, %v3734
    %3736 = vmatprep.subr.mxu0 0.0
    %3737 = vmatpush1.msra.mxu0 0.0
    %3738 = vmatprep.subr.mxu0 0.0
    %3739 = vmatpush1.msra.mxu0 0.0
    %3740 = vmatprep.subr.mxu0 0.0
    %3741 = vmatpush1.msra.mxu0 0.0
    %3742 = vmatprep.subr.mxu0 0.0
    %3743 = vmatpush1.msra.mxu0 0.0
    %3744 = vmatprep.subr.mxu0 0.0
    %3745 = vmatpush1.msra.mxu0 0.0
    %3746 = vmatprep.subr.mxu0 0.0
    %3747 = vmatpush1.msra.mxu0 0.0
    %3748 = vmatprep.subr.mxu0 0.0
    %3749 = vmatpush1.msra.mxu0 0.0
    %3750 = vmatprep.subr.mxu0 0.0
    %3751 = vmatpush1.msra.mxu0 0.0
    %3752 = vmatprep.subr.mxu0 0.0
    %3753 = vmatpush1.msra.mxu0 0.0
    %3754 = vmatprep.subr.mxu0 0.0
    %3755 = vmatpush1.msra.mxu0 0.0
    %3756 = vmatprep.subr.mxu0 0.0
    %3757 = vmatpush1.msra.mxu0 0.0
    %3758 = vmatprep.subr.mxu0 0.0
    %3759 = vmatpush1.msra.mxu0 0.0
    %3760 = vmatprep.subr.mxu0 0.0
    %3761 = vmatpush1.msra.mxu0 %v2356
    %3762 = vmatprep.subr.mxu0 0.0
    %3763 = vmatpush1.msra.mxu0 %v2355
    %3764 = vmatprep.subr.mxu0 0.0
    %3765 = vmatpush1.msra.mxu0 %v2354
    %3766 = vmatprep.subr.mxu0 0.0
    %3767 = vmatpush1.msra.mxu0 %v2353
    %3768 = vmatprep.subr.mxu0 0.0
    %3769 = vmatpush2.msra.mxu0 0.0
    %3770 = vmatprep.subr.mxu0 0.0
    %3771 = vmatpush2.msra.mxu0 0.0
    %3772 = vmatprep.subr.mxu0 0.0
    %3773 = vmatpush2.msra.mxu0 0.0
    %3774 = vmatprep.subr.mxu0 0.0
    %3775 = vmatpush2.msra.mxu0 0.0
    %3776 = vmatprep.subr.mxu0 0.0
    %3777 = vmatpush2.msra.mxu0 0.0
    %3778 = vmatprep.subr.mxu0 0.0
    %3779 = vmatpush2.msra.mxu0 0.0
    %3780 = vmatprep.subr.mxu0 0.0
    %3781 = vmatpush2.msra.mxu0 0.0
    %3782 = vmatprep.subr.mxu0 0.0
    %3783 = vmatpush2.msra.mxu0 0.0
    %3784 = vmatprep.subr.mxu0 0.0
    %3785 = vmatpush2.msra.mxu0 0.0
    %3786 = vmatprep.subr.mxu0 0.0
    %3787 = vmatpush2.msra.mxu0 0.0
    %3788 = vmatprep.subr.mxu0 0.0
    %3789 = vmatpush2.msra.mxu0 0.0
    %3790 = vmatprep.subr.mxu0 0.0
    %3791 = vmatpush2.msra.mxu0 0.0
    %3792 = vmatprep.subr.mxu0 0.0
    %3793 = vmatpush2.msra.mxu0 0.0
    %3794 = vmatprep.subr.mxu0 0.0
    %3795 = vmatpush2.msra.mxu0 0.0
    %3796 = vmatprep.subr.mxu0 0.0
    %3797 = vmatpush2.msra.mxu0 0.0
    %3798 = vmatprep.subr.mxu0 0.0
    %3799 = vmatpush2.msra.mxu0 0.0
    %3800 = vmatprep.mubr.f32.mxu0 0.0
    %3801 = vmatmul.mubr.f32.gmra.mxu0 %v3574
    %v3802 = vpop.f32.mrf.mxu0
    %v3803 = vadd.f32 %v2362, %v3802
    %v3804 = vpop.f32.mrf.mxu0
    %3805 = vdwg.mxu0
    %v3807 = vrot.slane %v3803, 6
    %v3809 = vmul.f32 %v3655, %v3807
    %v3810 = vadd.f32 %v2340, %v3809
    %v3811 = vtanh.pop %v3810
    %v3812 = vsub.f32 1.0, %v3735
    %v3813 = vmul.f32 %v3812, %v3811
    %v3814 = vrot.slane %v3572, 6
    %v3816 = vmul.f32 %v3735, %v3814
    %v3817 = vadd.f32 %v3813, %v3816
    %v3819 = vrot.slane %v3817, 2
    %v3820 = vsel %vm446, %v3819, 0
    %3822 = vmatprep.subr.mxu0 0.0
    %3823 = vmatpush1.msra.mxu0 0.0
    %3824 = vmatprep.subr.mxu0 0.0
    %3825 = vmatpush1.msra.mxu0 0.0
    %3826 = vmatprep.subr.mxu0 0.0
    %3827 = vmatpush1.msra.mxu0 0.0
    %3828 = vmatprep.subr.mxu0 0.0
    %3829 = vmatpush1.msra.mxu0 0.0
    %3830 = vmatprep.subr.mxu0 0.0
    %3831 = vmatpush1.msra.mxu0 0.0
    %3832 = vmatprep.subr.mxu0 0.0
    %3833 = vmatpush1.msra.mxu0 0.0
    %3834 = vmatprep.subr.mxu0 0.0
    %3835 = vmatpush1.msra.mxu0 0.0
    %3836 = vmatprep.subr.mxu0 0.0
    %3837 = vmatpush1.msra.mxu0 0.0
    %3838 = vmatprep.subr.mxu0 0.0
    %3839 = vmatpush1.msra.mxu0 0.0
    %3840 = vmatprep.subr.mxu0 0.0
    %3841 = vmatpush1.msra.mxu0 0.0
    %3842 = vmatprep.subr.mxu0 0.0
    %3843 = vmatpush1.msra.mxu0 0.0
    %3844 = vmatprep.subr.mxu0 0.0
    %3845 = vmatpush1.msra.mxu0 0.0
    %3846 = vmatprep.subr.mxu0 0.0
    %3847 = vmatpush1.msra.mxu0 %v2346
    %3848 = vmatprep.subr.mxu0 0.0
    %3849 = vmatpush1.msra.mxu0 %v2345
    %3850 = vmatprep.subr.mxu0 0.0
    %3851 = vmatpush1.msra.mxu0 %v2344
    %3852 = vmatprep.subr.mxu0 0.0
    %3853 = vmatpush1.msra.mxu0 %v2343
    %3854 = vmatprep.subr.mxu0 0.0
    %3855 = vmatpush2.msra.mxu0 0.0
    %3856 = vmatprep.subr.mxu0 0.0
    %3857 = vmatpush2.msra.mxu0 0.0
    %3858 = vmatprep.subr.mxu0 0.0
    %3859 = vmatpush2.msra.mxu0 0.0
    %3860 = vmatprep.subr.mxu0 0.0
    %3861 = vmatpush2.msra.mxu0 0.0
    %3862 = vmatprep.subr.mxu0 0.0
    %3863 = vmatpush2.msra.mxu0 0.0
    %3864 = vmatprep.subr.mxu0 0.0
    %3865 = vmatpush2.msra.mxu0 0.0
    %3866 = vmatprep.subr.mxu0 0.0
    %3867 = vmatpush2.msra.mxu0 0.0
    %3868 = vmatprep.subr.mxu0 0.0
    %3869 = vmatpush2.msra.mxu0 0.0
    %3870 = vmatprep.subr.mxu0 0.0
    %3871 = vmatpush2.msra.mxu0 0.0
    %3872 = vmatprep.subr.mxu0 0.0
    %3873 = vmatpush2.msra.mxu0 0.0
    %3874 = vmatprep.subr.mxu0 0.0
    %3875 = vmatpush2.msra.mxu0 0.0
    %3876 = vmatprep.subr.mxu0 0.0
    %3877 = vmatpush2.msra.mxu0 0.0
    %3878 = vmatprep.subr.mxu0 0.0
    %3879 = vmatpush2.msra.mxu0 0.0
    %3880 = vmatprep.subr.mxu0 0.0
    %3881 = vmatpush2.msra.mxu0 0.0
    %3882 = vmatprep.subr.mxu0 0.0
    %3883 = vmatpush2.msra.mxu0 0.0
    %3884 = vmatprep.subr.mxu0 0.0
    %3885 = vmatpush2.msra.mxu0 0.0
    %3886 = vmatprep.mubr.f32.mxu0 0.0
    %3887 = vmatmul.mubr.f32.gmra.mxu0 %v3820
    %v3888 = vpop.f32.mrf.mxu0
    %v3889 = vadd.f32 0.0, %v3888
    %v3890 = vpop.f32.mrf.mxu0
    %3891 = vdwg.mxu0
    %v3893 = vrot.slane %v3889, 4
    %v3895 = vadd.f32 %v2170, %v3893
    %v3896 = vxor.u32 %v3895, 2147483648
    %v3897 = vmul.f32 %v3896, 1.442695
    %v3898 = vpow.pop %v3897
    %v3899 = vadd.f32 %v3898, 1.0
    %v3900 = vrcp.pop %v3899
    %v3901 = vmul.f32 1.0, %v3900
    %3902 = vmatprep.subr.mxu0 0.0
    %3903 = vmatpush1.msra.mxu0 0.0
    %3904 = vmatprep.subr.mxu0 0.0
    %3905 = vmatpush1.msra.mxu0 0.0
    %3906 = vmatprep.subr.mxu0 0.0
    %3907 = vmatpush1.msra.mxu0 0.0
    %3908 = vmatprep.subr.mxu0 0.0
    %3909 = vmatpush1.msra.mxu0 0.0
    %3910 = vmatprep.subr.mxu0 0.0
    %3911 = vmatpush1.msra.mxu0 0.0
    %3912 = vmatprep.subr.mxu0 0.0
    %3913 = vmatpush1.msra.mxu0 0.0
    %3914 = vmatprep.subr.mxu0 0.0
    %3915 = vmatpush1.msra.mxu0 0.0
    %3916 = vmatprep.subr.mxu0 0.0
    %3917 = vmatpush1.msra.mxu0 0.0
    %3918 = vmatprep.subr.mxu0 0.0
    %3919 = vmatpush1.msra.mxu0 0.0
    %3920 = vmatprep.subr.mxu0 0.0
    %3921 = vmatpush1.msra.mxu0 0.0
    %3922 = vmatprep.subr.mxu0 0.0
    %3923 = vmatpush1.msra.mxu0 0.0
    %3924 = vmatprep.subr.mxu0 0.0
    %3925 = vmatpush1.msra.mxu0 0.0
    %3926 = vmatprep.subr.mxu0 0.0
    %3927 = vmatpush1.msra.mxu0 %v2351
    %3928 = vmatprep.subr.mxu0 0.0
    %3929 = vmatpush1.msra.mxu0 %v2350
    %3930 = vmatprep.subr.mxu0 0.0
    %3931 = vmatpush1.msra.mxu0 %v2349
    %3932 = vmatprep.subr.mxu0 0.0
    %3933 = vmatpush1.msra.mxu0 %v2348
    %3934 = vmatprep.subr.mxu0 0.0
    %3935 = vmatpush2.msra.mxu0 0.0
    %3936 = vmatprep.subr.mxu0 0.0
    %3937 = vmatpush2.msra.mxu0 0.0
    %3938 = vmatprep.subr.mxu0 0.0
    %3939 = vmatpush2.msra.mxu0 0.0
    %3940 = vmatprep.subr.mxu0 0.0
    %3941 = vmatpush2.msra.mxu0 0.0
    %3942 = vmatprep.subr.mxu0 0.0
    %3943 = vmatpush2.msra.mxu0 0.0
    %3944 = vmatprep.subr.mxu0 0.0
    %3945 = vmatpush2.msra.mxu0 0.0
    %3946 = vmatprep.subr.mxu0 0.0
    %3947 = vmatpush2.msra.mxu0 0.0
    %3948 = vmatprep.subr.mxu0 0.0
    %3949 = vmatpush2.msra.mxu0 0.0
    %3950 = vmatprep.subr.mxu0 0.0
    %3951 = vmatpush2.msra.mxu0 0.0
    %3952 = vmatprep.subr.mxu0 0.0
    %3953 = vmatpush2.msra.mxu0 0.0
    %3954 = vmatprep.subr.mxu0 0.0
    %3955 = vmatpush2.msra.mxu0 0.0
    %3956 = vmatprep.subr.mxu0 0.0
    %3957 = vmatpush2.msra.mxu0 0.0
    %3958 = vmatprep.subr.mxu0 0.0
    %3959 = vmatpush2.msra.mxu0 0.0
    %3960 = vmatprep.subr.mxu0 0.0
    %3961 = vmatpush2.msra.mxu0 0.0
    %3962 = vmatprep.subr.mxu0 0.0
    %3963 = vmatpush2.msra.mxu0 0.0
    %3964 = vmatprep.subr.mxu0 0.0
    %3965 = vmatpush2.msra.mxu0 0.0
    %3966 = vmatprep.mubr.f32.mxu0 0.0
    %3967 = vmatmul.mubr.f32.gmra.mxu0 %v3820
    %v3968 = vpop.f32.mrf.mxu0
    %v3969 = vadd.f32 0.0, %v3968
    %v3970 = vpop.f32.mrf.mxu0
    %3971 = vdwg.mxu0
    %v3973 = vrot.slane %v3969, 4
    %v3975 = vadd.f32 %v2255, %v3973
    %v3976 = vxor.u32 %v3975, 2147483648
    %v3977 = vmul.f32 %v3976, 1.442695
    %v3978 = vpow.pop %v3977
    %v3979 = vadd.f32 %v3978, 1.0
    %v3980 = vrcp.pop %v3979
    %v3981 = vmul.f32 1.0, %v3980
    %3982 = vmatprep.subr.mxu0 0.0
    %3983 = vmatpush1.msra.mxu0 0.0
    %3984 = vmatprep.subr.mxu0 0.0
    %3985 = vmatpush1.msra.mxu0 0.0
    %3986 = vmatprep.subr.mxu0 0.0
    %3987 = vmatpush1.msra.mxu0 0.0
    %3988 = vmatprep.subr.mxu0 0.0
    %3989 = vmatpush1.msra.mxu0 0.0
    %3990 = vmatprep.subr.mxu0 0.0
    %3991 = vmatpush1.msra.mxu0 0.0
    %3992 = vmatprep.subr.mxu0 0.0
    %3993 = vmatpush1.msra.mxu0 0.0
    %3994 = vmatprep.subr.mxu0 0.0
    %3995 = vmatpush1.msra.mxu0 0.0
    %3996 = vmatprep.subr.mxu0 0.0
    %3997 = vmatpush1.msra.mxu0 0.0
    %3998 = vmatprep.subr.mxu0 0.0
    %3999 = vmatpush1.msra.mxu0 0.0
    %4000 = vmatprep.subr.mxu0 0.0
    %4001 = vmatpush1.msra.mxu0 0.0
    %4002 = vmatprep.subr.mxu0 0.0
    %4003 = vmatpush1.msra.mxu0 0.0
    %4004 = vmatprep.subr.mxu0 0.0
    %4005 = vmatpush1.msra.mxu0 0.0
    %4006 = vmatprep.subr.mxu0 0.0
    %4007 = vmatpush1.msra.mxu0 %v2356
    %4008 = vmatprep.subr.mxu0 0.0
    %4009 = vmatpush1.msra.mxu0 %v2355
    %4010 = vmatprep.subr.mxu0 0.0
    %4011 = vmatpush1.msra.mxu0 %v2354
    %4012 = vmatprep.subr.mxu0 0.0
    %4013 = vmatpush1.msra.mxu0 %v2353
    %4014 = vmatprep.subr.mxu0 0.0
    %4015 = vmatpush2.msra.mxu0 0.0
    %4016 = vmatprep.subr.mxu0 0.0
    %4017 = vmatpush2.msra.mxu0 0.0
    %4018 = vmatprep.subr.mxu0 0.0
    %4019 = vmatpush2.msra.mxu0 0.0
    %4020 = vmatprep.subr.mxu0 0.0
    %4021 = vmatpush2.msra.mxu0 0.0
    %4022 = vmatprep.subr.mxu0 0.0
    %4023 = vmatpush2.msra.mxu0 0.0
    %4024 = vmatprep.subr.mxu0 0.0
    %4025 = vmatpush2.msra.mxu0 0.0
    %4026 = vmatprep.subr.mxu0 0.0
    %4027 = vmatpush2.msra.mxu0 0.0
    %4028 = vmatprep.subr.mxu0 0.0
    %4029 = vmatpush2.msra.mxu0 0.0
    %4030 = vmatprep.subr.mxu0 0.0
    %4031 = vmatpush2.msra.mxu0 0.0
    %4032 = vmatprep.subr.mxu0 0.0
    %4033 = vmatpush2.msra.mxu0 0.0
    %4034 = vmatprep.subr.mxu0 0.0
    %4035 = vmatpush2.msra.mxu0 0.0
    %4036 = vmatprep.subr.mxu0 0.0
    %4037 = vmatpush2.msra.mxu0 0.0
    %4038 = vmatprep.subr.mxu0 0.0
    %4039 = vmatpush2.msra.mxu0 0.0
    %4040 = vmatprep.subr.mxu0 0.0
    %4041 = vmatpush2.msra.mxu0 0.0
    %4042 = vmatprep.subr.mxu0 0.0
    %4043 = vmatpush2.msra.mxu0 0.0
    %4044 = vmatprep.subr.mxu0 0.0
    %4045 = vmatpush2.msra.mxu0 0.0
    %4046 = vmatprep.mubr.f32.mxu0 0.0
    %4047 = vmatmul.mubr.f32.gmra.mxu0 %v3820
    %v4048 = vpop.f32.mrf.mxu0
    %v4049 = vadd.f32 %v2362, %v4048
    %v4050 = vpop.f32.mrf.mxu0
    %4051 = vdwg.mxu0
    %v4053 = vrot.slane %v4049, 4
    %v4055 = vmul.f32 %v3901, %v4053
    %v4056 = vadd.f32 %v2340, %v4055
    %v4057 = vtanh.pop %v4056
    %v4058 = vsub.f32 1.0, %v3981
    %v4059 = vmul.f32 %v4058, %v4057
    %v4060 = vrot.slane %v3817, 6
    %v4062 = vmul.f32 %v3981, %v4060
    %v4063 = vadd.f32 %v4059, %v4062
    %v4065 = vrot.slane %v4063, 4
    %v4066 = vsel %vm446, %v4065, 0
    %4068 = vmatprep.subr.mxu0 0.0
    %4069 = vmatpush1.msra.mxu0 0.0
    %4070 = vmatprep.subr.mxu0 0.0
    %4071 = vmatpush1.msra.mxu0 0.0
    %4072 = vmatprep.subr.mxu0 0.0
    %4073 = vmatpush1.msra.mxu0 0.0
    %4074 = vmatprep.subr.mxu0 0.0
    %4075 = vmatpush1.msra.mxu0 0.0
    %4076 = vmatprep.subr.mxu0 0.0
    %4077 = vmatpush1.msra.mxu0 0.0
    %4078 = vmatprep.subr.mxu0 0.0
    %4079 = vmatpush1.msra.mxu0 0.0
    %4080 = vmatprep.subr.mxu0 0.0
    %4081 = vmatpush1.msra.mxu0 0.0
    %4082 = vmatprep.subr.mxu0 0.0
    %4083 = vmatpush1.msra.mxu0 0.0
    %4084 = vmatprep.subr.mxu0 0.0
    %4085 = vmatpush1.msra.mxu0 0.0
    %4086 = vmatprep.subr.mxu0 0.0
    %4087 = vmatpush1.msra.mxu0 0.0
    %4088 = vmatprep.subr.mxu0 0.0
    %4089 = vmatpush1.msra.mxu0 0.0
    %4090 = vmatprep.subr.mxu0 0.0
    %4091 = vmatpush1.msra.mxu0 0.0
    %4092 = vmatprep.subr.mxu0 0.0
    %4093 = vmatpush1.msra.mxu0 %v2346
    %4094 = vmatprep.subr.mxu0 0.0
    %4095 = vmatpush1.msra.mxu0 %v2345
    %4096 = vmatprep.subr.mxu0 0.0
    %4097 = vmatpush1.msra.mxu0 %v2344
    %4098 = vmatprep.subr.mxu0 0.0
    %4099 = vmatpush1.msra.mxu0 %v2343
    %4100 = vmatprep.subr.mxu0 0.0
    %4101 = vmatpush2.msra.mxu0 0.0
    %4102 = vmatprep.subr.mxu0 0.0
    %4103 = vmatpush2.msra.mxu0 0.0
    %4104 = vmatprep.subr.mxu0 0.0
    %4105 = vmatpush2.msra.mxu0 0.0
    %4106 = vmatprep.subr.mxu0 0.0
    %4107 = vmatpush2.msra.mxu0 0.0
    %4108 = vmatprep.subr.mxu0 0.0
    %4109 = vmatpush2.msra.mxu0 0.0
    %4110 = vmatprep.subr.mxu0 0.0
    %4111 = vmatpush2.msra.mxu0 0.0
    %4112 = vmatprep.subr.mxu0 0.0
    %4113 = vmatpush2.msra.mxu0 0.0
    %4114 = vmatprep.subr.mxu0 0.0
    %4115 = vmatpush2.msra.mxu0 0.0
    %4116 = vmatprep.subr.mxu0 0.0
    %4117 = vmatpush2.msra.mxu0 0.0
    %4118 = vmatprep.subr.mxu0 0.0
    %4119 = vmatpush2.msra.mxu0 0.0
    %4120 = vmatprep.subr.mxu0 0.0
    %4121 = vmatpush2.msra.mxu0 0.0
    %4122 = vmatprep.subr.mxu0 0.0
    %4123 = vmatpush2.msra.mxu0 0.0
    %4124 = vmatprep.subr.mxu0 0.0
    %4125 = vmatpush2.msra.mxu0 0.0
    %4126 = vmatprep.subr.mxu0 0.0
    %4127 = vmatpush2.msra.mxu0 0.0
    %4128 = vmatprep.subr.mxu0 0.0
    %4129 = vmatpush2.msra.mxu0 0.0
    %4130 = vmatprep.subr.mxu0 0.0
    %4131 = vmatpush2.msra.mxu0 0.0
    %4132 = vmatprep.mubr.f32.mxu0 0.0
    %4133 = vmatmul.mubr.f32.gmra.mxu0 %v4066
    %v4134 = vpop.f32.mrf.mxu0
    %v4135 = vadd.f32 0.0, %v4134
    %v4136 = vpop.f32.mrf.mxu0
    %4137 = vdwg.mxu0
    %v4139 = vrot.slane %v4135, 2
    %v4141 = vadd.f32 %v2170, %v4139
    %v4142 = vxor.u32 %v4141, 2147483648
    %v4143 = vmul.f32 %v4142, 1.442695
    %v4144 = vpow.pop %v4143
    %v4145 = vadd.f32 %v4144, 1.0
    %v4146 = vrcp.pop %v4145
    %v4147 = vmul.f32 1.0, %v4146
    %4148 = vmatprep.subr.mxu0 0.0
    %4149 = vmatpush1.msra.mxu0 0.0
    %4150 = vmatprep.subr.mxu0 0.0
    %4151 = vmatpush1.msra.mxu0 0.0
    %4152 = vmatprep.subr.mxu0 0.0
    %4153 = vmatpush1.msra.mxu0 0.0
    %4154 = vmatprep.subr.mxu0 0.0
    %4155 = vmatpush1.msra.mxu0 0.0
    %4156 = vmatprep.subr.mxu0 0.0
    %4157 = vmatpush1.msra.mxu0 0.0
    %4158 = vmatprep.subr.mxu0 0.0
    %4159 = vmatpush1.msra.mxu0 0.0
    %4160 = vmatprep.subr.mxu0 0.0
    %4161 = vmatpush1.msra.mxu0 0.0
    %4162 = vmatprep.subr.mxu0 0.0
    %4163 = vmatpush1.msra.mxu0 0.0
    %4164 = vmatprep.subr.mxu0 0.0
    %4165 = vmatpush1.msra.mxu0 0.0
    %4166 = vmatprep.subr.mxu0 0.0
    %4167 = vmatpush1.msra.mxu0 0.0
    %4168 = vmatprep.subr.mxu0 0.0
    %4169 = vmatpush1.msra.mxu0 0.0
    %4170 = vmatprep.subr.mxu0 0.0
    %4171 = vmatpush1.msra.mxu0 0.0
    %4172 = vmatprep.subr.mxu0 0.0
    %4173 = vmatpush1.msra.mxu0 %v2351
    %4174 = vmatprep.subr.mxu0 0.0
    %4175 = vmatpush1.msra.mxu0 %v2350
    %4176 = vmatprep.subr.mxu0 0.0
    %4177 = vmatpush1.msra.mxu0 %v2349
    %4178 = vmatprep.subr.mxu0 0.0
    %4179 = vmatpush1.msra.mxu0 %v2348
    %4180 = vmatprep.subr.mxu0 0.0
    %4181 = vmatpush2.msra.mxu0 0.0
    %4182 = vmatprep.subr.mxu0 0.0
    %4183 = vmatpush2.msra.mxu0 0.0
    %4184 = vmatprep.subr.mxu0 0.0
    %4185 = vmatpush2.msra.mxu0 0.0
    %4186 = vmatprep.subr.mxu0 0.0
    %4187 = vmatpush2.msra.mxu0 0.0
    %4188 = vmatprep.subr.mxu0 0.0
    %4189 = vmatpush2.msra.mxu0 0.0
    %4190 = vmatprep.subr.mxu0 0.0
    %4191 = vmatpush2.msra.mxu0 0.0
    %4192 = vmatprep.subr.mxu0 0.0
    %4193 = vmatpush2.msra.mxu0 0.0
    %4194 = vmatprep.subr.mxu0 0.0
    %4195 = vmatpush2.msra.mxu0 0.0
    %4196 = vmatprep.subr.mxu0 0.0
    %4197 = vmatpush2.msra.mxu0 0.0
    %4198 = vmatprep.subr.mxu0 0.0
    %4199 = vmatpush2.msra.mxu0 0.0
    %4200 = vmatprep.subr.mxu0 0.0
    %4201 = vmatpush2.msra.mxu0 0.0
    %4202 = vmatprep.subr.mxu0 0.0
    %4203 = vmatpush2.msra.mxu0 0.0
    %4204 = vmatprep.subr.mxu0 0.0
    %4205 = vmatpush2.msra.mxu0 0.0
    %4206 = vmatprep.subr.mxu0 0.0
    %4207 = vmatpush2.msra.mxu0 0.0
    %4208 = vmatprep.subr.mxu0 0.0
    %4209 = vmatpush2.msra.mxu0 0.0
    %4210 = vmatprep.subr.mxu0 0.0
    %4211 = vmatpush2.msra.mxu0 0.0
    %4212 = vmatprep.mubr.f32.mxu0 0.0
    %4213 = vmatmul.mubr.f32.gmra.mxu0 %v4066
    %v4214 = vpop.f32.mrf.mxu0
    %v4215 = vadd.f32 0.0, %v4214
    %v4216 = vpop.f32.mrf.mxu0
    %4217 = vdwg.mxu0
    %v4219 = vrot.slane %v4215, 2
    %v4221 = vadd.f32 %v2255, %v4219
    %v4222 = vxor.u32 %v4221, 2147483648
    %v4223 = vmul.f32 %v4222, 1.442695
    %v4224 = vpow.pop %v4223
    %v4225 = vadd.f32 %v4224, 1.0
    %v4226 = vrcp.pop %v4225
    %v4227 = vmul.f32 1.0, %v4226
    %4228 = vmatprep.subr.mxu0 0.0
    %4229 = vmatpush1.msra.mxu0 0.0
    %4230 = vmatprep.subr.mxu0 0.0
    %4231 = vmatpush1.msra.mxu0 0.0
    %4232 = vmatprep.subr.mxu0 0.0
    %4233 = vmatpush1.msra.mxu0 0.0
    %4234 = vmatprep.subr.mxu0 0.0
    %4235 = vmatpush1.msra.mxu0 0.0
    %4236 = vmatprep.subr.mxu0 0.0
    %4237 = vmatpush1.msra.mxu0 0.0
    %4238 = vmatprep.subr.mxu0 0.0
    %4239 = vmatpush1.msra.mxu0 0.0
    %4240 = vmatprep.subr.mxu0 0.0
    %4241 = vmatpush1.msra.mxu0 0.0
    %4242 = vmatprep.subr.mxu0 0.0
    %4243 = vmatpush1.msra.mxu0 0.0
    %4244 = vmatprep.subr.mxu0 0.0
    %4245 = vmatpush1.msra.mxu0 0.0
    %4246 = vmatprep.subr.mxu0 0.0
    %4247 = vmatpush1.msra.mxu0 0.0
    %4248 = vmatprep.subr.mxu0 0.0
    %4249 = vmatpush1.msra.mxu0 0.0
    %4250 = vmatprep.subr.mxu0 0.0
    %4251 = vmatpush1.msra.mxu0 0.0
    %4252 = vmatprep.subr.mxu0 0.0
    %4253 = vmatpush1.msra.mxu0 %v2356
    %4254 = vmatprep.subr.mxu0 0.0
    %4255 = vmatpush1.msra.mxu0 %v2355
    %4256 = vmatprep.subr.mxu0 0.0
    %4257 = vmatpush1.msra.mxu0 %v2354
    %4258 = vmatprep.subr.mxu0 0.0
    %4259 = vmatpush1.msra.mxu0 %v2353
    %4260 = vmatprep.subr.mxu0 0.0
    %4261 = vmatpush2.msra.mxu0 0.0
    %4262 = vmatprep.subr.mxu0 0.0
    %4263 = vmatpush2.msra.mxu0 0.0
    %4264 = vmatprep.subr.mxu0 0.0
    %4265 = vmatpush2.msra.mxu0 0.0
    %4266 = vmatprep.subr.mxu0 0.0
    %4267 = vmatpush2.msra.mxu0 0.0
    %4268 = vmatprep.subr.mxu0 0.0
    %4269 = vmatpush2.msra.mxu0 0.0
    %4270 = vmatprep.subr.mxu0 0.0
    %4271 = vmatpush2.msra.mxu0 0.0
    %4272 = vmatprep.subr.mxu0 0.0
    %4273 = vmatpush2.msra.mxu0 0.0
    %4274 = vmatprep.subr.mxu0 0.0
    %4275 = vmatpush2.msra.mxu0 0.0
    %4276 = vmatprep.subr.mxu0 0.0
    %4277 = vmatpush2.msra.mxu0 0.0
    %4278 = vmatprep.subr.mxu0 0.0
    %4279 = vmatpush2.msra.mxu0 0.0
    %4280 = vmatprep.subr.mxu0 0.0
    %4281 = vmatpush2.msra.mxu0 0.0
    %4282 = vmatprep.subr.mxu0 0.0
    %4283 = vmatpush2.msra.mxu0 0.0
    %4284 = vmatprep.subr.mxu0 0.0
    %4285 = vmatpush2.msra.mxu0 0.0
    %4286 = vmatprep.subr.mxu0 0.0
    %4287 = vmatpush2.msra.mxu0 0.0
    %4288 = vmatprep.subr.mxu0 0.0
    %4289 = vmatpush2.msra.mxu0 0.0
    %4290 = vmatprep.subr.mxu0 0.0
    %4291 = vmatpush2.msra.mxu0 0.0
    %4292 = vmatprep.mubr.f32.mxu0 0.0
    %4293 = vmatmul.mubr.f32.gmra.mxu0 %v4066
    %v4294 = vpop.f32.mrf.mxu0
    %v4295 = vadd.f32 %v2362, %v4294
    %v4296 = vpop.f32.mrf.mxu0
    %4297 = vdwg.mxu0
    %v4299 = vrot.slane %v4295, 2
    %v4301 = vmul.f32 %v4147, %v4299
    %v4302 = vadd.f32 %v2340, %v4301
    %v4303 = vtanh.pop %v4302
    %v4304 = vsub.f32 1.0, %v4227
    %v4305 = vmul.f32 %v4304, %v4303
    %v4306 = vrot.slane %v4063, 6
    %v4308 = vmul.f32 %v4227, %v4306
    %v4309 = vadd.f32 %v4305, %v4308
    %v4310 = vsel %vm197, %v2599, %v2844
    %vm4311 = vcmask 1043456
    %v4312 = vsel %vm4311, %v4310, %v3090
    %vm4313 = vcmask 1045504
    %v4314 = vsel %vm4313, %v4312, %v3336
    %v4315 = vsel %vm197, %v3572, %v3817
    %v4316 = vsel %vm4311, %v4315, %v4063
    %v4317 = vsel %vm4313, %v4316, %v4309
    %v4318 = vld [vmem:[%s10] sm:$0xff]
    %v4319 = vld [vmem:[%s10 + $0x8] sm:$0xff]
    %v4320 = vld [vmem:[%s10 + $0x10] sm:$0xff]
    %v4321 = vld [vmem:[%s10 + $0x18] sm:$0xff]
    %v4322 = vld [vmem:[%s11] sm:$0x1]
    %v4324 = vlaneseq
    %v4325 = vshrl.u32 %v4324, 7
    %v4326 = vsub.s32 0, %v4325
    %v4327 = vrot.slane %v4322, %v4326
    %v4330 = vsel %vm446, %v4314, 0
    %v4333 = vsel %vm446, %v4317, 0
    %4335 = vmatprep.subr.mxu0 0.0
    %4336 = vmatpush1.msra.mxu0 0.0
    %4337 = vmatprep.subr.mxu0 0.0
    %4338 = vmatpush1.msra.mxu0 0.0
    %4339 = vmatprep.subr.mxu0 0.0
    %4340 = vmatpush1.msra.mxu0 0.0
    %4341 = vmatprep.subr.mxu0 0.0
    %4342 = vmatpush1.msra.mxu0 0.0
    %4343 = vmatprep.subr.mxu0 0.0
    %4344 = vmatpush1.msra.mxu0 0.0
    %4345 = vmatprep.subr.mxu0 0.0
    %4346 = vmatpush1.msra.mxu0 0.0
    %4347 = vmatprep.subr.mxu0 0.0
    %4348 = vmatpush1.msra.mxu0 0.0
    %4349 = vmatprep.subr.mxu0 0.0
    %4350 = vmatpush1.msra.mxu0 0.0
    %4351 = vmatprep.subr.mxu0 0.0
    %4352 = vmatpush1.msra.mxu0 0.0
    %4353 = vmatprep.subr.mxu0 0.0
    %4354 = vmatpush1.msra.mxu0 0.0
    %4355 = vmatprep.subr.mxu0 0.0
    %4356 = vmatpush1.msra.mxu0 0.0
    %4357 = vmatprep.subr.mxu0 0.0
    %4358 = vmatpush1.msra.mxu0 0.0
    %4359 = vmatprep.subr.mxu0 0.0
    %4360 = vmatpush1.msra.mxu0 %v4321
    %4361 = vmatprep.subr.mxu0 0.0
    %4362 = vmatpush1.msra.mxu0 %v4320
    %4363 = vmatprep.subr.mxu0 0.0
    %4364 = vmatpush1.msra.mxu0 %v4319
    %4365 = vmatprep.subr.mxu0 0.0
    %4366 = vmatpush1.msra.mxu0 %v4318
    %4367 = vmatprep.subr.mxu0 0.0
    %4368 = vmatpush2.msra.mxu0 0.0
    %4369 = vmatprep.subr.mxu0 0.0
    %4370 = vmatpush2.msra.mxu0 0.0
    %4371 = vmatprep.subr.mxu0 0.0
    %4372 = vmatpush2.msra.mxu0 0.0
    %4373 = vmatprep.subr.mxu0 0.0
    %4374 = vmatpush2.msra.mxu0 0.0
    %4375 = vmatprep.subr.mxu0 0.0
    %4376 = vmatpush2.msra.mxu0 0.0
    %4377 = vmatprep.subr.mxu0 0.0
    %4378 = vmatpush2.msra.mxu0 0.0
    %4379 = vmatprep.subr.mxu0 0.0
    %4380 = vmatpush2.msra.mxu0 0.0
    %4381 = vmatprep.subr.mxu0 0.0
    %4382 = vmatpush2.msra.mxu0 0.0
    %4383 = vmatprep.subr.mxu0 0.0
    %4384 = vmatpush2.msra.mxu0 0.0
    %4385 = vmatprep.subr.mxu0 0.0
    %4386 = vmatpush2.msra.mxu0 0.0
    %4387 = vmatprep.subr.mxu0 0.0
    %4388 = vmatpush2.msra.mxu0 0.0
    %4389 = vmatprep.subr.mxu0 0.0
    %4390 = vmatpush2.msra.mxu0 0.0
    %4391 = vmatprep.subr.mxu0 0.0
    %4392 = vmatpush2.msra.mxu0 0.0
    %4393 = vmatprep.subr.mxu0 0.0
    %4394 = vmatpush2.msra.mxu0 0.0
    %4395 = vmatprep.subr.mxu0 0.0
    %4396 = vmatpush2.msra.mxu0 0.0
    %4397 = vmatprep.subr.mxu0 0.0
    %4398 = vmatpush2.msra.mxu0 0.0
    %4399 = vmatprep.mubr.f32.mxu0 0.0
    %4400 = vmatmul.mubr.f32.gmra.mxu0 %v4330
    %v4401 = vpop.f32.mrf.mxu0
    %v4402 = vadd.f32 %v4327, %v4401
    %v4403 = vpop.f32.mrf.mxu0
    %4404 = vmatprep.mubr.f32.mxu0 0.0
    %4405 = vmatmul.mubr.f32.gmra.mxu0 %v4333
    %v4406 = vpop.f32.mrf.mxu0
    %v4407 = vadd.f32 %v4327, %v4406
    %v4408 = vpop.f32.mrf.mxu0
    %4409 = vdwg.mxu0
    %4410 = vst.msk [vmem:[%s12] sm:$0xff] %vm2091, %v4402
    %4411 = vst.msk [vmem:[%s12 + $0x8] sm:$0xff] %vm2091, %v4407
    // Predicated region
    $region57: #{cnnseq2seq_forward.5} parent=1 // pred_check
      _
    $region58: #{cnnseq2seq_forward.5} parent=1 // pred_check_branch
      %4413 = sbr.rel (0) target = $region60
    $region59: #{cnnseq2seq_forward.5} parent=1 // pred_region
      _
    $region60: #{cnnseq2seq_forward.5} parent=1 // pred_fallthru
      _
    // Predicated region
    $region61: #{cnnseq2seq_forward.5} parent=1 // pred_check
      _
    $region62: #{cnnseq2seq_forward.5} parent=1 // pred_check_branch
      %4415 = sbr.rel (0) target = $region64
    $region63: #{cnnseq2seq_forward.5} parent=1 // pred_region
      %s4417 = ssub.s32 32, 32
      %4418 = vsyncadd [#allocation6], %s4417
      %s4420 = sshll.u32 [#allocation5], 4
      %s4421 = int_to_ptr.vmem [resolvable:$true] %s4420
      %4423 = dma.vmem_to_hbm [thread:$0]  %s4421, 32, %s13, [#allocation6]
    $region64: #{cnnseq2seq_forward.5} parent=1 // pred_fallthru
      _
    // Predicated region
    $region65: #{cnnseq2seq_forward.5} parent=1 // pred_check
      _
    $region66: #{cnnseq2seq_forward.5} parent=1 // pred_check_branch
      %4425 = sbr.rel (0) target = $region68
    $region67: #{cnnseq2seq_forward.5} parent=1 // pred_region
      _
    $region68: #{cnnseq2seq_forward.5} parent=1 // pred_fallthru
      _
    // Predicated region
    $region69: #{cnnseq2seq_forward.5} parent=1 // pred_check
      _
    $region70: #{cnnseq2seq_forward.5} parent=1 // pred_check_branch
      %4427 = sbr.rel (0) target = $region72
    $region71: #{cnnseq2seq_forward.5} parent=1 // pred_region
      %4428 = dma.done [#allocation6], 32
    $region72: #{cnnseq2seq_forward.5} parent=1 // pred_fallthru
      _
    %4429 = vsyncpa [#allocation6], 1

</llo_original>
